<compile_context>
chip_gen: v7x
topology: tpu7x:2x2x1
jax: 0.10.0
libtpu: 0.0.40
codegen_flags: <defaults>
</compile_context>

<pallas_src>
import jax
import jax.numpy as jnp
from jax import lax
from jax.experimental import pallas as pl
from jax.experimental.pallas import tpu as pltpu


def _make_kernel(B, H, W, C_IN, C_MID, C_OUT):
    HW = H * W
    M = B * HW
    K1 = 9 * C_IN           # conv1 im2col contraction depth
    K2 = 3 * C_MID          # conv2 fused (dx, cin) contraction depth per dy

    def kernel(p_ref, w1_ref, b1_ref, w2_ref, b2_ref, w3t_ref, b3_ref,
               o_ref, pad_ref):
        # ---- conv1: single im2col matmul (M, 27) @ (27, C_MID) ----
        patches = p_ref[...].reshape(M, K1)
        acc1 = jnp.dot(patches, w1_ref[...],
                       preferred_element_type=jnp.float32)
        h1 = jnp.maximum(acc1 + b1_ref[...], 0.0)            # (M, C_MID)

        # ---- spatially pad h1 and write the whole padded block with one
        #      dense, aligned store into the VMEM scratch ----
        h1_r = h1.reshape(B, H, W, C_MID)
        zc = jnp.zeros((B, H, 1, C_MID), jnp.float32)
        zr = jnp.zeros((B, 1, W + 2, C_MID), jnp.float32)
        h1_wp = jnp.concatenate([zc, h1_r, zc], axis=2)       # (B, H, W+2, C)
        pad_ref[...] = jnp.concatenate([zr, h1_wp, zr], axis=1)

        # ---- conv2: 3 fused matmuls, K = 3*C_MID (one per dy tap row) ----
        acc2 = jnp.zeros((M, C_MID), jnp.float32)
        for dy in range(3):
            taps = [pad_ref[:, dy:dy + H, dx:dx + W, :] for dx in range(3)]
            patch = jnp.concatenate(taps, axis=-1).reshape(M, K2)
            acc2 = acc2 + jnp.dot(patch, w2_ref[dy],
                                  preferred_element_type=jnp.float32)
        h2 = jnp.maximum(acc2 + b2_ref[...], 0.0)             # (M, C_MID)

        # ---- conv3 (1x1), computed transposed so output is lane-dense ----
        # y_t[c, m] = sum_k w3t[c, k] * h2[m, k]
        y_t = lax.dot_general(w3t_ref[...], h2,
                              dimension_numbers=(((1,), (1,)), ((), ())),
                              preferred_element_type=jnp.float32)
        y_t = jnp.clip(y_t + b3_ref[...], 0.0, 1.0)           # (C_OUT, M)

        # Lane-dense stores: one (C_OUT, H*W) slab per image (aligned slices).
        for b in range(B):
            o_ref[b] = y_t[:, b * HW:(b + 1) * HW].astype(o_ref.dtype)

    return kernel


def _pick_batch_tile(n):
    for b in (8, 4, 2, 1):
        if n % b == 0:
            return b
    return 1


@jax.jit
def super_resnet_forward(x_nchw, w1, b1, w2, b2, w3, b3):
    """x_nchw: (N, 3, H, W) float32. Returns (N, 3, H, W) float32."""
    N, C_IN, H, W = x_nchw.shape
    C_MID = w1.shape[-1]
    C_OUT = w3.shape[-1]
    HW = H * W
    B = _pick_batch_tile(N)

    # conv1 im2col done by XLA in the wrapper: (N, H*W, 9*C_IN) patches.
    x_nhwc = jnp.transpose(x_nchw, (0, 2, 3, 1))
    x_pad = jnp.pad(x_nhwc, ((0, 0), (1, 1), (1, 1), (0, 0)))
    patches = jnp.concatenate(
        [x_pad[:, dy:dy + H, dx:dx + W, :]
         for dy in range(3) for dx in range(3)],
        axis=-1).reshape(N, HW, 9 * C_IN)

    # Weight / bias layouts expected by the kernel.
    w1_m = w1.reshape(9 * C_IN, C_MID)           # (27, C_MID)
    w2_m = w2.reshape(3, 3 * C_MID, C_MID)       # per-dy (3*C_MID, C_MID) slab
    w3_t = jnp.transpose(w3)                     # (C_OUT, C_MID)
    b1_2d = b1.reshape(1, C_MID)
    b2_2d = b2.reshape(1, C_MID)
    b3_2d = b3.reshape(C_OUT, 1)

    kernel = _make_kernel(B, H, W, C_IN, C_MID, C_OUT)

    flops = 2 * N * HW * (9 * C_IN * C_MID + 9 * C_MID * C_MID + C_MID * C_OUT)
    bytes_accessed = 4 * (patches.size + w1_m.size + w2_m.size + w3_t.size
                          + b1.size + b2.size + b3.size + N * C_OUT * HW)

    out_flat = pl.pallas_call(
        kernel,
        out_shape=jax.ShapeDtypeStruct((N, C_OUT, HW), jnp.float32),
        grid_spec=pltpu.PrefetchScalarGridSpec(
            num_scalar_prefetch=0,
            grid=(N // B,),
            in_specs=[
                pl.BlockSpec((B, HW, 9 * C_IN), lambda n: (n, 0, 0)),
                pl.BlockSpec((9 * C_IN, C_MID), lambda n: (0, 0)),
                pl.BlockSpec((1, C_MID), lambda n: (0, 0)),
                pl.BlockSpec((3, 3 * C_MID, C_MID), lambda n: (0, 0, 0)),
                pl.BlockSpec((1, C_MID), lambda n: (0, 0)),
                pl.BlockSpec((C_OUT, C_MID), lambda n: (0, 0)),
                pl.BlockSpec((C_OUT, 1), lambda n: (0, 0)),
            ],
            out_specs=pl.BlockSpec((B, C_OUT, HW), lambda n: (n, 0, 0)),
            scratch_shapes=[
                pltpu.VMEM((B, H + 2, W + 2, C_MID), jnp.float32),
            ],
        ),
        compiler_params=pltpu.CompilerParams(
            dimension_semantics=("parallel",),
            vmem_limit_bytes=64 * 1024 * 1024),
        cost_estimate=pl.CostEstimate(flops=flops, transcendentals=0,
                                      bytes_accessed=bytes_accessed),
    )(patches, w1_m, b1_2d, w2_m, b2_2d, w3_t, b3_2d)

    # Output is already NCHW-flat (lane-dense store); just fold H*W back.
    return out_flat.reshape(N, C_OUT, H, W)


def _reference_forward(x_nchw, w1, b1, w2, b2, w3, b3):
    """Pure-JAX reference (NHWC convs) for validation."""
    x = jnp.transpose(x_nchw, (0, 2, 3, 1))
    dn = lax.conv_dimension_numbers(x.shape, w1.shape, ("NHWC", "HWIO", "NHWC"))
    h = lax.conv_general_dilated(x, w1, (1, 1), "SAME", dimension_numbers=dn)
    h = jnp.maximum(h + b1, 0.0)
    dn2 = lax.conv_dimension_numbers(h.shape, w2.shape, ("NHWC", "HWIO", "NHWC"))
    h = lax.conv_general_dilated(h, w2, (1, 1), "SAME", dimension_numbers=dn2)
    h = jnp.maximum(h + b2, 0.0)
    y = jnp.einsum("nhwc,cd->nhwd", h, w3) + b3
    y = jnp.clip(y, 0.0, 1.0)
    return jnp.transpose(y, (0, 3, 1, 2))


if __name__ == "__main__":
    # Small shapes consistent with the module: RGB input, 16x16 spatial.
    N, C_IN, H, W = 2, 3, 16, 16
    C_MID, C_OUT = 64, 3

    key = jax.random.PRNGKey(0)
    kx, k1, k2, k3, kb1, kb2, kb3 = jax.random.split(key, 7)

    x = jax.random.uniform(kx, (N, C_IN, H, W), dtype=jnp.float32)

    # Deterministic synthetic parameters (HWIO layout for 3x3 convs).
    w1 = 0.1 * jax.random.normal(k1, (3, 3, C_IN, C_MID), dtype=jnp.float32)
    b1 = 0.05 * jax.random.normal(kb1, (C_MID,), dtype=jnp.float32)
    w2 = 0.05 * jax.random.normal(k2, (3, 3, C_MID, C_MID), dtype=jnp.float32)
    b2 = 0.05 * jax.random.normal(kb2, (C_MID,), dtype=jnp.float32)
    w3 = 0.1 * jax.random.normal(k3, (C_MID, C_OUT), dtype=jnp.float32)
    b3 = 0.05 * jax.random.normal(kb3, (C_OUT,), dtype=jnp.float32)

    out = super_resnet_forward(x, w1, b1, w2, b2, w3, b3)
    out = jax.block_until_ready(out)

    ref = _reference_forward(x, w1, b1, w2, b2, w3, b3)
    assert out.shape == (N, C_OUT, H, W)
    assert jnp.allclose(out, ref, atol=1e-4, rtol=1e-4), "mismatch vs reference"

    print("KERNEL_OK")
</pallas_src>

<mosaic_0001>
module attributes {stable_mosaic.version = 11 : i64} {
  func.func @kernel(%arg0: i32, %arg1: memref<2x256x27xf32, #tpu.memory_space<vmem>>, %arg2: memref<27x64xf32, #tpu.memory_space<vmem>>, %arg3: memref<1x64xf32, #tpu.memory_space<vmem>>, %arg4: memref<3x192x64xf32, #tpu.memory_space<vmem>>, %arg5: memref<1x64xf32, #tpu.memory_space<vmem>>, %arg6: memref<3x64xf32, #tpu.memory_space<vmem>>, %arg7: memref<3x1xf32, #tpu.memory_space<vmem>>, %arg8: memref<2x3x256xf32, #tpu.memory_space<vmem>>, %arg9: memref<2x18x18x64xf32, #tpu.memory_space<vmem>>) attributes {dimension_semantics = [#tpu.dimension_semantics<parallel>], iteration_bounds = array<i64: 1>, scalar_prefetch = 0 : i64, scratch_operands = 1 : i64, tpu.core_type = #tpu.core_type<tc>, window_params = [{transform_indices = @transform_0, window_bounds = array<i64: 2, 256, 27>}, {pipeline_mode = #tpu.pipeline_mode<synchronous>, transform_indices = @transform_1, window_bounds = array<i64: 27, 64>}, {pipeline_mode = #tpu.pipeline_mode<synchronous>, transform_indices = @transform_2, window_bounds = array<i64: 1, 64>}, {pipeline_mode = #tpu.pipeline_mode<synchronous>, transform_indices = @transform_3, window_bounds = array<i64: 3, 192, 64>}, {pipeline_mode = #tpu.pipeline_mode<synchronous>, transform_indices = @transform_4, window_bounds = array<i64: 1, 64>}, {pipeline_mode = #tpu.pipeline_mode<synchronous>, transform_indices = @transform_5, window_bounds = array<i64: 3, 64>}, {pipeline_mode = #tpu.pipeline_mode<synchronous>, transform_indices = @transform_6, window_bounds = array<i64: 3, 1>}, {transform_indices = @transform_7, window_bounds = array<i64: 2, 3, 256>}]} {
    %c0 = arith.constant 0 : index
    %c0_0 = arith.constant 0 : index
    %c0_1 = arith.constant 0 : index
    %0 = vector.load %arg1[%c0, %c0_0, %c0_1] : memref<2x256x27xf32, #tpu.memory_space<vmem>>, vector<2x256x27xf32>
    %1 = vector.shape_cast %0 : vector<2x256x27xf32> to vector<512x27xf32>
    %c0_2 = arith.constant 0 : index
    %c0_3 = arith.constant 0 : index
    %2 = vector.load %arg2[%c0_2, %c0_3] : memref<27x64xf32, #tpu.memory_space<vmem>>, vector<27x64xf32>
    %cst = arith.constant dense<0.000000e+00> : vector<512x64xf32>
    %3 = tpu.matmul %1, %2, %cst {dimension_numbers = #tpu.dot_dimension_numbers<[1], [0], [0], [1], [0, 0, 1, 1], [], []>} : vector<512x27xf32>, vector<27x64xf32>, vector<512x64xf32> -> vector<512x64xf32>
    %c0_4 = arith.constant 0 : index
    %c0_5 = arith.constant 0 : index
    %4 = vector.load %arg3[%c0_4, %c0_5] : memref<1x64xf32, #tpu.memory_space<vmem>>, vector<1x64xf32>
    %5 = vector.broadcast %4 : vector<1x64xf32> to vector<512x64xf32>
    %6 = arith.addf %3, %5 : vector<512x64xf32>
    %cst_6 = arith.constant 0.000000e+00 : f32
    %7 = vector.broadcast %cst_6 : f32 to vector<512x64xf32>
    %8 = arith.maximumf %6, %7 : vector<512x64xf32>
    %9 = vector.shape_cast %8 : vector<512x64xf32> to vector<2x16x16x64xf32>
    %cst_7 = arith.constant 0.000000e+00 : f32
    %10 = vector.broadcast %cst_7 : f32 to vector<2x16x1x64xf32>
    %cst_8 = arith.constant 0.000000e+00 : f32
    %11 = vector.broadcast %cst_8 : f32 to vector<2x1x18x64xf32>
    %12 = tpu.concatenate %10, %9, %10 in 2 : vector<2x16x1x64xf32>, vector<2x16x16x64xf32>, vector<2x16x1x64xf32> -> vector<2x16x18x64xf32>
    %13 = tpu.concatenate %11, %12, %11 in 1 : vector<2x1x18x64xf32>, vector<2x16x18x64xf32>, vector<2x1x18x64xf32> -> vector<2x18x18x64xf32>
    %c0_9 = arith.constant 0 : index
    %c0_10 = arith.constant 0 : index
    %c0_11 = arith.constant 0 : index
    %c0_12 = arith.constant 0 : index
    %14 = vector.load %arg9[%c0_9, %c0_10, %c0_11, %c0_12] : memref<2x18x18x64xf32, #tpu.memory_space<vmem>>, vector<2x18x18x64xf32>
    tpu.vector_store %arg9[%c0_9, %c0_10, %c0_11, %c0_12], %13 {strides = array<i32>} : memref<2x18x18x64xf32, #tpu.memory_space<vmem>>, vector<2x18x18x64xf32>,
    %cst_13 = arith.constant 0.000000e+00 : f32
    %15 = vector.broadcast %cst_13 : f32 to vector<512x64xf32>
    %c0_14 = arith.constant 0 : index
    %c0_15 = arith.constant 0 : index
    %c0_16 = arith.constant 0 : index
    %c0_17 = arith.constant 0 : index
    %16 = vector.load %arg9[%c0_14, %c0_15, %c0_16, %c0_17] : memref<2x18x18x64xf32, #tpu.memory_space<vmem>>, vector<2x16x16x64xf32>
    %c0_18 = arith.constant 0 : index
    %c0_19 = arith.constant 0 : index
    %c1 = arith.constant 1 : index
    %c0_20 = arith.constant 0 : index
    %17 = vector.load %arg9[%c0_18, %c0_19, %c1, %c0_20] : memref<2x18x18x64xf32, #tpu.memory_space<vmem>>, vector<2x16x16x64xf32>
    %c0_21 = arith.constant 0 : index
    %c0_22 = arith.constant 0 : index
    %c2 = arith.constant 2 : index
    %c0_23 = arith.constant 0 : index
    %18 = vector.load %arg9[%c0_21, %c0_22, %c2, %c0_23] : memref<2x18x18x64xf32, #tpu.memory_space<vmem>>, vector<2x16x16x64xf32>
    %19 = tpu.concatenate %16, %17, %18 in 3 : vector<2x16x16x64xf32>, vector<2x16x16x64xf32>, vector<2x16x16x64xf32> -> vector<2x16x16x192xf32>
    %20 = vector.shape_cast %19 : vector<2x16x16x192xf32> to vector<512x192xf32>
    %c0_24 = arith.constant 0 : index
    %c0_25 = arith.constant 0 : index
    %c0_26 = arith.constant 0 : index
    %21 = vector.load %arg4[%c0_24, %c0_25, %c0_26] : memref<3x192x64xf32, #tpu.memory_space<vmem>>, vector<1x192x64xf32>
    %22 = vector.shape_cast %21 : vector<1x192x64xf32> to vector<192x64xf32>
    %cst_27 = arith.constant dense<0.000000e+00> : vector<512x64xf32>
    %23 = tpu.matmul %20, %22, %cst_27 {dimension_numbers = #tpu.dot_dimension_numbers<[1], [0], [0], [1], [0, 0, 1, 1], [], []>} : vector<512x192xf32>, vector<192x64xf32>, vector<512x64xf32> -> vector<512x64xf32>
    %24 = arith.addf %15, %23 : vector<512x64xf32>
    %c0_28 = arith.constant 0 : index
    %c1_29 = arith.constant 1 : index
    %c0_30 = arith.constant 0 : index
    %c0_31 = arith.constant 0 : index
    %25 = vector.load %arg9[%c0_28, %c1_29, %c0_30, %c0_31] : memref<2x18x18x64xf32, #tpu.memory_space<vmem>>, vector<2x16x16x64xf32>
    %c0_32 = arith.constant 0 : index
    %c1_33 = arith.constant 1 : index
    %c1_34 = arith.constant 1 : index
    %c0_35 = arith.constant 0 : index
    %26 = vector.load %arg9[%c0_32, %c1_33, %c1_34, %c0_35] : memref<2x18x18x64xf32, #tpu.memory_space<vmem>>, vector<2x16x16x64xf32>
    %c0_36 = arith.constant 0 : index
    %c1_37 = arith.constant 1 : index
    %c2_38 = arith.constant 2 : index
    %c0_39 = arith.constant 0 : index
    %27 = vector.load %arg9[%c0_36, %c1_37, %c2_38, %c0_39] : memref<2x18x18x64xf32, #tpu.memory_space<vmem>>, vector<2x16x16x64xf32>
    %28 = tpu.concatenate %25, %26, %27 in 3 : vector<2x16x16x64xf32>, vector<2x16x16x64xf32>, vector<2x16x16x64xf32> -> vector<2x16x16x192xf32>
    %29 = vector.shape_cast %28 : vector<2x16x16x192xf32> to vector<512x192xf32>
    %c1_40 = arith.constant 1 : index
    %c0_41 = arith.constant 0 : index
    %c0_42 = arith.constant 0 : index
    %30 = vector.load %arg4[%c1_40, %c0_41, %c0_42] : memref<3x192x64xf32, #tpu.memory_space<vmem>>, vector<1x192x64xf32>
    %31 = vector.shape_cast %30 : vector<1x192x64xf32> to vector<192x64xf32>
    %cst_43 = arith.constant dense<0.000000e+00> : vector<512x64xf32>
    %32 = tpu.matmul %29, %31, %cst_43 {dimension_numbers = #tpu.dot_dimension_numbers<[1], [0], [0], [1], [0, 0, 1, 1], [], []>} : vector<512x192xf32>, vector<192x64xf32>, vector<512x64xf32> -> vector<512x64xf32>
    %33 = arith.addf %24, %32 : vector<512x64xf32>
    %c0_44 = arith.constant 0 : index
    %c2_45 = arith.constant 2 : index
    %c0_46 = arith.constant 0 : index
    %c0_47 = arith.constant 0 : index
    %34 = vector.load %arg9[%c0_44, %c2_45, %c0_46, %c0_47] : memref<2x18x18x64xf32, #tpu.memory_space<vmem>>, vector<2x16x16x64xf32>
    %c0_48 = arith.constant 0 : index
    %c2_49 = arith.constant 2 : index
    %c1_50 = arith.constant 1 : index
    %c0_51 = arith.constant 0 : index
    %35 = vector.load %arg9[%c0_48, %c2_49, %c1_50, %c0_51] : memref<2x18x18x64xf32, #tpu.memory_space<vmem>>, vector<2x16x16x64xf32>
    %c0_52 = arith.constant 0 : index
    %c2_53 = arith.constant 2 : index
    %c2_54 = arith.constant 2 : index
    %c0_55 = arith.constant 0 : index
    %36 = vector.load %arg9[%c0_52, %c2_53, %c2_54, %c0_55] : memref<2x18x18x64xf32, #tpu.memory_space<vmem>>, vector<2x16x16x64xf32>
    %37 = tpu.concatenate %34, %35, %36 in 3 : vector<2x16x16x64xf32>, vector<2x16x16x64xf32>, vector<2x16x16x64xf32> -> vector<2x16x16x192xf32>
    %38 = vector.shape_cast %37 : vector<2x16x16x192xf32> to vector<512x192xf32>
    %c2_56 = arith.constant 2 : index
    %c0_57 = arith.constant 0 : index
    %c0_58 = arith.constant 0 : index
    %39 = vector.load %arg4[%c2_56, %c0_57, %c0_58] : memref<3x192x64xf32, #tpu.memory_space<vmem>>, vector<1x192x64xf32>
    %40 = vector.shape_cast %39 : vector<1x192x64xf32> to vector<192x64xf32>
    %cst_59 = arith.constant dense<0.000000e+00> : vector<512x64xf32>
    %41 = tpu.matmul %38, %40, %cst_59 {dimension_numbers = #tpu.dot_dimension_numbers<[1], [0], [0], [1], [0, 0, 1, 1], [], []>} : vector<512x192xf32>, vector<192x64xf32>, vector<512x64xf32> -> vector<512x64xf32>
    %42 = arith.addf %33, %41 : vector<512x64xf32>
    %c0_60 = arith.constant 0 : index
    %c0_61 = arith.constant 0 : index
    %43 = vector.load %arg5[%c0_60, %c0_61] : memref<1x64xf32, #tpu.memory_space<vmem>>, vector<1x64xf32>
    %44 = vector.broadcast %43 : vector<1x64xf32> to vector<512x64xf32>
    %45 = arith.addf %42, %44 : vector<512x64xf32>
    %cst_62 = arith.constant 0.000000e+00 : f32
    %46 = vector.broadcast %cst_62 : f32 to vector<512x64xf32>
    %47 = arith.maximumf %45, %46 : vector<512x64xf32>
    %c0_63 = arith.constant 0 : index
    %c0_64 = arith.constant 0 : index
    %48 = vector.load %arg6[%c0_63, %c0_64] : memref<3x64xf32, #tpu.memory_space<vmem>>, vector<3x64xf32>
    %cst_65 = arith.constant dense<0.000000e+00> : vector<3x512xf32>
    %49 = tpu.matmul %48, %47, %cst_65 {dimension_numbers = #tpu.dot_dimension_numbers<[1], [1], [0], [0], [0, 0, 1, 0], [], []>} : vector<3x64xf32>, vector<512x64xf32>, vector<3x512xf32> -> vector<3x512xf32>
    %c0_66 = arith.constant 0 : index
    %c0_67 = arith.constant 0 : index
    %50 = vector.load %arg7[%c0_66, %c0_67] : memref<3x1xf32, #tpu.memory_space<vmem>>, vector<3x1xf32>
    %51 = vector.broadcast %50 : vector<3x1xf32> to vector<3x512xf32>
    %52 = arith.addf %49, %51 : vector<3x512xf32>
    %cst_68 = arith.constant 0.000000e+00 : f32
    %cst_69 = arith.constant 1.000000e+00 : f32
    %53 = vector.broadcast %cst_68 : f32 to vector<3x512xf32>
    %54 = arith.maximumf %53, %52 : vector<3x512xf32>
    %55 = vector.broadcast %cst_69 : f32 to vector<3x512xf32>
    %56 = arith.minimumf %55, %54 : vector<3x512xf32>
    %57 = vector.extract_strided_slice %56 {offsets = [0, 0], sizes = [3, 256], strides = [1, 1]} : vector<3x512xf32> to vector<3x256xf32>
    %c0_70 = arith.constant 0 : index
    %c0_71 = arith.constant 0 : index
    %c0_72 = arith.constant 0 : index
    %58 = vector.load %arg8[%c0_70, %c0_71, %c0_72] : memref<2x3x256xf32, #tpu.memory_space<vmem>>, vector<1x3x256xf32>
    %59 = vector.shape_cast %58 : vector<1x3x256xf32> to vector<3x256xf32>
    %60 = vector.shape_cast %57 : vector<3x256xf32> to vector<1x3x256xf32>
    tpu.vector_store %arg8[%c0_70, %c0_71, %c0_72], %60 {strides = array<i32>} : memref<2x3x256xf32, #tpu.memory_space<vmem>>, vector<1x3x256xf32>,
    %61 = vector.extract_strided_slice %56 {offsets = [0, 256], sizes = [3, 256], strides = [1, 1]} : vector<3x512xf32> to vector<3x256xf32>
    %c1_73 = arith.constant 1 : index
    %c0_74 = arith.constant 0 : index
    %c0_75 = arith.constant 0 : index
    %62 = vector.load %arg8[%c1_73, %c0_74, %c0_75] : memref<2x3x256xf32, #tpu.memory_space<vmem>>, vector<1x3x256xf32>
    %63 = vector.shape_cast %62 : vector<1x3x256xf32> to vector<3x256xf32>
    %64 = vector.shape_cast %61 : vector<3x256xf32> to vector<1x3x256xf32>
    tpu.vector_store %arg8[%c1_73, %c0_74, %c0_75], %64 {strides = array<i32>} : memref<2x3x256xf32, #tpu.memory_space<vmem>>, vector<1x3x256xf32>,
    return
  }
  func.func @transform_0(%arg0: i32) -> (i32, i32, i32) {
    %c0_i32 = arith.constant 0 : i32
    %c0_i32_0 = arith.constant 0 : i32
    %c0_i32_1 = arith.constant 0 : i32
    return %arg0, %c0_i32, %c0_i32_0 : i32, i32, i32
  }
  func.func @transform_1(%arg0: i32) -> (i32, i32) {
    %c0_i32 = arith.constant 0 : i32
    %c0_i32_0 = arith.constant 0 : i32
    %c0_i32_1 = arith.constant 0 : i32
    return %c0_i32, %c0_i32_0 : i32, i32
  }
  func.func @transform_2(%arg0: i32) -> (i32, i32) {
    %c0_i32 = arith.constant 0 : i32
    %c0_i32_0 = arith.constant 0 : i32
    %c0_i32_1 = arith.constant 0 : i32
    return %c0_i32, %c0_i32_0 : i32, i32
  }
  func.func @transform_3(%arg0: i32) -> (i32, i32, i32) {
    %c0_i32 = arith.constant 0 : i32
    %c0_i32_0 = arith.constant 0 : i32
    %c0_i32_1 = arith.constant 0 : i32
    %c0_i32_2 = arith.constant 0 : i32
    return %c0_i32, %c0_i32_0, %c0_i32_1 : i32, i32, i32
  }
  func.func @transform_4(%arg0: i32) -> (i32, i32) {
    %c0_i32 = arith.constant 0 : i32
    %c0_i32_0 = arith.constant 0 : i32
    %c0_i32_1 = arith.constant 0 : i32
    return %c0_i32, %c0_i32_0 : i32, i32
  }
  func.func @transform_5(%arg0: i32) -> (i32, i32) {
    %c0_i32 = arith.constant 0 : i32
    %c0_i32_0 = arith.constant 0 : i32
    %c0_i32_1 = arith.constant 0 : i32
    return %c0_i32, %c0_i32_0 : i32, i32
  }
  func.func @transform_6(%arg0: i32) -> (i32, i32) {
    %c0_i32 = arith.constant 0 : i32
    %c0_i32_0 = arith.constant 0 : i32
    %c0_i32_1 = arith.constant 0 : i32
    return %c0_i32, %c0_i32_0 : i32, i32
  }
  func.func @transform_7(%arg0: i32) -> (i32, i32, i32) {
    %c0_i32 = arith.constant 0 : i32
    %c0_i32_0 = arith.constant 0 : i32
    %c0_i32_1 = arith.constant 0 : i32
    return %arg0, %c0_i32, %c0_i32_0 : i32, i32, i32
  }
}

</mosaic_0001>

<llo_original>
// kernel: super_resnet_forward.1
$region0: #{super_resnet_forward.1}
  #allocation0 [shape = 'u32[]', space=smem, size = 0x4, offset = 0x4, fixed_abs, tag = 'smem constant byte address 0x4 - core index']
  #allocation1 [shape = 'u32[144,128]{1,0:T(1,128)}', space=vmem, size = 0x12000, scoped, tag = 'internal scratch']
  #allocation2 [shape = 'f32[2,18,18,64]{3,2,1,0:T(8,128)}', space=vmem, size = 0x6c000, scoped, tag = 'scratch operand']
  %s0 = inlined_call_operand.hbm [shape: f32[2,256,27], index: 0, kind: input, shape index: {}]
  %s1 = inlined_call_operand.hbm [shape: f32[27,64], index: 1, kind: input, shape index: {}]
  %s2 = inlined_call_operand.hbm [shape: f32[1,64], index: 2, kind: input, shape index: {}]
  %s3 = inlined_call_operand.hbm [shape: f32[3,192,64], index: 3, kind: input, shape index: {}]
  %s4 = inlined_call_operand.hbm [shape: f32[1,64], index: 4, kind: input, shape index: {}]
  %s5 = inlined_call_operand.hbm [shape: f32[3,64], index: 5, kind: input, shape index: {}]
  %s6 = inlined_call_operand.hbm [shape: f32[3,1], index: 6, kind: input, shape index: {}]
  %s7 = inlined_call_operand.hbm [shape: f32[2,3,256], index: 7, kind: output, shape index: {}]
  %s8 = sld [smem:[#allocation0]]
  $region66: #{super_resnet_forward.1} parent=0
    _
  %s10 = ssub.s32 1, %s8
  %s11 = scalar_select 0, %s10, %s8
  $region1: #{super_resnet_forward.1} parent=0
    #allocation3 [shape = 'u8[262144]{0}', space=vmem, size = 0x40000, scoped, tag = 'input window, operand 0, single buffered']
    #allocation4 [shape = 's32[1]{0}', space=sflag, size = 0x4, scoped, tag = 'scoped memory for super_resnet_forward.1']
    #allocation5 [shape = 's32[1]{0}', space=sflag, size = 0x4, scoped, tag = 'scoped memory for super_resnet_forward.1']
    #allocation6 [shape = 'u8[16384]{0}', space=vmem, size = 0x4000, scoped, tag = 'input window, operand 1, single buffered']
    #allocation7 [shape = 's32[1]{0}', space=sflag, size = 0x4, scoped, tag = 'scoped memory for super_resnet_forward.1']
    #allocation8 [shape = 'u8[512]{0}', space=vmem, size = 0x400, scoped, tag = 'input window, operand 2, single buffered']
    #allocation9 [shape = 'u8[294912]{0}', space=vmem, size = 0x48000, scoped, tag = 'input window, operand 3, single buffered']
    #allocation10 [shape = 's32[1]{0}', space=sflag, size = 0x4, scoped, tag = 'scoped memory for super_resnet_forward.1']
    #allocation11 [shape = 'u8[512]{0}', space=vmem, size = 0x400, scoped, tag = 'input window, operand 4, single buffered']
    #allocation12 [shape = 'u8[2048]{0}', space=vmem, size = 0x800, scoped, tag = 'input window, operand 5, single buffered']
    #allocation13 [shape = 's32[1]{0}', space=sflag, size = 0x4, scoped, tag = 'scoped memory for super_resnet_forward.1']
    #allocation14 [shape = 'u8[2048]{0}', space=vmem, size = 0x800, scoped, tag = 'input window, operand 6, single buffered']
    #allocation15 [shape = 'u8[8192]{0}', space=vmem, size = 0x2000, scoped, tag = 'output window, operand 0, single buffered']
    %12 = vsyncpa [#allocation4], 0
    %13 = vsyncpa [#allocation7], 0
    %14 = vsyncpa [#allocation10], 0
    %15 = vsyncpa [#allocation13], 0
    %16 = vsyncpa [#allocation5], 0
    // Predicated region
    $region2: #{super_resnet_forward.1} parent=1 // pred_check
      _
    $region3: #{super_resnet_forward.1} parent=1 // pred_check_branch
      %18 = sbr.rel (0) target = $region5
    $region4: #{super_resnet_forward.1} parent=1 // pred_region
      %s20 = ssub.s32 8192, 8192
      %21 = vsyncadd [#allocation4], %s20
      %s22 = sshll.u32 [#allocation3], 4
      %s23 = int_to_ptr.vmem [resolvable:$true] %s22
      %28 = dma.hbm_to_vmem [thread:$0]  %s0, 8192, %s23, [#allocation4], 128, 128, 8
    $region5: #{super_resnet_forward.1} parent=1 // pred_fallthru
      _
    // Predicated region
    $region6: #{super_resnet_forward.1} parent=1 // pred_check
      _
    $region7: #{super_resnet_forward.1} parent=1 // pred_check_branch
      %30 = sbr.rel (0) target = $region9
    $region8: #{super_resnet_forward.1} parent=1 // pred_region
      %s32 = ssub.s32 512, 512
      %33 = vsyncadd [#allocation7], %s32
      %s34 = sshll.u32 [#allocation6], 4
      %s35 = int_to_ptr.vmem [resolvable:$true] %s34
      %40 = dma.hbm_to_vmem [thread:$0]  %s1, 512, %s35, [#allocation7], 128, 128, 8
    $region9: #{super_resnet_forward.1} parent=1 // pred_fallthru
      _
    // Predicated region
    $region10: #{super_resnet_forward.1} parent=1 // pred_check
      _
    $region11: #{super_resnet_forward.1} parent=1 // pred_check_branch
      %42 = sbr.rel (0) target = $region13
    $region12: #{super_resnet_forward.1} parent=1 // pred_region
      %s44 = ssub.s32 16, 16
      %45 = vsyncadd [#allocation7], %s44
      %s47 = sshll.u32 [#allocation8], 4
      %s48 = int_to_ptr.vmem [resolvable:$true] %s47
      %50 = dma.hbm_to_vmem [thread:$0]  %s2, 16, %s48, [#allocation7]
    $region13: #{super_resnet_forward.1} parent=1 // pred_fallthru
      _
    // Predicated region
    $region14: #{super_resnet_forward.1} parent=1 // pred_check
      _
    $region15: #{super_resnet_forward.1} parent=1 // pred_check_branch
      %52 = sbr.rel (0) target = $region17
    $region16: #{super_resnet_forward.1} parent=1 // pred_region
      %s54 = ssub.s32 9216, 9216
      %55 = vsyncadd [#allocation10], %s54
      %s56 = sshll.u32 [#allocation9], 4
      %s57 = int_to_ptr.vmem [resolvable:$true] %s56
      %62 = dma.hbm_to_vmem [thread:$0]  %s3, 9216, %s57, [#allocation10], 128, 128, 8
    $region17: #{super_resnet_forward.1} parent=1 // pred_fallthru
      _
    // Predicated region
    $region18: #{super_resnet_forward.1} parent=1 // pred_check
      _
    $region19: #{super_resnet_forward.1} parent=1 // pred_check_branch
      %64 = sbr.rel (0) target = $region21
    $region20: #{super_resnet_forward.1} parent=1 // pred_region
      %s66 = ssub.s32 16, 16
      %67 = vsyncadd [#allocation10], %s66
      %s69 = sshll.u32 [#allocation11], 4
      %s70 = int_to_ptr.vmem [resolvable:$true] %s69
      %72 = dma.hbm_to_vmem [thread:$0]  %s4, 16, %s70, [#allocation10]
    $region21: #{super_resnet_forward.1} parent=1 // pred_fallthru
      _
    // Predicated region
    $region22: #{super_resnet_forward.1} parent=1 // pred_check
      _
    $region23: #{super_resnet_forward.1} parent=1 // pred_check_branch
      %74 = sbr.rel (0) target = $region25
    $region24: #{super_resnet_forward.1} parent=1 // pred_region
      %s76 = ssub.s32 64, 64
      %77 = vsyncadd [#allocation13], %s76
      %s79 = sshll.u32 [#allocation12], 4
      %s80 = int_to_ptr.vmem [resolvable:$true] %s79
      %82 = dma.hbm_to_vmem [thread:$0]  %s5, 64, %s80, [#allocation13]
    $region25: #{super_resnet_forward.1} parent=1 // pred_fallthru
      _
    // Predicated region
    $region26: #{super_resnet_forward.1} parent=1 // pred_check
      _
    $region27: #{super_resnet_forward.1} parent=1 // pred_check_branch
      %84 = sbr.rel (0) target = $region29
    $region28: #{super_resnet_forward.1} parent=1 // pred_region
      %s86 = ssub.s32 64, 64
      %87 = vsyncadd [#allocation13], %s86
      %s89 = sshll.u32 [#allocation14], 4
      %s90 = int_to_ptr.vmem [resolvable:$true] %s89
      %92 = dma.hbm_to_vmem [thread:$0]  %s6, 64, %s90, [#allocation13]
    $region29: #{super_resnet_forward.1} parent=1 // pred_fallthru
      _
    // Predicated region
    $region30: #{super_resnet_forward.1} parent=1 // pred_check
      _
    $region31: #{super_resnet_forward.1} parent=1 // pred_check_branch
      %94 = sbr.rel (0) target = $region33
    $region32: #{super_resnet_forward.1} parent=1 // pred_region
      %95 = dma.done [#allocation4], 8192
    $region33: #{super_resnet_forward.1} parent=1 // pred_fallthru
      _
    // Predicated region
    $region34: #{super_resnet_forward.1} parent=1 // pred_check
      _
    $region35: #{super_resnet_forward.1} parent=1 // pred_check_branch
      %97 = sbr.rel (0) target = $region37
    $region36: #{super_resnet_forward.1} parent=1 // pred_region
      %98 = dma.done [#allocation7], 512
    $region37: #{super_resnet_forward.1} parent=1 // pred_fallthru
      _
    // Predicated region
    $region38: #{super_resnet_forward.1} parent=1 // pred_check
      _
    $region39: #{super_resnet_forward.1} parent=1 // pred_check_branch
      %100 = sbr.rel (0) target = $region41
    $region40: #{super_resnet_forward.1} parent=1 // pred_region
      %101 = dma.done [#allocation7], 16
    $region41: #{super_resnet_forward.1} parent=1 // pred_fallthru
      _
    // Predicated region
    $region42: #{super_resnet_forward.1} parent=1 // pred_check
      _
    $region43: #{super_resnet_forward.1} parent=1 // pred_check_branch
      %103 = sbr.rel (0) target = $region45
    $region44: #{super_resnet_forward.1} parent=1 // pred_region
      %104 = dma.done [#allocation10], 9216
    $region45: #{super_resnet_forward.1} parent=1 // pred_fallthru
      _
    // Predicated region
    $region46: #{super_resnet_forward.1} parent=1 // pred_check
      _
    $region47: #{super_resnet_forward.1} parent=1 // pred_check_branch
      %106 = sbr.rel (0) target = $region49
    $region48: #{super_resnet_forward.1} parent=1 // pred_region
      %107 = dma.done [#allocation10], 16
    $region49: #{super_resnet_forward.1} parent=1 // pred_fallthru
      _
    // Predicated region
    $region50: #{super_resnet_forward.1} parent=1 // pred_check
      _
    $region51: #{super_resnet_forward.1} parent=1 // pred_check_branch
      %109 = sbr.rel (0) target = $region53
    $region52: #{super_resnet_forward.1} parent=1 // pred_region
      %110 = dma.done [#allocation13], 64
    $region53: #{super_resnet_forward.1} parent=1 // pred_fallthru
      _
    // Predicated region
    $region54: #{super_resnet_forward.1} parent=1 // pred_check
      _
    $region55: #{super_resnet_forward.1} parent=1 // pred_check_branch
      %112 = sbr.rel (0) target = $region57
    $region56: #{super_resnet_forward.1} parent=1 // pred_region
      %113 = dma.done [#allocation13], 64
    $region57: #{super_resnet_forward.1} parent=1 // pred_fallthru
      _
    %v114 = vld [vmem:[#allocation3] sm:$0xff]
    %v115 = vld [vmem:[#allocation3 + $0x8] sm:$0xff]
    %v116 = vld [vmem:[#allocation3 + $0x10] sm:$0xff]
    %v117 = vld [vmem:[#allocation3 + $0x18] sm:$0xff]
    %v118 = vld [vmem:[#allocation3 + $0x20] sm:$0xff]
    %v119 = vld [vmem:[#allocation3 + $0x28] sm:$0xff]
    %v120 = vld [vmem:[#allocation3 + $0x30] sm:$0xff]
    %v121 = vld [vmem:[#allocation3 + $0x38] sm:$0xff]
    %v122 = vld [vmem:[#allocation3 + $0x40] sm:$0xff]
    %v123 = vld [vmem:[#allocation3 + $0x48] sm:$0xff]
    %v124 = vld [vmem:[#allocation3 + $0x50] sm:$0xff]
    %v125 = vld [vmem:[#allocation3 + $0x58] sm:$0xff]
    %v126 = vld [vmem:[#allocation3 + $0x60] sm:$0xff]
    %v127 = vld [vmem:[#allocation3 + $0x68] sm:$0xff]
    %v128 = vld [vmem:[#allocation3 + $0x70] sm:$0xff]
    %v129 = vld [vmem:[#allocation3 + $0x78] sm:$0xff]
    %v130 = vld [vmem:[#allocation3 + $0x80] sm:$0xff]
    %v131 = vld [vmem:[#allocation3 + $0x88] sm:$0xff]
    %v132 = vld [vmem:[#allocation3 + $0x90] sm:$0xff]
    %v133 = vld [vmem:[#allocation3 + $0x98] sm:$0xff]
    %v134 = vld [vmem:[#allocation3 + $0xa0] sm:$0xff]
    %v135 = vld [vmem:[#allocation3 + $0xa8] sm:$0xff]
    %v136 = vld [vmem:[#allocation3 + $0xb0] sm:$0xff]
    %v137 = vld [vmem:[#allocation3 + $0xb8] sm:$0xff]
    %v138 = vld [vmem:[#allocation3 + $0xc0] sm:$0xff]
    %v139 = vld [vmem:[#allocation3 + $0xc8] sm:$0xff]
    %v140 = vld [vmem:[#allocation3 + $0xd0] sm:$0xff]
    %v141 = vld [vmem:[#allocation3 + $0xd8] sm:$0xff]
    %v142 = vld [vmem:[#allocation3 + $0xe0] sm:$0xff]
    %v143 = vld [vmem:[#allocation3 + $0xe8] sm:$0xff]
    %v144 = vld [vmem:[#allocation3 + $0xf0] sm:$0xff]
    %v145 = vld [vmem:[#allocation3 + $0xf8] sm:$0xff]
    %v146 = vld [vmem:[#allocation3 + $0x100] sm:$0xff]
    %v147 = vld [vmem:[#allocation3 + $0x108] sm:$0xff]
    %v148 = vld [vmem:[#allocation3 + $0x110] sm:$0xff]
    %v149 = vld [vmem:[#allocation3 + $0x118] sm:$0xff]
    %v150 = vld [vmem:[#allocation3 + $0x120] sm:$0xff]
    %v151 = vld [vmem:[#allocation3 + $0x128] sm:$0xff]
    %v152 = vld [vmem:[#allocation3 + $0x130] sm:$0xff]
    %v153 = vld [vmem:[#allocation3 + $0x138] sm:$0xff]
    %v154 = vld [vmem:[#allocation3 + $0x140] sm:$0xff]
    %v155 = vld [vmem:[#allocation3 + $0x148] sm:$0xff]
    %v156 = vld [vmem:[#allocation3 + $0x150] sm:$0xff]
    %v157 = vld [vmem:[#allocation3 + $0x158] sm:$0xff]
    %v158 = vld [vmem:[#allocation3 + $0x160] sm:$0xff]
    %v159 = vld [vmem:[#allocation3 + $0x168] sm:$0xff]
    %v160 = vld [vmem:[#allocation3 + $0x170] sm:$0xff]
    %v161 = vld [vmem:[#allocation3 + $0x178] sm:$0xff]
    %v162 = vld [vmem:[#allocation3 + $0x180] sm:$0xff]
    %v163 = vld [vmem:[#allocation3 + $0x188] sm:$0xff]
    %v164 = vld [vmem:[#allocation3 + $0x190] sm:$0xff]
    %v165 = vld [vmem:[#allocation3 + $0x198] sm:$0xff]
    %v166 = vld [vmem:[#allocation3 + $0x1a0] sm:$0xff]
    %v167 = vld [vmem:[#allocation3 + $0x1a8] sm:$0xff]
    %v168 = vld [vmem:[#allocation3 + $0x1b0] sm:$0xff]
    %v169 = vld [vmem:[#allocation3 + $0x1b8] sm:$0xff]
    %v170 = vld [vmem:[#allocation3 + $0x1c0] sm:$0xff]
    %v171 = vld [vmem:[#allocation3 + $0x1c8] sm:$0xff]
    %v172 = vld [vmem:[#allocation3 + $0x1d0] sm:$0xff]
    %v173 = vld [vmem:[#allocation3 + $0x1d8] sm:$0xff]
    %v174 = vld [vmem:[#allocation3 + $0x1e0] sm:$0xff]
    %v175 = vld [vmem:[#allocation3 + $0x1e8] sm:$0xff]
    %v176 = vld [vmem:[#allocation3 + $0x1f0] sm:$0xff]
    %v177 = vld [vmem:[#allocation3 + $0x1f8] sm:$0xff]
    %v178 = vld [vmem:[#allocation6] sm:$0xff]
    %v179 = vld [vmem:[#allocation6 + $0x8] sm:$0xff]
    %v180 = vld [vmem:[#allocation6 + $0x10] sm:$0xff]
    %v181 = vld [vmem:[#allocation6 + $0x18] sm:$0x7]
    %v182 = vld [vmem:[#allocation8] sm:$0x1]
    %v184 = vlaneseq
    %v185 = vshrl.u32 %v184, 7
    %v186 = vsub.s32 0, %v185
    %v187 = vrot.slane %v182, %v186
    %vm189 = vcmask 220160
    %v191 = vsel %vm189, %v114, 0
    %v194 = vsel %vm189, %v115, 0
    %v197 = vsel %vm189, %v116, 0
    %v200 = vsel %vm189, %v117, 0
    %v203 = vsel %vm189, %v118, 0
    %v206 = vsel %vm189, %v119, 0
    %v209 = vsel %vm189, %v120, 0
    %v212 = vsel %vm189, %v121, 0
    %v215 = vsel %vm189, %v122, 0
    %v218 = vsel %vm189, %v123, 0
    %v221 = vsel %vm189, %v124, 0
    %v224 = vsel %vm189, %v125, 0
    %v227 = vsel %vm189, %v126, 0
    %v230 = vsel %vm189, %v127, 0
    %v233 = vsel %vm189, %v128, 0
    %v236 = vsel %vm189, %v129, 0
    %v239 = vsel %vm189, %v130, 0
    %v242 = vsel %vm189, %v131, 0
    %v245 = vsel %vm189, %v132, 0
    %v248 = vsel %vm189, %v133, 0
    %v251 = vsel %vm189, %v134, 0
    %v254 = vsel %vm189, %v135, 0
    %v257 = vsel %vm189, %v136, 0
    %v260 = vsel %vm189, %v137, 0
    %v263 = vsel %vm189, %v138, 0
    %v266 = vsel %vm189, %v139, 0
    %v269 = vsel %vm189, %v140, 0
    %v272 = vsel %vm189, %v141, 0
    %v275 = vsel %vm189, %v142, 0
    %v278 = vsel %vm189, %v143, 0
    %v281 = vsel %vm189, %v144, 0
    %v284 = vsel %vm189, %v145, 0
    %v287 = vsel %vm189, %v146, 0
    %v290 = vsel %vm189, %v147, 0
    %v293 = vsel %vm189, %v148, 0
    %v296 = vsel %vm189, %v149, 0
    %v299 = vsel %vm189, %v150, 0
    %v302 = vsel %vm189, %v151, 0
    %v305 = vsel %vm189, %v152, 0
    %v308 = vsel %vm189, %v153, 0
    %v311 = vsel %vm189, %v154, 0
    %v314 = vsel %vm189, %v155, 0
    %v317 = vsel %vm189, %v156, 0
    %v320 = vsel %vm189, %v157, 0
    %v323 = vsel %vm189, %v158, 0
    %v326 = vsel %vm189, %v159, 0
    %v329 = vsel %vm189, %v160, 0
    %v332 = vsel %vm189, %v161, 0
    %v335 = vsel %vm189, %v162, 0
    %v338 = vsel %vm189, %v163, 0
    %v341 = vsel %vm189, %v164, 0
    %v344 = vsel %vm189, %v165, 0
    %v347 = vsel %vm189, %v166, 0
    %v350 = vsel %vm189, %v167, 0
    %v353 = vsel %vm189, %v168, 0
    %v356 = vsel %vm189, %v169, 0
    %v359 = vsel %vm189, %v170, 0
    %v362 = vsel %vm189, %v171, 0
    %v365 = vsel %vm189, %v172, 0
    %v368 = vsel %vm189, %v173, 0
    %v371 = vsel %vm189, %v174, 0
    %v374 = vsel %vm189, %v175, 0
    %v377 = vsel %vm189, %v176, 0
    %v380 = vsel %vm189, %v177, 0
    %vm382 = vcmask 1042432
    %v384 = vsel %vm382, %v181, 0
    %386 = vmatprep.subr.mxu0 0.0
    %387 = vmatpush1.msra.mxu0 %v178
    %388 = vmatprep.subr.mxu0 0.0
    %389 = vmatpush1.msra.mxu0 %v179
    %390 = vmatprep.subr.mxu0 0.0
    %391 = vmatpush1.msra.mxu0 %v180
    %392 = vmatprep.subr.mxu0 0.0
    %393 = vmatpush1.msra.mxu0 %v384
    %394 = vmatprep.subr.mxu0 0.0
    %395 = vmatpush1.msra.mxu0 0.0
    %396 = vmatprep.subr.mxu0 0.0
    %397 = vmatpush1.msra.mxu0 0.0
    %398 = vmatprep.subr.mxu0 0.0
    %399 = vmatpush1.msra.mxu0 0.0
    %400 = vmatprep.subr.mxu0 0.0
    %401 = vmatpush1.msra.mxu0 0.0
    %402 = vmatprep.subr.mxu0 0.0
    %403 = vmatpush1.msra.mxu0 0.0
    %404 = vmatprep.subr.mxu0 0.0
    %405 = vmatpush1.msra.mxu0 0.0
    %406 = vmatprep.subr.mxu0 0.0
    %407 = vmatpush1.msra.mxu0 0.0
    %408 = vmatprep.subr.mxu0 0.0
    %409 = vmatpush1.msra.mxu0 0.0
    %410 = vmatprep.subr.mxu0 0.0
    %411 = vmatpush1.msra.mxu0 0.0
    %412 = vmatprep.subr.mxu0 0.0
    %413 = vmatpush1.msra.mxu0 0.0
    %414 = vmatprep.subr.mxu0 0.0
    %415 = vmatpush1.msra.mxu0 0.0
    %416 = vmatprep.subr.mxu0 0.0
    %417 = vmatpush1.msra.mxu0 0.0
    %418 = vmatprep.subr.mxu0 0.0
    %419 = vmatpush1.msra.mxu0 0.0
    %420 = vmatprep.subr.mxu0 0.0
    %421 = vmatpush1.msra.mxu0 0.0
    %422 = vmatprep.subr.mxu0 0.0
    %423 = vmatpush1.msra.mxu0 0.0
    %424 = vmatprep.subr.mxu0 0.0
    %425 = vmatpush1.msra.mxu0 0.0
    %426 = vmatprep.subr.mxu0 0.0
    %427 = vmatpush1.msra.mxu0 0.0
    %428 = vmatprep.subr.mxu0 0.0
    %429 = vmatpush1.msra.mxu0 0.0
    %430 = vmatprep.subr.mxu0 0.0
    %431 = vmatpush1.msra.mxu0 0.0
    %432 = vmatprep.subr.mxu0 0.0
    %433 = vmatpush1.msra.mxu0 0.0
    %434 = vmatprep.subr.mxu0 0.0
    %435 = vmatpush1.msra.mxu0 0.0
    %436 = vmatprep.subr.mxu0 0.0
    %437 = vmatpush1.msra.mxu0 0.0
    %438 = vmatprep.subr.mxu0 0.0
    %439 = vmatpush1.msra.mxu0 0.0
    %440 = vmatprep.subr.mxu0 0.0
    %441 = vmatpush1.msra.mxu0 0.0
    %442 = vmatprep.subr.mxu0 0.0
    %443 = vmatpush1.msra.mxu0 0.0
    %444 = vmatprep.subr.mxu0 0.0
    %445 = vmatpush1.msra.mxu0 0.0
    %446 = vmatprep.subr.mxu0 0.0
    %447 = vmatpush1.msra.mxu0 0.0
    %448 = vmatprep.subr.mxu0 0.0
    %449 = vmatpush1.msra.mxu0 0.0
    %450 = vmatprep.mubr.f32.mxu0 0.0
    %451 = vmatmul.mubr.f32.gmra.mrb[0].mxu0 %v191
    %v452 = vpop.f32.mrb[0].mxu0
    %v453 = vadd.f32 %v187, %v452
    %v454 = vpop.f32.mrb[0].mxu0
    %455 = vmatprep.mubr.f32.mxu0 0.0
    %456 = vmatmul.mubr.f32.gmra.mrb[0].mxu0 %v194
    %v457 = vpop.f32.mrb[0].mxu0
    %v458 = vadd.f32 %v187, %v457
    %v459 = vpop.f32.mrb[0].mxu0
    %460 = vmatprep.mubr.f32.mxu0 0.0
    %461 = vmatmul.mubr.f32.gmra.mrb[0].mxu0 %v197
    %v462 = vpop.f32.mrb[0].mxu0
    %v463 = vadd.f32 %v187, %v462
    %v464 = vpop.f32.mrb[0].mxu0
    %465 = vmatprep.mubr.f32.mxu0 0.0
    %466 = vmatmul.mubr.f32.gmra.mrb[0].mxu0 %v200
    %v467 = vpop.f32.mrb[0].mxu0
    %v468 = vadd.f32 %v187, %v467
    %v469 = vpop.f32.mrb[0].mxu0
    %470 = vmatprep.mubr.f32.mxu0 0.0
    %471 = vmatmul.mubr.f32.gmra.mrb[0].mxu0 %v203
    %v472 = vpop.f32.mrb[0].mxu0
    %v473 = vadd.f32 %v187, %v472
    %v474 = vpop.f32.mrb[0].mxu0
    %475 = vmatprep.mubr.f32.mxu0 0.0
    %476 = vmatmul.mubr.f32.gmra.mrb[0].mxu0 %v206
    %v477 = vpop.f32.mrb[0].mxu0
    %v478 = vadd.f32 %v187, %v477
    %v479 = vpop.f32.mrb[0].mxu0
    %480 = vmatprep.mubr.f32.mxu0 0.0
    %481 = vmatmul.mubr.f32.gmra.mrb[0].mxu0 %v209
    %v482 = vpop.f32.mrb[0].mxu0
    %v483 = vadd.f32 %v187, %v482
    %v484 = vpop.f32.mrb[0].mxu0
    %485 = vmatprep.mubr.f32.mxu0 0.0
    %486 = vmatmul.mubr.f32.gmra.mrb[0].mxu0 %v212
    %v487 = vpop.f32.mrb[0].mxu0
    %v488 = vadd.f32 %v187, %v487
    %v489 = vpop.f32.mrb[0].mxu0
    %490 = vmatprep.mubr.f32.mxu0 0.0
    %491 = vmatmul.mubr.f32.gmra.mrb[0].mxu0 %v215
    %v492 = vpop.f32.mrb[0].mxu0
    %v493 = vadd.f32 %v187, %v492
    %v494 = vpop.f32.mrb[0].mxu0
    %495 = vmatprep.mubr.f32.mxu0 0.0
    %496 = vmatmul.mubr.f32.gmra.mrb[0].mxu0 %v218
    %v497 = vpop.f32.mrb[0].mxu0
    %v498 = vadd.f32 %v187, %v497
    %v499 = vpop.f32.mrb[0].mxu0
    %500 = vmatprep.mubr.f32.mxu0 0.0
    %501 = vmatmul.mubr.f32.gmra.mrb[0].mxu0 %v221
    %v502 = vpop.f32.mrb[0].mxu0
    %v503 = vadd.f32 %v187, %v502
    %v504 = vpop.f32.mrb[0].mxu0
    %505 = vmatprep.mubr.f32.mxu0 0.0
    %506 = vmatmul.mubr.f32.gmra.mrb[0].mxu0 %v224
    %v507 = vpop.f32.mrb[0].mxu0
    %v508 = vadd.f32 %v187, %v507
    %v509 = vpop.f32.mrb[0].mxu0
    %510 = vmatprep.mubr.f32.mxu0 0.0
    %511 = vmatmul.mubr.f32.gmra.mrb[0].mxu0 %v227
    %v512 = vpop.f32.mrb[0].mxu0
    %v513 = vadd.f32 %v187, %v512
    %v514 = vpop.f32.mrb[0].mxu0
    %515 = vmatprep.mubr.f32.mxu0 0.0
    %516 = vmatmul.mubr.f32.gmra.mrb[0].mxu0 %v230
    %v517 = vpop.f32.mrb[0].mxu0
    %v518 = vadd.f32 %v187, %v517
    %v519 = vpop.f32.mrb[0].mxu0
    %520 = vmatprep.mubr.f32.mxu0 0.0
    %521 = vmatmul.mubr.f32.gmra.mrb[0].mxu0 %v233
    %v522 = vpop.f32.mrb[0].mxu0
    %v523 = vadd.f32 %v187, %v522
    %v524 = vpop.f32.mrb[0].mxu0
    %525 = vmatprep.mubr.f32.mxu0 0.0
    %526 = vmatmul.mubr.f32.gmra.mrb[0].mxu0 %v236
    %v527 = vpop.f32.mrb[0].mxu0
    %v528 = vadd.f32 %v187, %v527
    %v529 = vpop.f32.mrb[0].mxu0
    %530 = vmatprep.mubr.f32.mxu0 0.0
    %531 = vmatmul.mubr.f32.gmra.mrb[0].mxu0 %v239
    %v532 = vpop.f32.mrb[0].mxu0
    %v533 = vadd.f32 %v187, %v532
    %v534 = vpop.f32.mrb[0].mxu0
    %535 = vmatprep.mubr.f32.mxu0 0.0
    %536 = vmatmul.mubr.f32.gmra.mrb[0].mxu0 %v242
    %v537 = vpop.f32.mrb[0].mxu0
    %v538 = vadd.f32 %v187, %v537
    %v539 = vpop.f32.mrb[0].mxu0
    %540 = vmatprep.mubr.f32.mxu0 0.0
    %541 = vmatmul.mubr.f32.gmra.mrb[0].mxu0 %v245
    %v542 = vpop.f32.mrb[0].mxu0
    %v543 = vadd.f32 %v187, %v542
    %v544 = vpop.f32.mrb[0].mxu0
    %545 = vmatprep.mubr.f32.mxu0 0.0
    %546 = vmatmul.mubr.f32.gmra.mrb[0].mxu0 %v248
    %v547 = vpop.f32.mrb[0].mxu0
    %v548 = vadd.f32 %v187, %v547
    %v549 = vpop.f32.mrb[0].mxu0
    %550 = vmatprep.mubr.f32.mxu0 0.0
    %551 = vmatmul.mubr.f32.gmra.mrb[0].mxu0 %v251
    %v552 = vpop.f32.mrb[0].mxu0
    %v553 = vadd.f32 %v187, %v552
    %v554 = vpop.f32.mrb[0].mxu0
    %555 = vmatprep.mubr.f32.mxu0 0.0
    %556 = vmatmul.mubr.f32.gmra.mrb[0].mxu0 %v254
    %v557 = vpop.f32.mrb[0].mxu0
    %v558 = vadd.f32 %v187, %v557
    %v559 = vpop.f32.mrb[0].mxu0
    %560 = vmatprep.mubr.f32.mxu0 0.0
    %561 = vmatmul.mubr.f32.gmra.mrb[0].mxu0 %v257
    %v562 = vpop.f32.mrb[0].mxu0
    %v563 = vadd.f32 %v187, %v562
    %v564 = vpop.f32.mrb[0].mxu0
    %565 = vmatprep.mubr.f32.mxu0 0.0
    %566 = vmatmul.mubr.f32.gmra.mrb[0].mxu0 %v260
    %v567 = vpop.f32.mrb[0].mxu0
    %v568 = vadd.f32 %v187, %v567
    %v569 = vpop.f32.mrb[0].mxu0
    %570 = vmatprep.mubr.f32.mxu0 0.0
    %571 = vmatmul.mubr.f32.gmra.mrb[0].mxu0 %v263
    %v572 = vpop.f32.mrb[0].mxu0
    %v573 = vadd.f32 %v187, %v572
    %v574 = vpop.f32.mrb[0].mxu0
    %575 = vmatprep.mubr.f32.mxu0 0.0
    %576 = vmatmul.mubr.f32.gmra.mrb[0].mxu0 %v266
    %v577 = vpop.f32.mrb[0].mxu0
    %v578 = vadd.f32 %v187, %v577
    %v579 = vpop.f32.mrb[0].mxu0
    %580 = vmatprep.mubr.f32.mxu0 0.0
    %581 = vmatmul.mubr.f32.gmra.mrb[0].mxu0 %v269
    %v582 = vpop.f32.mrb[0].mxu0
    %v583 = vadd.f32 %v187, %v582
    %v584 = vpop.f32.mrb[0].mxu0
    %585 = vmatprep.mubr.f32.mxu0 0.0
    %586 = vmatmul.mubr.f32.gmra.mrb[0].mxu0 %v272
    %v587 = vpop.f32.mrb[0].mxu0
    %v588 = vadd.f32 %v187, %v587
    %v589 = vpop.f32.mrb[0].mxu0
    %590 = vmatprep.mubr.f32.mxu0 0.0
    %591 = vmatmul.mubr.f32.gmra.mrb[0].mxu0 %v275
    %v592 = vpop.f32.mrb[0].mxu0
    %v593 = vadd.f32 %v187, %v592
    %v594 = vpop.f32.mrb[0].mxu0
    %595 = vmatprep.mubr.f32.mxu0 0.0
    %596 = vmatmul.mubr.f32.gmra.mrb[0].mxu0 %v278
    %v597 = vpop.f32.mrb[0].mxu0
    %v598 = vadd.f32 %v187, %v597
    %v599 = vpop.f32.mrb[0].mxu0
    %600 = vmatprep.mubr.f32.mxu0 0.0
    %601 = vmatmul.mubr.f32.gmra.mrb[0].mxu0 %v281
    %v602 = vpop.f32.mrb[0].mxu0
    %v603 = vadd.f32 %v187, %v602
    %v604 = vpop.f32.mrb[0].mxu0
    %605 = vmatprep.mubr.f32.mxu0 0.0
    %606 = vmatmul.mubr.f32.gmra.mrb[0].mxu0 %v284
    %v607 = vpop.f32.mrb[0].mxu0
    %v608 = vadd.f32 %v187, %v607
    %v609 = vpop.f32.mrb[0].mxu0
    %610 = vmatprep.mubr.f32.mxu0 0.0
    %611 = vmatmul.mubr.f32.gmra.mrb[0].mxu0 %v287
    %v612 = vpop.f32.mrb[0].mxu0
    %v613 = vadd.f32 %v187, %v612
    %v614 = vpop.f32.mrb[0].mxu0
    %615 = vmatprep.mubr.f32.mxu0 0.0
    %616 = vmatmul.mubr.f32.gmra.mrb[0].mxu0 %v290
    %v617 = vpop.f32.mrb[0].mxu0
    %v618 = vadd.f32 %v187, %v617
    %v619 = vpop.f32.mrb[0].mxu0
    %620 = vmatprep.mubr.f32.mxu0 0.0
    %621 = vmatmul.mubr.f32.gmra.mrb[0].mxu0 %v293
    %v622 = vpop.f32.mrb[0].mxu0
    %v623 = vadd.f32 %v187, %v622
    %v624 = vpop.f32.mrb[0].mxu0
    %625 = vmatprep.mubr.f32.mxu0 0.0
    %626 = vmatmul.mubr.f32.gmra.mrb[0].mxu0 %v296
    %v627 = vpop.f32.mrb[0].mxu0
    %v628 = vadd.f32 %v187, %v627
    %v629 = vpop.f32.mrb[0].mxu0
    %630 = vmatprep.mubr.f32.mxu0 0.0
    %631 = vmatmul.mubr.f32.gmra.mrb[0].mxu0 %v299
    %v632 = vpop.f32.mrb[0].mxu0
    %v633 = vadd.f32 %v187, %v632
    %v634 = vpop.f32.mrb[0].mxu0
    %635 = vmatprep.mubr.f32.mxu0 0.0
    %636 = vmatmul.mubr.f32.gmra.mrb[0].mxu0 %v302
    %v637 = vpop.f32.mrb[0].mxu0
    %v638 = vadd.f32 %v187, %v637
    %v639 = vpop.f32.mrb[0].mxu0
    %640 = vmatprep.mubr.f32.mxu0 0.0
    %641 = vmatmul.mubr.f32.gmra.mrb[0].mxu0 %v305
    %v642 = vpop.f32.mrb[0].mxu0
    %v643 = vadd.f32 %v187, %v642
    %v644 = vpop.f32.mrb[0].mxu0
    %645 = vmatprep.mubr.f32.mxu0 0.0
    %646 = vmatmul.mubr.f32.gmra.mrb[0].mxu0 %v308
    %v647 = vpop.f32.mrb[0].mxu0
    %v648 = vadd.f32 %v187, %v647
    %v649 = vpop.f32.mrb[0].mxu0
    %650 = vmatprep.mubr.f32.mxu0 0.0
    %651 = vmatmul.mubr.f32.gmra.mrb[0].mxu0 %v311
    %v652 = vpop.f32.mrb[0].mxu0
    %v653 = vadd.f32 %v187, %v652
    %v654 = vpop.f32.mrb[0].mxu0
    %655 = vmatprep.mubr.f32.mxu0 0.0
    %656 = vmatmul.mubr.f32.gmra.mrb[0].mxu0 %v314
    %v657 = vpop.f32.mrb[0].mxu0
    %v658 = vadd.f32 %v187, %v657
    %v659 = vpop.f32.mrb[0].mxu0
    %660 = vmatprep.mubr.f32.mxu0 0.0
    %661 = vmatmul.mubr.f32.gmra.mrb[0].mxu0 %v317
    %v662 = vpop.f32.mrb[0].mxu0
    %v663 = vadd.f32 %v187, %v662
    %v664 = vpop.f32.mrb[0].mxu0
    %665 = vmatprep.mubr.f32.mxu0 0.0
    %666 = vmatmul.mubr.f32.gmra.mrb[0].mxu0 %v320
    %v667 = vpop.f32.mrb[0].mxu0
    %v668 = vadd.f32 %v187, %v667
    %v669 = vpop.f32.mrb[0].mxu0
    %670 = vmatprep.mubr.f32.mxu0 0.0
    %671 = vmatmul.mubr.f32.gmra.mrb[0].mxu0 %v323
    %v672 = vpop.f32.mrb[0].mxu0
    %v673 = vadd.f32 %v187, %v672
    %v674 = vpop.f32.mrb[0].mxu0
    %675 = vmatprep.mubr.f32.mxu0 0.0
    %676 = vmatmul.mubr.f32.gmra.mrb[0].mxu0 %v326
    %v677 = vpop.f32.mrb[0].mxu0
    %v678 = vadd.f32 %v187, %v677
    %v679 = vpop.f32.mrb[0].mxu0
    %680 = vmatprep.mubr.f32.mxu0 0.0
    %681 = vmatmul.mubr.f32.gmra.mrb[0].mxu0 %v329
    %v682 = vpop.f32.mrb[0].mxu0
    %v683 = vadd.f32 %v187, %v682
    %v684 = vpop.f32.mrb[0].mxu0
    %685 = vmatprep.mubr.f32.mxu0 0.0
    %686 = vmatmul.mubr.f32.gmra.mrb[0].mxu0 %v332
    %v687 = vpop.f32.mrb[0].mxu0
    %v688 = vadd.f32 %v187, %v687
    %v689 = vpop.f32.mrb[0].mxu0
    %690 = vmatprep.mubr.f32.mxu0 0.0
    %691 = vmatmul.mubr.f32.gmra.mrb[0].mxu0 %v335
    %v692 = vpop.f32.mrb[0].mxu0
    %v693 = vadd.f32 %v187, %v692
    %v694 = vpop.f32.mrb[0].mxu0
    %695 = vmatprep.mubr.f32.mxu0 0.0
    %696 = vmatmul.mubr.f32.gmra.mrb[0].mxu0 %v338
    %v697 = vpop.f32.mrb[0].mxu0
    %v698 = vadd.f32 %v187, %v697
    %v699 = vpop.f32.mrb[0].mxu0
    %700 = vmatprep.mubr.f32.mxu0 0.0
    %701 = vmatmul.mubr.f32.gmra.mrb[0].mxu0 %v341
    %v702 = vpop.f32.mrb[0].mxu0
    %v703 = vadd.f32 %v187, %v702
    %v704 = vpop.f32.mrb[0].mxu0
    %705 = vmatprep.mubr.f32.mxu0 0.0
    %706 = vmatmul.mubr.f32.gmra.mrb[0].mxu0 %v344
    %v707 = vpop.f32.mrb[0].mxu0
    %v708 = vadd.f32 %v187, %v707
    %v709 = vpop.f32.mrb[0].mxu0
    %710 = vmatprep.mubr.f32.mxu0 0.0
    %711 = vmatmul.mubr.f32.gmra.mrb[0].mxu0 %v347
    %v712 = vpop.f32.mrb[0].mxu0
    %v713 = vadd.f32 %v187, %v712
    %v714 = vpop.f32.mrb[0].mxu0
    %715 = vmatprep.mubr.f32.mxu0 0.0
    %716 = vmatmul.mubr.f32.gmra.mrb[0].mxu0 %v350
    %v717 = vpop.f32.mrb[0].mxu0
    %v718 = vadd.f32 %v187, %v717
    %v719 = vpop.f32.mrb[0].mxu0
    %720 = vmatprep.mubr.f32.mxu0 0.0
    %721 = vmatmul.mubr.f32.gmra.mrb[0].mxu0 %v353
    %v722 = vpop.f32.mrb[0].mxu0
    %v723 = vadd.f32 %v187, %v722
    %v724 = vpop.f32.mrb[0].mxu0
    %725 = vmatprep.mubr.f32.mxu0 0.0
    %726 = vmatmul.mubr.f32.gmra.mrb[0].mxu0 %v356
    %v727 = vpop.f32.mrb[0].mxu0
    %v728 = vadd.f32 %v187, %v727
    %v729 = vpop.f32.mrb[0].mxu0
    %730 = vmatprep.mubr.f32.mxu0 0.0
    %731 = vmatmul.mubr.f32.gmra.mrb[0].mxu0 %v359
    %v732 = vpop.f32.mrb[0].mxu0
    %v733 = vadd.f32 %v187, %v732
    %v734 = vpop.f32.mrb[0].mxu0
    %735 = vmatprep.mubr.f32.mxu0 0.0
    %736 = vmatmul.mubr.f32.gmra.mrb[0].mxu0 %v362
    %v737 = vpop.f32.mrb[0].mxu0
    %v738 = vadd.f32 %v187, %v737
    %v739 = vpop.f32.mrb[0].mxu0
    %740 = vmatprep.mubr.f32.mxu0 0.0
    %741 = vmatmul.mubr.f32.gmra.mrb[0].mxu0 %v365
    %v742 = vpop.f32.mrb[0].mxu0
    %v743 = vadd.f32 %v187, %v742
    %v744 = vpop.f32.mrb[0].mxu0
    %745 = vmatprep.mubr.f32.mxu0 0.0
    %746 = vmatmul.mubr.f32.gmra.mrb[0].mxu0 %v368
    %v747 = vpop.f32.mrb[0].mxu0
    %v748 = vadd.f32 %v187, %v747
    %v749 = vpop.f32.mrb[0].mxu0
    %750 = vmatprep.mubr.f32.mxu0 0.0
    %751 = vmatmul.mubr.f32.gmra.mrb[0].mxu0 %v371
    %v752 = vpop.f32.mrb[0].mxu0
    %v753 = vadd.f32 %v187, %v752
    %v754 = vpop.f32.mrb[0].mxu0
    %755 = vmatprep.mubr.f32.mxu0 0.0
    %756 = vmatmul.mubr.f32.gmra.mrb[0].mxu0 %v374
    %v757 = vpop.f32.mrb[0].mxu0
    %v758 = vadd.f32 %v187, %v757
    %v759 = vpop.f32.mrb[0].mxu0
    %760 = vmatprep.mubr.f32.mxu0 0.0
    %761 = vmatmul.mubr.f32.gmra.mrb[0].mxu0 %v377
    %v762 = vpop.f32.mrb[0].mxu0
    %v763 = vadd.f32 %v187, %v762
    %v764 = vpop.f32.mrb[0].mxu0
    %765 = vmatprep.mubr.f32.mxu0 0.0
    %766 = vmatmul.mubr.f32.gmra.mrb[0].mxu0 %v380
    %v767 = vpop.f32.mrb[0].mxu0
    %v768 = vadd.f32 %v187, %v767
    %v769 = vpop.f32.mrb[0].mxu0
    %770 = vdwg.mxu0
    %v771 = vmax.f32 %v453, 0.0
    %v772 = vmax.f32 %v458, 0.0
    %v773 = vmax.f32 %v463, 0.0
    %v774 = vmax.f32 %v468, 0.0
    %v775 = vmax.f32 %v473, 0.0
    %v776 = vmax.f32 %v478, 0.0
    %v777 = vmax.f32 %v483, 0.0
    %v778 = vmax.f32 %v488, 0.0
    %v779 = vmax.f32 %v493, 0.0
    %v780 = vmax.f32 %v498, 0.0
    %v781 = vmax.f32 %v503, 0.0
    %v782 = vmax.f32 %v508, 0.0
    %v783 = vmax.f32 %v513, 0.0
    %v784 = vmax.f32 %v518, 0.0
    %v785 = vmax.f32 %v523, 0.0
    %v786 = vmax.f32 %v528, 0.0
    %v787 = vmax.f32 %v533, 0.0
    %v788 = vmax.f32 %v538, 0.0
    %v789 = vmax.f32 %v543, 0.0
    %v790 = vmax.f32 %v548, 0.0
    %v791 = vmax.f32 %v553, 0.0
    %v792 = vmax.f32 %v558, 0.0
    %v793 = vmax.f32 %v563, 0.0
    %v794 = vmax.f32 %v568, 0.0
    %v795 = vmax.f32 %v573, 0.0
    %v796 = vmax.f32 %v578, 0.0
    %v797 = vmax.f32 %v583, 0.0
    %v798 = vmax.f32 %v588, 0.0
    %v799 = vmax.f32 %v593, 0.0
    %v800 = vmax.f32 %v598, 0.0
    %v801 = vmax.f32 %v603, 0.0
    %v802 = vmax.f32 %v608, 0.0
    %v803 = vmax.f32 %v613, 0.0
    %v804 = vmax.f32 %v618, 0.0
    %v805 = vmax.f32 %v623, 0.0
    %v806 = vmax.f32 %v628, 0.0
    %v807 = vmax.f32 %v633, 0.0
    %v808 = vmax.f32 %v638, 0.0
    %v809 = vmax.f32 %v643, 0.0
    %v810 = vmax.f32 %v648, 0.0
    %v811 = vmax.f32 %v653, 0.0
    %v812 = vmax.f32 %v658, 0.0
    %v813 = vmax.f32 %v663, 0.0
    %v814 = vmax.f32 %v668, 0.0
    %v815 = vmax.f32 %v673, 0.0
    %v816 = vmax.f32 %v678, 0.0
    %v817 = vmax.f32 %v683, 0.0
    %v818 = vmax.f32 %v688, 0.0
    %v819 = vmax.f32 %v693, 0.0
    %v820 = vmax.f32 %v698, 0.0
    %v821 = vmax.f32 %v703, 0.0
    %v822 = vmax.f32 %v708, 0.0
    %v823 = vmax.f32 %v713, 0.0
    %v824 = vmax.f32 %v718, 0.0
    %v825 = vmax.f32 %v723, 0.0
    %v826 = vmax.f32 %v728, 0.0
    %v827 = vmax.f32 %v733, 0.0
    %v828 = vmax.f32 %v738, 0.0
    %v829 = vmax.f32 %v743, 0.0
    %v830 = vmax.f32 %v748, 0.0
    %v831 = vmax.f32 %v753, 0.0
    %v832 = vmax.f32 %v758, 0.0
    %v833 = vmax.f32 %v763, 0.0
    %v834 = vmax.f32 %v768, 0.0
    %vm899 = vcmask 1040384
    %v900 = vrot.slane %v771, 7
    %v901 = vrot.slane %v772, 7
    %v902 = vsel %vm899, %v900, %v901
    %v903 = vrot.slane %v773, 7
    %v904 = vrot.slane %v774, 7
    %v905 = vsel %vm899, %v903, %v904
    %v906 = vrot.slane %v775, 7
    %v907 = vrot.slane %v776, 7
    %v908 = vsel %vm899, %v906, %v907
    %v909 = vrot.slane %v777, 7
    %v910 = vrot.slane %v778, 7
    %v911 = vsel %vm899, %v909, %v910
    %v912 = vrot.slane %v779, 7
    %v913 = vrot.slane %v780, 7
    %v914 = vsel %vm899, %v912, %v913
    %v915 = vrot.slane %v781, 7
    %v916 = vrot.slane %v782, 7
    %v917 = vsel %vm899, %v915, %v916
    %v918 = vrot.slane %v783, 7
    %v919 = vrot.slane %v784, 7
    %v920 = vsel %vm899, %v918, %v919
    %v921 = vrot.slane %v785, 7
    %v922 = vrot.slane %v786, 7
    %v923 = vsel %vm899, %v921, %v922
    %v924 = vrot.slane %v787, 7
    %v925 = vrot.slane %v788, 7
    %v926 = vsel %vm899, %v924, %v925
    %v927 = vrot.slane %v789, 7
    %v928 = vrot.slane %v790, 7
    %v929 = vsel %vm899, %v927, %v928
    %v930 = vrot.slane %v791, 7
    %v931 = vrot.slane %v792, 7
    %v932 = vsel %vm899, %v930, %v931
    %v933 = vrot.slane %v793, 7
    %v934 = vrot.slane %v794, 7
    %v935 = vsel %vm899, %v933, %v934
    %v936 = vrot.slane %v795, 7
    %v937 = vrot.slane %v796, 7
    %v938 = vsel %vm899, %v936, %v937
    %v939 = vrot.slane %v797, 7
    %v940 = vrot.slane %v798, 7
    %v941 = vsel %vm899, %v939, %v940
    %v942 = vrot.slane %v799, 7
    %v943 = vrot.slane %v800, 7
    %v944 = vsel %vm899, %v942, %v943
    %v945 = vrot.slane %v801, 7
    %v946 = vrot.slane %v802, 7
    %v947 = vsel %vm899, %v945, %v946
    %v948 = vrot.slane %v803, 7
    %v949 = vrot.slane %v804, 7
    %v950 = vsel %vm899, %v948, %v949
    %v951 = vrot.slane %v805, 7
    %v952 = vrot.slane %v806, 7
    %v953 = vsel %vm899, %v951, %v952
    %v954 = vrot.slane %v807, 7
    %v955 = vrot.slane %v808, 7
    %v956 = vsel %vm899, %v954, %v955
    %v957 = vrot.slane %v809, 7
    %v958 = vrot.slane %v810, 7
    %v959 = vsel %vm899, %v957, %v958
    %v960 = vrot.slane %v811, 7
    %v961 = vrot.slane %v812, 7
    %v962 = vsel %vm899, %v960, %v961
    %v963 = vrot.slane %v813, 7
    %v964 = vrot.slane %v814, 7
    %v965 = vsel %vm899, %v963, %v964
    %v966 = vrot.slane %v815, 7
    %v967 = vrot.slane %v816, 7
    %v968 = vsel %vm899, %v966, %v967
    %v969 = vrot.slane %v817, 7
    %v970 = vrot.slane %v818, 7
    %v971 = vsel %vm899, %v969, %v970
    %v972 = vrot.slane %v819, 7
    %v973 = vrot.slane %v820, 7
    %v974 = vsel %vm899, %v972, %v973
    %v975 = vrot.slane %v821, 7
    %v976 = vrot.slane %v822, 7
    %v977 = vsel %vm899, %v975, %v976
    %v978 = vrot.slane %v823, 7
    %v979 = vrot.slane %v824, 7
    %v980 = vsel %vm899, %v978, %v979
    %v981 = vrot.slane %v825, 7
    %v982 = vrot.slane %v826, 7
    %v983 = vsel %vm899, %v981, %v982
    %v984 = vrot.slane %v827, 7
    %v985 = vrot.slane %v828, 7
    %v986 = vsel %vm899, %v984, %v985
    %v987 = vrot.slane %v829, 7
    %v988 = vrot.slane %v830, 7
    %v989 = vsel %vm899, %v987, %v988
    %v990 = vrot.slane %v831, 7
    %v991 = vrot.slane %v832, 7
    %v992 = vsel %vm899, %v990, %v991
    %v993 = vrot.slane %v833, 7
    %v994 = vrot.slane %v834, 7
    %v995 = vsel %vm899, %v993, %v994
    %v1092 = vsel %vm899, 0.0, %v900
    %v1093 = vsel %vm899, 0.0, %v903
    %v1094 = vsel %vm899, 0.0, %v906
    %v1095 = vsel %vm899, 0.0, %v909
    %v1096 = vsel %vm899, 0.0, %v912
    %v1097 = vsel %vm899, 0.0, %v915
    %v1098 = vsel %vm899, 0.0, %v918
    %v1099 = vsel %vm899, 0.0, %v921
    %v1100 = vsel %vm899, 0.0, %v924
    %v1101 = vsel %vm899, 0.0, %v927
    %v1102 = vsel %vm899, 0.0, %v930
    %v1103 = vsel %vm899, 0.0, %v933
    %v1104 = vsel %vm899, 0.0, %v936
    %v1105 = vsel %vm899, 0.0, %v939
    %v1106 = vsel %vm899, 0.0, %v942
    %v1107 = vsel %vm899, 0.0, %v945
    %v1108 = vsel %vm899, 0.0, %v948
    %v1109 = vsel %vm899, 0.0, %v951
    %v1110 = vsel %vm899, 0.0, %v954
    %v1111 = vsel %vm899, 0.0, %v957
    %v1112 = vsel %vm899, 0.0, %v960
    %v1113 = vsel %vm899, 0.0, %v963
    %v1114 = vsel %vm899, 0.0, %v966
    %v1115 = vsel %vm899, 0.0, %v969
    %v1116 = vsel %vm899, 0.0, %v972
    %v1117 = vsel %vm899, 0.0, %v975
    %v1118 = vsel %vm899, 0.0, %v978
    %v1119 = vsel %vm899, 0.0, %v981
    %v1120 = vsel %vm899, 0.0, %v984
    %v1121 = vsel %vm899, 0.0, %v987
    %v1122 = vsel %vm899, 0.0, %v990
    %v1123 = vsel %vm899, 0.0, %v993
    %v1124 = vsel %vm899, %v901, 0.0
    %v1125 = vsel %vm899, %v904, 0.0
    %v1126 = vsel %vm899, %v907, 0.0
    %v1127 = vsel %vm899, %v910, 0.0
    %v1128 = vsel %vm899, %v913, 0.0
    %v1129 = vsel %vm899, %v916, 0.0
    %v1130 = vsel %vm899, %v919, 0.0
    %v1131 = vsel %vm899, %v922, 0.0
    %v1132 = vsel %vm899, %v925, 0.0
    %v1133 = vsel %vm899, %v928, 0.0
    %v1134 = vsel %vm899, %v931, 0.0
    %v1135 = vsel %vm899, %v934, 0.0
    %v1136 = vsel %vm899, %v937, 0.0
    %v1137 = vsel %vm899, %v940, 0.0
    %v1138 = vsel %vm899, %v943, 0.0
    %v1139 = vsel %vm899, %v946, 0.0
    %v1140 = vsel %vm899, %v949, 0.0
    %v1141 = vsel %vm899, %v952, 0.0
    %v1142 = vsel %vm899, %v955, 0.0
    %v1143 = vsel %vm899, %v958, 0.0
    %v1144 = vsel %vm899, %v961, 0.0
    %v1145 = vsel %vm899, %v964, 0.0
    %v1146 = vsel %vm899, %v967, 0.0
    %v1147 = vsel %vm899, %v970, 0.0
    %v1148 = vsel %vm899, %v973, 0.0
    %v1149 = vsel %vm899, %v976, 0.0
    %v1150 = vsel %vm899, %v979, 0.0
    %v1151 = vsel %vm899, %v982, 0.0
    %v1152 = vsel %vm899, %v985, 0.0
    %v1153 = vsel %vm899, %v988, 0.0
    %v1154 = vsel %vm899, %v991, 0.0
    %v1155 = vsel %vm899, %v994, 0.0
    %vm1156 = vcmask 523264
    %1157 = vst.msk [vmem:[#allocation2] sm:$0xff] %vm1156, 0.0
    %1158 = vst.msk [vmem:[#allocation2 + $0x8] sm:$0xff] %vm1156, 0.0
    %vm1159 = vcmask 517120
    %1160 = vst.msk [vmem:[#allocation2 + $0x10] sm:$0x3] %vm1159, 0.0
    %1161 = vst.msk [vmem:[#allocation2 + $0x18] sm:$0xff] %vm1156, %v1092
    %1162 = vst.msk [vmem:[#allocation2 + $0x20] sm:$0xff] %vm1156, %v902
    %1163 = vst.msk [vmem:[#allocation2 + $0x28] sm:$0x3] %vm1159, %v1124
    %1164 = vst.msk [vmem:[#allocation2 + $0x30] sm:$0xff] %vm1156, %v1093
    %1165 = vst.msk [vmem:[#allocation2 + $0x38] sm:$0xff] %vm1156, %v905
    %1166 = vst.msk [vmem:[#allocation2 + $0x40] sm:$0x3] %vm1159, %v1125
    %1167 = vst.msk [vmem:[#allocation2 + $0x48] sm:$0xff] %vm1156, %v1094
    %1168 = vst.msk [vmem:[#allocation2 + $0x50] sm:$0xff] %vm1156, %v908
    %1169 = vst.msk [vmem:[#allocation2 + $0x58] sm:$0x3] %vm1159, %v1126
    %1170 = vst.msk [vmem:[#allocation2 + $0x60] sm:$0xff] %vm1156, %v1095
    %1171 = vst.msk [vmem:[#allocation2 + $0x68] sm:$0xff] %vm1156, %v911
    %1172 = vst.msk [vmem:[#allocation2 + $0x70] sm:$0x3] %vm1159, %v1127
    %1173 = vst.msk [vmem:[#allocation2 + $0x78] sm:$0xff] %vm1156, %v1096
    %1174 = vst.msk [vmem:[#allocation2 + $0x80] sm:$0xff] %vm1156, %v914
    %1175 = vst.msk [vmem:[#allocation2 + $0x88] sm:$0x3] %vm1159, %v1128
    %1176 = vst.msk [vmem:[#allocation2 + $0x90] sm:$0xff] %vm1156, %v1097
    %1177 = vst.msk [vmem:[#allocation2 + $0x98] sm:$0xff] %vm1156, %v917
    %1178 = vst.msk [vmem:[#allocation2 + $0xa0] sm:$0x3] %vm1159, %v1129
    %1179 = vst.msk [vmem:[#allocation2 + $0xa8] sm:$0xff] %vm1156, %v1098
    %1180 = vst.msk [vmem:[#allocation2 + $0xb0] sm:$0xff] %vm1156, %v920
    %1181 = vst.msk [vmem:[#allocation2 + $0xb8] sm:$0x3] %vm1159, %v1130
    %1182 = vst.msk [vmem:[#allocation2 + $0xc0] sm:$0xff] %vm1156, %v1099
    %1183 = vst.msk [vmem:[#allocation2 + $0xc8] sm:$0xff] %vm1156, %v923
    %1184 = vst.msk [vmem:[#allocation2 + $0xd0] sm:$0x3] %vm1159, %v1131
    %1185 = vst.msk [vmem:[#allocation2 + $0xd8] sm:$0xff] %vm1156, %v1100
    %1186 = vst.msk [vmem:[#allocation2 + $0xe0] sm:$0xff] %vm1156, %v926
    %1187 = vst.msk [vmem:[#allocation2 + $0xe8] sm:$0x3] %vm1159, %v1132
    %1188 = vst.msk [vmem:[#allocation2 + $0xf0] sm:$0xff] %vm1156, %v1101
    %1189 = vst.msk [vmem:[#allocation2 + $0xf8] sm:$0xff] %vm1156, %v929
    %1190 = vst.msk [vmem:[#allocation2 + $0x100] sm:$0x3] %vm1159, %v1133
    %1191 = vst.msk [vmem:[#allocation2 + $0x108] sm:$0xff] %vm1156, %v1102
    %1192 = vst.msk [vmem:[#allocation2 + $0x110] sm:$0xff] %vm1156, %v932
    %1193 = vst.msk [vmem:[#allocation2 + $0x118] sm:$0x3] %vm1159, %v1134
    %1194 = vst.msk [vmem:[#allocation2 + $0x120] sm:$0xff] %vm1156, %v1103
    %1195 = vst.msk [vmem:[#allocation2 + $0x128] sm:$0xff] %vm1156, %v935
    %1196 = vst.msk [vmem:[#allocation2 + $0x130] sm:$0x3] %vm1159, %v1135
    %1197 = vst.msk [vmem:[#allocation2 + $0x138] sm:$0xff] %vm1156, %v1104
    %1198 = vst.msk [vmem:[#allocation2 + $0x140] sm:$0xff] %vm1156, %v938
    %1199 = vst.msk [vmem:[#allocation2 + $0x148] sm:$0x3] %vm1159, %v1136
    %1200 = vst.msk [vmem:[#allocation2 + $0x150] sm:$0xff] %vm1156, %v1105
    %1201 = vst.msk [vmem:[#allocation2 + $0x158] sm:$0xff] %vm1156, %v941
    %1202 = vst.msk [vmem:[#allocation2 + $0x160] sm:$0x3] %vm1159, %v1137
    %1203 = vst.msk [vmem:[#allocation2 + $0x168] sm:$0xff] %vm1156, %v1106
    %1204 = vst.msk [vmem:[#allocation2 + $0x170] sm:$0xff] %vm1156, %v944
    %1205 = vst.msk [vmem:[#allocation2 + $0x178] sm:$0x3] %vm1159, %v1138
    %1206 = vst.msk [vmem:[#allocation2 + $0x180] sm:$0xff] %vm1156, %v1107
    %1207 = vst.msk [vmem:[#allocation2 + $0x188] sm:$0xff] %vm1156, %v947
    %1208 = vst.msk [vmem:[#allocation2 + $0x190] sm:$0x3] %vm1159, %v1139
    %1209 = vst.msk [vmem:[#allocation2 + $0x198] sm:$0xff] %vm1156, 0.0
    %1210 = vst.msk [vmem:[#allocation2 + $0x1a0] sm:$0xff] %vm1156, 0.0
    %1211 = vst.msk [vmem:[#allocation2 + $0x1a8] sm:$0x3] %vm1159, 0.0
    %1212 = vst.msk [vmem:[#allocation2 + $0x1b0] sm:$0xff] %vm1156, 0.0
    %1213 = vst.msk [vmem:[#allocation2 + $0x1b8] sm:$0xff] %vm1156, 0.0
    %1214 = vst.msk [vmem:[#allocation2 + $0x1c0] sm:$0x3] %vm1159, 0.0
    %1215 = vst.msk [vmem:[#allocation2 + $0x1c8] sm:$0xff] %vm1156, %v1108
    %1216 = vst.msk [vmem:[#allocation2 + $0x1d0] sm:$0xff] %vm1156, %v950
    %1217 = vst.msk [vmem:[#allocation2 + $0x1d8] sm:$0x3] %vm1159, %v1140
    %1218 = vst.msk [vmem:[#allocation2 + $0x1e0] sm:$0xff] %vm1156, %v1109
    %1219 = vst.msk [vmem:[#allocation2 + $0x1e8] sm:$0xff] %vm1156, %v953
    %1220 = vst.msk [vmem:[#allocation2 + $0x1f0] sm:$0x3] %vm1159, %v1141
    %1221 = vst.msk [vmem:[#allocation2 + $0x1f8] sm:$0xff] %vm1156, %v1110
    %1222 = vst.msk [vmem:[#allocation2 + $0x200] sm:$0xff] %vm1156, %v956
    %1223 = vst.msk [vmem:[#allocation2 + $0x208] sm:$0x3] %vm1159, %v1142
    %1224 = vst.msk [vmem:[#allocation2 + $0x210] sm:$0xff] %vm1156, %v1111
    %1225 = vst.msk [vmem:[#allocation2 + $0x218] sm:$0xff] %vm1156, %v959
    %1226 = vst.msk [vmem:[#allocation2 + $0x220] sm:$0x3] %vm1159, %v1143
    %1227 = vst.msk [vmem:[#allocation2 + $0x228] sm:$0xff] %vm1156, %v1112
    %1228 = vst.msk [vmem:[#allocation2 + $0x230] sm:$0xff] %vm1156, %v962
    %1229 = vst.msk [vmem:[#allocation2 + $0x238] sm:$0x3] %vm1159, %v1144
    %1230 = vst.msk [vmem:[#allocation2 + $0x240] sm:$0xff] %vm1156, %v1113
    %1231 = vst.msk [vmem:[#allocation2 + $0x248] sm:$0xff] %vm1156, %v965
    %1232 = vst.msk [vmem:[#allocation2 + $0x250] sm:$0x3] %vm1159, %v1145
    %1233 = vst.msk [vmem:[#allocation2 + $0x258] sm:$0xff] %vm1156, %v1114
    %1234 = vst.msk [vmem:[#allocation2 + $0x260] sm:$0xff] %vm1156, %v968
    %1235 = vst.msk [vmem:[#allocation2 + $0x268] sm:$0x3] %vm1159, %v1146
    %1236 = vst.msk [vmem:[#allocation2 + $0x270] sm:$0xff] %vm1156, %v1115
    %1237 = vst.msk [vmem:[#allocation2 + $0x278] sm:$0xff] %vm1156, %v971
    %1238 = vst.msk [vmem:[#allocation2 + $0x280] sm:$0x3] %vm1159, %v1147
    %1239 = vst.msk [vmem:[#allocation2 + $0x288] sm:$0xff] %vm1156, %v1116
    %1240 = vst.msk [vmem:[#allocation2 + $0x290] sm:$0xff] %vm1156, %v974
    %1241 = vst.msk [vmem:[#allocation2 + $0x298] sm:$0x3] %vm1159, %v1148
    %1242 = vst.msk [vmem:[#allocation2 + $0x2a0] sm:$0xff] %vm1156, %v1117
    %1243 = vst.msk [vmem:[#allocation2 + $0x2a8] sm:$0xff] %vm1156, %v977
    %1244 = vst.msk [vmem:[#allocation2 + $0x2b0] sm:$0x3] %vm1159, %v1149
    %1245 = vst.msk [vmem:[#allocation2 + $0x2b8] sm:$0xff] %vm1156, %v1118
    %1246 = vst.msk [vmem:[#allocation2 + $0x2c0] sm:$0xff] %vm1156, %v980
    %1247 = vst.msk [vmem:[#allocation2 + $0x2c8] sm:$0x3] %vm1159, %v1150
    %1248 = vst.msk [vmem:[#allocation2 + $0x2d0] sm:$0xff] %vm1156, %v1119
    %1249 = vst.msk [vmem:[#allocation2 + $0x2d8] sm:$0xff] %vm1156, %v983
    %1250 = vst.msk [vmem:[#allocation2 + $0x2e0] sm:$0x3] %vm1159, %v1151
    %1251 = vst.msk [vmem:[#allocation2 + $0x2e8] sm:$0xff] %vm1156, %v1120
    %1252 = vst.msk [vmem:[#allocation2 + $0x2f0] sm:$0xff] %vm1156, %v986
    %1253 = vst.msk [vmem:[#allocation2 + $0x2f8] sm:$0x3] %vm1159, %v1152
    %1254 = vst.msk [vmem:[#allocation2 + $0x300] sm:$0xff] %vm1156, %v1121
    %1255 = vst.msk [vmem:[#allocation2 + $0x308] sm:$0xff] %vm1156, %v989
    %1256 = vst.msk [vmem:[#allocation2 + $0x310] sm:$0x3] %vm1159, %v1153
    %1257 = vst.msk [vmem:[#allocation2 + $0x318] sm:$0xff] %vm1156, %v1122
    %1258 = vst.msk [vmem:[#allocation2 + $0x320] sm:$0xff] %vm1156, %v992
    %1259 = vst.msk [vmem:[#allocation2 + $0x328] sm:$0x3] %vm1159, %v1154
    %1260 = vst.msk [vmem:[#allocation2 + $0x330] sm:$0xff] %vm1156, %v1123
    %1261 = vst.msk [vmem:[#allocation2 + $0x338] sm:$0xff] %vm1156, %v995
    %1262 = vst.msk [vmem:[#allocation2 + $0x340] sm:$0x3] %vm1159, %v1155
    %1263 = vst.msk [vmem:[#allocation2 + $0x348] sm:$0xff] %vm1156, 0.0
    %1264 = vst.msk [vmem:[#allocation2 + $0x350] sm:$0xff] %vm1156, 0.0
    %1265 = vst.msk [vmem:[#allocation2 + $0x358] sm:$0x3] %vm1159, 0.0
    %v1266 = vld [vmem:[#allocation2] sm:$0xff]
    %v1267 = vld [vmem:[#allocation2 + $0x8] sm:$0xff]
    %v1268 = vld [vmem:[#allocation2 + $0x18] sm:$0xff]
    %v1269 = vld [vmem:[#allocation2 + $0x20] sm:$0xff]
    %v1270 = vld [vmem:[#allocation2 + $0x30] sm:$0xff]
    %v1271 = vld [vmem:[#allocation2 + $0x38] sm:$0xff]
    %v1272 = vld [vmem:[#allocation2 + $0x48] sm:$0xff]
    %v1273 = vld [vmem:[#allocation2 + $0x50] sm:$0xff]
    %v1274 = vld [vmem:[#allocation2 + $0x60] sm:$0xff]
    %v1275 = vld [vmem:[#allocation2 + $0x68] sm:$0xff]
    %v1276 = vld [vmem:[#allocation2 + $0x78] sm:$0xff]
    %v1277 = vld [vmem:[#allocation2 + $0x80] sm:$0xff]
    %v1278 = vld [vmem:[#allocation2 + $0x90] sm:$0xff]
    %v1279 = vld [vmem:[#allocation2 + $0x98] sm:$0xff]
    %v1280 = vld [vmem:[#allocation2 + $0xa8] sm:$0xff]
    %v1281 = vld [vmem:[#allocation2 + $0xb0] sm:$0xff]
    %v1282 = vld [vmem:[#allocation2 + $0xc0] sm:$0xff]
    %v1283 = vld [vmem:[#allocation2 + $0xc8] sm:$0xff]
    %v1284 = vld [vmem:[#allocation2 + $0xd8] sm:$0xff]
    %v1285 = vld [vmem:[#allocation2 + $0xe0] sm:$0xff]
    %v1286 = vld [vmem:[#allocation2 + $0xf0] sm:$0xff]
    %v1287 = vld [vmem:[#allocation2 + $0xf8] sm:$0xff]
    %v1288 = vld [vmem:[#allocation2 + $0x108] sm:$0xff]
    %v1289 = vld [vmem:[#allocation2 + $0x110] sm:$0xff]
    %v1290 = vld [vmem:[#allocation2 + $0x120] sm:$0xff]
    %v1291 = vld [vmem:[#allocation2 + $0x128] sm:$0xff]
    %v1292 = vld [vmem:[#allocation2 + $0x138] sm:$0xff]
    %v1293 = vld [vmem:[#allocation2 + $0x140] sm:$0xff]
    %v1294 = vld [vmem:[#allocation2 + $0x150] sm:$0xff]
    %v1295 = vld [vmem:[#allocation2 + $0x158] sm:$0xff]
    %v1296 = vld [vmem:[#allocation2 + $0x168] sm:$0xff]
    %v1297 = vld [vmem:[#allocation2 + $0x170] sm:$0xff]
    %v1298 = vld [vmem:[#allocation2 + $0x1b0] sm:$0xff]
    %v1299 = vld [vmem:[#allocation2 + $0x1b8] sm:$0xff]
    %v1300 = vld [vmem:[#allocation2 + $0x1c8] sm:$0xff]
    %v1301 = vld [vmem:[#allocation2 + $0x1d0] sm:$0xff]
    %v1302 = vld [vmem:[#allocation2 + $0x1e0] sm:$0xff]
    %v1303 = vld [vmem:[#allocation2 + $0x1e8] sm:$0xff]
    %v1304 = vld [vmem:[#allocation2 + $0x1f8] sm:$0xff]
    %v1305 = vld [vmem:[#allocation2 + $0x200] sm:$0xff]
    %v1306 = vld [vmem:[#allocation2 + $0x210] sm:$0xff]
    %v1307 = vld [vmem:[#allocation2 + $0x218] sm:$0xff]
    %v1308 = vld [vmem:[#allocation2 + $0x228] sm:$0xff]
    %v1309 = vld [vmem:[#allocation2 + $0x230] sm:$0xff]
    %v1310 = vld [vmem:[#allocation2 + $0x240] sm:$0xff]
    %v1311 = vld [vmem:[#allocation2 + $0x248] sm:$0xff]
    %v1312 = vld [vmem:[#allocation2 + $0x258] sm:$0xff]
    %v1313 = vld [vmem:[#allocation2 + $0x260] sm:$0xff]
    %v1314 = vld [vmem:[#allocation2 + $0x270] sm:$0xff]
    %v1315 = vld [vmem:[#allocation2 + $0x278] sm:$0xff]
    %v1316 = vld [vmem:[#allocation2 + $0x288] sm:$0xff]
    %v1317 = vld [vmem:[#allocation2 + $0x290] sm:$0xff]
    %v1318 = vld [vmem:[#allocation2 + $0x2a0] sm:$0xff]
    %v1319 = vld [vmem:[#allocation2 + $0x2a8] sm:$0xff]
    %v1320 = vld [vmem:[#allocation2 + $0x2b8] sm:$0xff]
    %v1321 = vld [vmem:[#allocation2 + $0x2c0] sm:$0xff]
    %v1322 = vld [vmem:[#allocation2 + $0x2d0] sm:$0xff]
    %v1323 = vld [vmem:[#allocation2 + $0x2d8] sm:$0xff]
    %v1324 = vld [vmem:[#allocation2 + $0x2e8] sm:$0xff]
    %v1325 = vld [vmem:[#allocation2 + $0x2f0] sm:$0xff]
    %v1326 = vld [vmem:[#allocation2 + $0x300] sm:$0xff]
    %v1327 = vld [vmem:[#allocation2 + $0x308] sm:$0xff]
    %v1328 = vld [vmem:[#allocation2 + $0x318] sm:$0xff]
    %v1329 = vld [vmem:[#allocation2 + $0x320] sm:$0xff]
    %v1330 = vld [vmem:[#allocation2 + $0x1] sm:$0xff]
    %v1331 = vld [vmem:[#allocation2 + $0x9] sm:$0xff]
    %v1332 = vld [vmem:[#allocation2 + $0x19] sm:$0xff]
    %v1333 = vld [vmem:[#allocation2 + $0x21] sm:$0xff]
    %v1334 = vld [vmem:[#allocation2 + $0x31] sm:$0xff]
    %v1335 = vld [vmem:[#allocation2 + $0x39] sm:$0xff]
    %v1336 = vld [vmem:[#allocation2 + $0x49] sm:$0xff]
    %v1337 = vld [vmem:[#allocation2 + $0x51] sm:$0xff]
    %v1338 = vld [vmem:[#allocation2 + $0x61] sm:$0xff]
    %v1339 = vld [vmem:[#allocation2 + $0x69] sm:$0xff]
    %v1340 = vld [vmem:[#allocation2 + $0x79] sm:$0xff]
    %v1341 = vld [vmem:[#allocation2 + $0x81] sm:$0xff]
    %v1342 = vld [vmem:[#allocation2 + $0x91] sm:$0xff]
    %v1343 = vld [vmem:[#allocation2 + $0x99] sm:$0xff]
    %v1344 = vld [vmem:[#allocation2 + $0xa9] sm:$0xff]
    %v1345 = vld [vmem:[#allocation2 + $0xb1] sm:$0xff]
    %v1346 = vld [vmem:[#allocation2 + $0xc1] sm:$0xff]
    %v1347 = vld [vmem:[#allocation2 + $0xc9] sm:$0xff]
    %v1348 = vld [vmem:[#allocation2 + $0xd9] sm:$0xff]
    %v1349 = vld [vmem:[#allocation2 + $0xe1] sm:$0xff]
    %v1350 = vld [vmem:[#allocation2 + $0xf1] sm:$0xff]
    %v1351 = vld [vmem:[#allocation2 + $0xf9] sm:$0xff]
    %v1352 = vld [vmem:[#allocation2 + $0x109] sm:$0xff]
    %v1353 = vld [vmem:[#allocation2 + $0x111] sm:$0xff]
    %v1354 = vld [vmem:[#allocation2 + $0x121] sm:$0xff]
    %v1355 = vld [vmem:[#allocation2 + $0x129] sm:$0xff]
    %v1356 = vld [vmem:[#allocation2 + $0x139] sm:$0xff]
    %v1357 = vld [vmem:[#allocation2 + $0x141] sm:$0xff]
    %v1358 = vld [vmem:[#allocation2 + $0x151] sm:$0xff]
    %v1359 = vld [vmem:[#allocation2 + $0x159] sm:$0xff]
    %v1360 = vld [vmem:[#allocation2 + $0x169] sm:$0xff]
    %v1361 = vld [vmem:[#allocation2 + $0x171] sm:$0xff]
    %v1362 = vld [vmem:[#allocation2 + $0x1b1] sm:$0xff]
    %v1363 = vld [vmem:[#allocation2 + $0x1b9] sm:$0xff]
    %v1364 = vld [vmem:[#allocation2 + $0x1c9] sm:$0xff]
    %v1365 = vld [vmem:[#allocation2 + $0x1d1] sm:$0xff]
    %v1366 = vld [vmem:[#allocation2 + $0x1e1] sm:$0xff]
    %v1367 = vld [vmem:[#allocation2 + $0x1e9] sm:$0xff]
    %v1368 = vld [vmem:[#allocation2 + $0x1f9] sm:$0xff]
    %v1369 = vld [vmem:[#allocation2 + $0x201] sm:$0xff]
    %v1370 = vld [vmem:[#allocation2 + $0x211] sm:$0xff]
    %v1371 = vld [vmem:[#allocation2 + $0x219] sm:$0xff]
    %v1372 = vld [vmem:[#allocation2 + $0x229] sm:$0xff]
    %v1373 = vld [vmem:[#allocation2 + $0x231] sm:$0xff]
    %v1374 = vld [vmem:[#allocation2 + $0x241] sm:$0xff]
    %v1375 = vld [vmem:[#allocation2 + $0x249] sm:$0xff]
    %v1376 = vld [vmem:[#allocation2 + $0x259] sm:$0xff]
    %v1377 = vld [vmem:[#allocation2 + $0x261] sm:$0xff]
    %v1378 = vld [vmem:[#allocation2 + $0x271] sm:$0xff]
    %v1379 = vld [vmem:[#allocation2 + $0x279] sm:$0xff]
    %v1380 = vld [vmem:[#allocation2 + $0x289] sm:$0xff]
    %v1381 = vld [vmem:[#allocation2 + $0x291] sm:$0xff]
    %v1382 = vld [vmem:[#allocation2 + $0x2a1] sm:$0xff]
    %v1383 = vld [vmem:[#allocation2 + $0x2a9] sm:$0xff]
    %v1384 = vld [vmem:[#allocation2 + $0x2b9] sm:$0xff]
    %v1385 = vld [vmem:[#allocation2 + $0x2c1] sm:$0xff]
    %v1386 = vld [vmem:[#allocation2 + $0x2d1] sm:$0xff]
    %v1387 = vld [vmem:[#allocation2 + $0x2d9] sm:$0xff]
    %v1388 = vld [vmem:[#allocation2 + $0x2e9] sm:$0xff]
    %v1389 = vld [vmem:[#allocation2 + $0x2f1] sm:$0xff]
    %v1390 = vld [vmem:[#allocation2 + $0x301] sm:$0xff]
    %v1391 = vld [vmem:[#allocation2 + $0x309] sm:$0xff]
    %v1392 = vld [vmem:[#allocation2 + $0x319] sm:$0xff]
    %v1393 = vld [vmem:[#allocation2 + $0x321] sm:$0xff]
    %v1394 = vld [vmem:[#allocation2 + $0x2] sm:$0xff]
    %v1395 = vld [vmem:[#allocation2 + $0xa] sm:$0xff]
    %v1396 = vld [vmem:[#allocation2 + $0x1a] sm:$0xff]
    %v1397 = vld [vmem:[#allocation2 + $0x22] sm:$0xff]
    %v1398 = vld [vmem:[#allocation2 + $0x32] sm:$0xff]
    %v1399 = vld [vmem:[#allocation2 + $0x3a] sm:$0xff]
    %v1400 = vld [vmem:[#allocation2 + $0x4a] sm:$0xff]
    %v1401 = vld [vmem:[#allocation2 + $0x52] sm:$0xff]
    %v1402 = vld [vmem:[#allocation2 + $0x62] sm:$0xff]
    %v1403 = vld [vmem:[#allocation2 + $0x6a] sm:$0xff]
    %v1404 = vld [vmem:[#allocation2 + $0x7a] sm:$0xff]
    %v1405 = vld [vmem:[#allocation2 + $0x82] sm:$0xff]
    %v1406 = vld [vmem:[#allocation2 + $0x92] sm:$0xff]
    %v1407 = vld [vmem:[#allocation2 + $0x9a] sm:$0xff]
    %v1408 = vld [vmem:[#allocation2 + $0xaa] sm:$0xff]
    %v1409 = vld [vmem:[#allocation2 + $0xb2] sm:$0xff]
    %v1410 = vld [vmem:[#allocation2 + $0xc2] sm:$0xff]
    %v1411 = vld [vmem:[#allocation2 + $0xca] sm:$0xff]
    %v1412 = vld [vmem:[#allocation2 + $0xda] sm:$0xff]
    %v1413 = vld [vmem:[#allocation2 + $0xe2] sm:$0xff]
    %v1414 = vld [vmem:[#allocation2 + $0xf2] sm:$0xff]
    %v1415 = vld [vmem:[#allocation2 + $0xfa] sm:$0xff]
    %v1416 = vld [vmem:[#allocation2 + $0x10a] sm:$0xff]
    %v1417 = vld [vmem:[#allocation2 + $0x112] sm:$0xff]
    %v1418 = vld [vmem:[#allocation2 + $0x122] sm:$0xff]
    %v1419 = vld [vmem:[#allocation2 + $0x12a] sm:$0xff]
    %v1420 = vld [vmem:[#allocation2 + $0x13a] sm:$0xff]
    %v1421 = vld [vmem:[#allocation2 + $0x142] sm:$0xff]
    %v1422 = vld [vmem:[#allocation2 + $0x152] sm:$0xff]
    %v1423 = vld [vmem:[#allocation2 + $0x15a] sm:$0xff]
    %v1424 = vld [vmem:[#allocation2 + $0x16a] sm:$0xff]
    %v1425 = vld [vmem:[#allocation2 + $0x172] sm:$0xff]
    %v1426 = vld [vmem:[#allocation2 + $0x1b2] sm:$0xff]
    %v1427 = vld [vmem:[#allocation2 + $0x1ba] sm:$0xff]
    %v1428 = vld [vmem:[#allocation2 + $0x1ca] sm:$0xff]
    %v1429 = vld [vmem:[#allocation2 + $0x1d2] sm:$0xff]
    %v1430 = vld [vmem:[#allocation2 + $0x1e2] sm:$0xff]
    %v1431 = vld [vmem:[#allocation2 + $0x1ea] sm:$0xff]
    %v1432 = vld [vmem:[#allocation2 + $0x1fa] sm:$0xff]
    %v1433 = vld [vmem:[#allocation2 + $0x202] sm:$0xff]
    %v1434 = vld [vmem:[#allocation2 + $0x212] sm:$0xff]
    %v1435 = vld [vmem:[#allocation2 + $0x21a] sm:$0xff]
    %v1436 = vld [vmem:[#allocation2 + $0x22a] sm:$0xff]
    %v1437 = vld [vmem:[#allocation2 + $0x232] sm:$0xff]
    %v1438 = vld [vmem:[#allocation2 + $0x242] sm:$0xff]
    %v1439 = vld [vmem:[#allocation2 + $0x24a] sm:$0xff]
    %v1440 = vld [vmem:[#allocation2 + $0x25a] sm:$0xff]
    %v1441 = vld [vmem:[#allocation2 + $0x262] sm:$0xff]
    %v1442 = vld [vmem:[#allocation2 + $0x272] sm:$0xff]
    %v1443 = vld [vmem:[#allocation2 + $0x27a] sm:$0xff]
    %v1444 = vld [vmem:[#allocation2 + $0x28a] sm:$0xff]
    %v1445 = vld [vmem:[#allocation2 + $0x292] sm:$0xff]
    %v1446 = vld [vmem:[#allocation2 + $0x2a2] sm:$0xff]
    %v1447 = vld [vmem:[#allocation2 + $0x2aa] sm:$0xff]
    %v1448 = vld [vmem:[#allocation2 + $0x2ba] sm:$0xff]
    %v1449 = vld [vmem:[#allocation2 + $0x2c2] sm:$0xff]
    %v1450 = vld [vmem:[#allocation2 + $0x2d2] sm:$0xff]
    %v1451 = vld [vmem:[#allocation2 + $0x2da] sm:$0xff]
    %v1452 = vld [vmem:[#allocation2 + $0x2ea] sm:$0xff]
    %v1453 = vld [vmem:[#allocation2 + $0x2f2] sm:$0xff]
    %v1454 = vld [vmem:[#allocation2 + $0x302] sm:$0xff]
    %v1455 = vld [vmem:[#allocation2 + $0x30a] sm:$0xff]
    %v1456 = vld [vmem:[#allocation2 + $0x31a] sm:$0xff]
    %v1457 = vld [vmem:[#allocation2 + $0x322] sm:$0xff]
    %1522 = vrot.lane.b32.xlu0 %v1330, 64
    %v1523 = vpop.permute.xlu0 %1522
    %1524 = vrot.lane.b32.xlu0 %v1331, 64
    %v1525 = vpop.permute.xlu0 %1524
    %1526 = vrot.lane.b32.xlu0 %v1332, 64
    %v1527 = vpop.permute.xlu0 %1526
    %1528 = vrot.lane.b32.xlu0 %v1333, 64
    %v1529 = vpop.permute.xlu0 %1528
    %1530 = vrot.lane.b32.xlu0 %v1334, 64
    %v1531 = vpop.permute.xlu0 %1530
    %1532 = vrot.lane.b32.xlu0 %v1335, 64
    %v1533 = vpop.permute.xlu0 %1532
    %1534 = vrot.lane.b32.xlu0 %v1336, 64
    %v1535 = vpop.permute.xlu0 %1534
    %1536 = vrot.lane.b32.xlu0 %v1337, 64
    %v1537 = vpop.permute.xlu0 %1536
    %1538 = vrot.lane.b32.xlu0 %v1338, 64
    %v1539 = vpop.permute.xlu0 %1538
    %1540 = vrot.lane.b32.xlu0 %v1339, 64
    %v1541 = vpop.permute.xlu0 %1540
    %1542 = vrot.lane.b32.xlu0 %v1340, 64
    %v1543 = vpop.permute.xlu0 %1542
    %1544 = vrot.lane.b32.xlu0 %v1341, 64
    %v1545 = vpop.permute.xlu0 %1544
    %1546 = vrot.lane.b32.xlu0 %v1342, 64
    %v1547 = vpop.permute.xlu0 %1546
    %1548 = vrot.lane.b32.xlu0 %v1343, 64
    %v1549 = vpop.permute.xlu0 %1548
    %1550 = vrot.lane.b32.xlu0 %v1344, 64
    %v1551 = vpop.permute.xlu0 %1550
    %1552 = vrot.lane.b32.xlu0 %v1345, 64
    %v1553 = vpop.permute.xlu0 %1552
    %1554 = vrot.lane.b32.xlu0 %v1346, 64
    %v1555 = vpop.permute.xlu0 %1554
    %1556 = vrot.lane.b32.xlu0 %v1347, 64
    %v1557 = vpop.permute.xlu0 %1556
    %1558 = vrot.lane.b32.xlu0 %v1348, 64
    %v1559 = vpop.permute.xlu0 %1558
    %1560 = vrot.lane.b32.xlu0 %v1349, 64
    %v1561 = vpop.permute.xlu0 %1560
    %1562 = vrot.lane.b32.xlu0 %v1350, 64
    %v1563 = vpop.permute.xlu0 %1562
    %1564 = vrot.lane.b32.xlu0 %v1351, 64
    %v1565 = vpop.permute.xlu0 %1564
    %1566 = vrot.lane.b32.xlu0 %v1352, 64
    %v1567 = vpop.permute.xlu0 %1566
    %1568 = vrot.lane.b32.xlu0 %v1353, 64
    %v1569 = vpop.permute.xlu0 %1568
    %1570 = vrot.lane.b32.xlu0 %v1354, 64
    %v1571 = vpop.permute.xlu0 %1570
    %1572 = vrot.lane.b32.xlu0 %v1355, 64
    %v1573 = vpop.permute.xlu0 %1572
    %1574 = vrot.lane.b32.xlu0 %v1356, 64
    %v1575 = vpop.permute.xlu0 %1574
    %1576 = vrot.lane.b32.xlu0 %v1357, 64
    %v1577 = vpop.permute.xlu0 %1576
    %1578 = vrot.lane.b32.xlu0 %v1358, 64
    %v1579 = vpop.permute.xlu0 %1578
    %1580 = vrot.lane.b32.xlu0 %v1359, 64
    %v1581 = vpop.permute.xlu0 %1580
    %1582 = vrot.lane.b32.xlu0 %v1360, 64
    %v1583 = vpop.permute.xlu0 %1582
    %1584 = vrot.lane.b32.xlu0 %v1361, 64
    %v1585 = vpop.permute.xlu0 %1584
    %1586 = vrot.lane.b32.xlu0 %v1362, 64
    %v1587 = vpop.permute.xlu0 %1586
    %1588 = vrot.lane.b32.xlu0 %v1363, 64
    %v1589 = vpop.permute.xlu0 %1588
    %1590 = vrot.lane.b32.xlu0 %v1364, 64
    %v1591 = vpop.permute.xlu0 %1590
    %1592 = vrot.lane.b32.xlu0 %v1365, 64
    %v1593 = vpop.permute.xlu0 %1592
    %1594 = vrot.lane.b32.xlu0 %v1366, 64
    %v1595 = vpop.permute.xlu0 %1594
    %1596 = vrot.lane.b32.xlu0 %v1367, 64
    %v1597 = vpop.permute.xlu0 %1596
    %1598 = vrot.lane.b32.xlu0 %v1368, 64
    %v1599 = vpop.permute.xlu0 %1598
    %1600 = vrot.lane.b32.xlu0 %v1369, 64
    %v1601 = vpop.permute.xlu0 %1600
    %1602 = vrot.lane.b32.xlu0 %v1370, 64
    %v1603 = vpop.permute.xlu0 %1602
    %1604 = vrot.lane.b32.xlu0 %v1371, 64
    %v1605 = vpop.permute.xlu0 %1604
    %1606 = vrot.lane.b32.xlu0 %v1372, 64
    %v1607 = vpop.permute.xlu0 %1606
    %1608 = vrot.lane.b32.xlu0 %v1373, 64
    %v1609 = vpop.permute.xlu0 %1608
    %1610 = vrot.lane.b32.xlu0 %v1374, 64
    %v1611 = vpop.permute.xlu0 %1610
    %1612 = vrot.lane.b32.xlu0 %v1375, 64
    %v1613 = vpop.permute.xlu0 %1612
    %1614 = vrot.lane.b32.xlu0 %v1376, 64
    %v1615 = vpop.permute.xlu0 %1614
    %1616 = vrot.lane.b32.xlu0 %v1377, 64
    %v1617 = vpop.permute.xlu0 %1616
    %1618 = vrot.lane.b32.xlu0 %v1378, 64
    %v1619 = vpop.permute.xlu0 %1618
    %1620 = vrot.lane.b32.xlu0 %v1379, 64
    %v1621 = vpop.permute.xlu0 %1620
    %1622 = vrot.lane.b32.xlu0 %v1380, 64
    %v1623 = vpop.permute.xlu0 %1622
    %1624 = vrot.lane.b32.xlu0 %v1381, 64
    %v1625 = vpop.permute.xlu0 %1624
    %1626 = vrot.lane.b32.xlu0 %v1382, 64
    %v1627 = vpop.permute.xlu0 %1626
    %1628 = vrot.lane.b32.xlu0 %v1383, 64
    %v1629 = vpop.permute.xlu0 %1628
    %1630 = vrot.lane.b32.xlu0 %v1384, 64
    %v1631 = vpop.permute.xlu0 %1630
    %1632 = vrot.lane.b32.xlu0 %v1385, 64
    %v1633 = vpop.permute.xlu0 %1632
    %1634 = vrot.lane.b32.xlu0 %v1386, 64
    %v1635 = vpop.permute.xlu0 %1634
    %1636 = vrot.lane.b32.xlu0 %v1387, 64
    %v1637 = vpop.permute.xlu0 %1636
    %1638 = vrot.lane.b32.xlu0 %v1388, 64
    %v1639 = vpop.permute.xlu0 %1638
    %1640 = vrot.lane.b32.xlu0 %v1389, 64
    %v1641 = vpop.permute.xlu0 %1640
    %1642 = vrot.lane.b32.xlu0 %v1390, 64
    %v1643 = vpop.permute.xlu0 %1642
    %1644 = vrot.lane.b32.xlu0 %v1391, 64
    %v1645 = vpop.permute.xlu0 %1644
    %1646 = vrot.lane.b32.xlu0 %v1392, 64
    %v1647 = vpop.permute.xlu0 %1646
    %1648 = vrot.lane.b32.xlu0 %v1393, 64
    %v1649 = vpop.permute.xlu0 %1648
    %v1714 = vsel %vm1156, %v1266, %v1523
    %v1715 = vsel %vm1156, %v1267, %v1525
    %v1716 = vsel %vm1156, %v1268, %v1527
    %v1717 = vsel %vm1156, %v1269, %v1529
    %v1718 = vsel %vm1156, %v1270, %v1531
    %v1719 = vsel %vm1156, %v1271, %v1533
    %v1720 = vsel %vm1156, %v1272, %v1535
    %v1721 = vsel %vm1156, %v1273, %v1537
    %v1722 = vsel %vm1156, %v1274, %v1539
    %v1723 = vsel %vm1156, %v1275, %v1541
    %v1724 = vsel %vm1156, %v1276, %v1543
    %v1725 = vsel %vm1156, %v1277, %v1545
    %v1726 = vsel %vm1156, %v1278, %v1547
    %v1727 = vsel %vm1156, %v1279, %v1549
    %v1728 = vsel %vm1156, %v1280, %v1551
    %v1729 = vsel %vm1156, %v1281, %v1553
    %v1730 = vsel %vm1156, %v1282, %v1555
    %v1731 = vsel %vm1156, %v1283, %v1557
    %v1732 = vsel %vm1156, %v1284, %v1559
    %v1733 = vsel %vm1156, %v1285, %v1561
    %v1734 = vsel %vm1156, %v1286, %v1563
    %v1735 = vsel %vm1156, %v1287, %v1565
    %v1736 = vsel %vm1156, %v1288, %v1567
    %v1737 = vsel %vm1156, %v1289, %v1569
    %v1738 = vsel %vm1156, %v1290, %v1571
    %v1739 = vsel %vm1156, %v1291, %v1573
    %v1740 = vsel %vm1156, %v1292, %v1575
    %v1741 = vsel %vm1156, %v1293, %v1577
    %v1742 = vsel %vm1156, %v1294, %v1579
    %v1743 = vsel %vm1156, %v1295, %v1581
    %v1744 = vsel %vm1156, %v1296, %v1583
    %v1745 = vsel %vm1156, %v1297, %v1585
    %v1746 = vsel %vm1156, %v1298, %v1587
    %v1747 = vsel %vm1156, %v1299, %v1589
    %v1748 = vsel %vm1156, %v1300, %v1591
    %v1749 = vsel %vm1156, %v1301, %v1593
    %v1750 = vsel %vm1156, %v1302, %v1595
    %v1751 = vsel %vm1156, %v1303, %v1597
    %v1752 = vsel %vm1156, %v1304, %v1599
    %v1753 = vsel %vm1156, %v1305, %v1601
    %v1754 = vsel %vm1156, %v1306, %v1603
    %v1755 = vsel %vm1156, %v1307, %v1605
    %v1756 = vsel %vm1156, %v1308, %v1607
    %v1757 = vsel %vm1156, %v1309, %v1609
    %v1758 = vsel %vm1156, %v1310, %v1611
    %v1759 = vsel %vm1156, %v1311, %v1613
    %v1760 = vsel %vm1156, %v1312, %v1615
    %v1761 = vsel %vm1156, %v1313, %v1617
    %v1762 = vsel %vm1156, %v1314, %v1619
    %v1763 = vsel %vm1156, %v1315, %v1621
    %v1764 = vsel %vm1156, %v1316, %v1623
    %v1765 = vsel %vm1156, %v1317, %v1625
    %v1766 = vsel %vm1156, %v1318, %v1627
    %v1767 = vsel %vm1156, %v1319, %v1629
    %v1768 = vsel %vm1156, %v1320, %v1631
    %v1769 = vsel %vm1156, %v1321, %v1633
    %v1770 = vsel %vm1156, %v1322, %v1635
    %v1771 = vsel %vm1156, %v1323, %v1637
    %v1772 = vsel %vm1156, %v1324, %v1639
    %v1773 = vsel %vm1156, %v1325, %v1641
    %v1774 = vsel %vm1156, %v1326, %v1643
    %v1775 = vsel %vm1156, %v1327, %v1645
    %v1776 = vsel %vm1156, %v1328, %v1647
    %v1777 = vsel %vm1156, %v1329, %v1649
    %v1778 = vld [vmem:[#allocation9] sm:$0xff]
    %v1779 = vld [vmem:[#allocation9 + $0x8] sm:$0xff]
    %v1780 = vld [vmem:[#allocation9 + $0x10] sm:$0xff]
    %v1781 = vld [vmem:[#allocation9 + $0x18] sm:$0xff]
    %v1782 = vld [vmem:[#allocation9 + $0x20] sm:$0xff]
    %v1783 = vld [vmem:[#allocation9 + $0x28] sm:$0xff]
    %v1784 = vld [vmem:[#allocation9 + $0x30] sm:$0xff]
    %v1785 = vld [vmem:[#allocation9 + $0x38] sm:$0xff]
    %v1786 = vld [vmem:[#allocation9 + $0x40] sm:$0xff]
    %v1787 = vld [vmem:[#allocation9 + $0x48] sm:$0xff]
    %v1788 = vld [vmem:[#allocation9 + $0x50] sm:$0xff]
    %v1789 = vld [vmem:[#allocation9 + $0x58] sm:$0xff]
    %v1790 = vld [vmem:[#allocation9 + $0x60] sm:$0xff]
    %v1791 = vld [vmem:[#allocation9 + $0x68] sm:$0xff]
    %v1792 = vld [vmem:[#allocation9 + $0x70] sm:$0xff]
    %v1793 = vld [vmem:[#allocation9 + $0x78] sm:$0xff]
    %v1794 = vld [vmem:[#allocation9 + $0x80] sm:$0xff]
    %v1795 = vld [vmem:[#allocation9 + $0x88] sm:$0xff]
    %v1796 = vld [vmem:[#allocation9 + $0x90] sm:$0xff]
    %v1797 = vld [vmem:[#allocation9 + $0x98] sm:$0xff]
    %v1798 = vld [vmem:[#allocation9 + $0xa0] sm:$0xff]
    %v1799 = vld [vmem:[#allocation9 + $0xa8] sm:$0xff]
    %v1800 = vld [vmem:[#allocation9 + $0xb0] sm:$0xff]
    %v1801 = vld [vmem:[#allocation9 + $0xb8] sm:$0xff]
    %s1802 = scalar_lea.vmem [#allocation2], 24
    %v1803 = vld [vmem:[%s1802] sm:$0xff]
    %v1804 = vld [vmem:[%s1802 + $0x8] sm:$0xff]
    %v1805 = vld [vmem:[%s1802 + $0x18] sm:$0xff]
    %v1806 = vld [vmem:[%s1802 + $0x20] sm:$0xff]
    %v1807 = vld [vmem:[%s1802 + $0x30] sm:$0xff]
    %v1808 = vld [vmem:[%s1802 + $0x38] sm:$0xff]
    %v1809 = vld [vmem:[%s1802 + $0x48] sm:$0xff]
    %v1810 = vld [vmem:[%s1802 + $0x50] sm:$0xff]
    %v1811 = vld [vmem:[%s1802 + $0x60] sm:$0xff]
    %v1812 = vld [vmem:[%s1802 + $0x68] sm:$0xff]
    %v1813 = vld [vmem:[%s1802 + $0x78] sm:$0xff]
    %v1814 = vld [vmem:[%s1802 + $0x80] sm:$0xff]
    %v1815 = vld [vmem:[%s1802 + $0x90] sm:$0xff]
    %v1816 = vld [vmem:[%s1802 + $0x98] sm:$0xff]
    %v1817 = vld [vmem:[%s1802 + $0xa8] sm:$0xff]
    %v1818 = vld [vmem:[%s1802 + $0xb0] sm:$0xff]
    %v1819 = vld [vmem:[%s1802 + $0xc0] sm:$0xff]
    %v1820 = vld [vmem:[%s1802 + $0xc8] sm:$0xff]
    %v1821 = vld [vmem:[%s1802 + $0xd8] sm:$0xff]
    %v1822 = vld [vmem:[%s1802 + $0xe0] sm:$0xff]
    %v1823 = vld [vmem:[%s1802 + $0xf0] sm:$0xff]
    %v1824 = vld [vmem:[%s1802 + $0xf8] sm:$0xff]
    %v1825 = vld [vmem:[%s1802 + $0x108] sm:$0xff]
    %v1826 = vld [vmem:[%s1802 + $0x110] sm:$0xff]
    %v1827 = vld [vmem:[%s1802 + $0x120] sm:$0xff]
    %v1828 = vld [vmem:[%s1802 + $0x128] sm:$0xff]
    %v1829 = vld [vmem:[%s1802 + $0x138] sm:$0xff]
    %v1830 = vld [vmem:[%s1802 + $0x140] sm:$0xff]
    %v1831 = vld [vmem:[%s1802 + $0x150] sm:$0xff]
    %v1832 = vld [vmem:[%s1802 + $0x158] sm:$0xff]
    %v1833 = vld [vmem:[%s1802 + $0x168] sm:$0xff]
    %v1834 = vld [vmem:[%s1802 + $0x170] sm:$0xff]
    %v1835 = vld [vmem:[%s1802 + $0x1b0] sm:$0xff]
    %v1836 = vld [vmem:[%s1802 + $0x1b8] sm:$0xff]
    %v1837 = vld [vmem:[%s1802 + $0x1c8] sm:$0xff]
    %v1838 = vld [vmem:[%s1802 + $0x1d0] sm:$0xff]
    %v1839 = vld [vmem:[%s1802 + $0x1e0] sm:$0xff]
    %v1840 = vld [vmem:[%s1802 + $0x1e8] sm:$0xff]
    %v1841 = vld [vmem:[%s1802 + $0x1f8] sm:$0xff]
    %v1842 = vld [vmem:[%s1802 + $0x200] sm:$0xff]
    %v1843 = vld [vmem:[%s1802 + $0x210] sm:$0xff]
    %v1844 = vld [vmem:[%s1802 + $0x218] sm:$0xff]
    %v1845 = vld [vmem:[%s1802 + $0x228] sm:$0xff]
    %v1846 = vld [vmem:[%s1802 + $0x230] sm:$0xff]
    %v1847 = vld [vmem:[%s1802 + $0x240] sm:$0xff]
    %v1848 = vld [vmem:[%s1802 + $0x248] sm:$0xff]
    %v1849 = vld [vmem:[%s1802 + $0x258] sm:$0xff]
    %v1850 = vld [vmem:[%s1802 + $0x260] sm:$0xff]
    %v1851 = vld [vmem:[%s1802 + $0x270] sm:$0xff]
    %v1852 = vld [vmem:[%s1802 + $0x278] sm:$0xff]
    %v1853 = vld [vmem:[%s1802 + $0x288] sm:$0xff]
    %v1854 = vld [vmem:[%s1802 + $0x290] sm:$0xff]
    %v1855 = vld [vmem:[%s1802 + $0x2a0] sm:$0xff]
    %v1856 = vld [vmem:[%s1802 + $0x2a8] sm:$0xff]
    %v1857 = vld [vmem:[%s1802 + $0x2b8] sm:$0xff]
    %v1858 = vld [vmem:[%s1802 + $0x2c0] sm:$0xff]
    %v1859 = vld [vmem:[%s1802 + $0x2d0] sm:$0xff]
    %v1860 = vld [vmem:[%s1802 + $0x2d8] sm:$0xff]
    %v1861 = vld [vmem:[%s1802 + $0x2e8] sm:$0xff]
    %v1862 = vld [vmem:[%s1802 + $0x2f0] sm:$0xff]
    %v1863 = vld [vmem:[%s1802 + $0x300] sm:$0xff]
    %v1864 = vld [vmem:[%s1802 + $0x308] sm:$0xff]
    %v1865 = vld [vmem:[%s1802 + $0x318] sm:$0xff]
    %v1866 = vld [vmem:[%s1802 + $0x320] sm:$0xff]
    %v1867 = vld [vmem:[%s1802 + $0x1] sm:$0xff]
    %v1868 = vld [vmem:[%s1802 + $0x9] sm:$0xff]
    %v1869 = vld [vmem:[%s1802 + $0x19] sm:$0xff]
    %v1870 = vld [vmem:[%s1802 + $0x21] sm:$0xff]
    %v1871 = vld [vmem:[%s1802 + $0x31] sm:$0xff]
    %v1872 = vld [vmem:[%s1802 + $0x39] sm:$0xff]
    %v1873 = vld [vmem:[%s1802 + $0x49] sm:$0xff]
    %v1874 = vld [vmem:[%s1802 + $0x51] sm:$0xff]
    %v1875 = vld [vmem:[%s1802 + $0x61] sm:$0xff]
    %v1876 = vld [vmem:[%s1802 + $0x69] sm:$0xff]
    %v1877 = vld [vmem:[%s1802 + $0x79] sm:$0xff]
    %v1878 = vld [vmem:[%s1802 + $0x81] sm:$0xff]
    %v1879 = vld [vmem:[%s1802 + $0x91] sm:$0xff]
    %v1880 = vld [vmem:[%s1802 + $0x99] sm:$0xff]
    %v1881 = vld [vmem:[%s1802 + $0xa9] sm:$0xff]
    %v1882 = vld [vmem:[%s1802 + $0xb1] sm:$0xff]
    %v1883 = vld [vmem:[%s1802 + $0xc1] sm:$0xff]
    %v1884 = vld [vmem:[%s1802 + $0xc9] sm:$0xff]
    %v1885 = vld [vmem:[%s1802 + $0xd9] sm:$0xff]
    %v1886 = vld [vmem:[%s1802 + $0xe1] sm:$0xff]
    %v1887 = vld [vmem:[%s1802 + $0xf1] sm:$0xff]
    %v1888 = vld [vmem:[%s1802 + $0xf9] sm:$0xff]
    %v1889 = vld [vmem:[%s1802 + $0x109] sm:$0xff]
    %v1890 = vld [vmem:[%s1802 + $0x111] sm:$0xff]
    %v1891 = vld [vmem:[%s1802 + $0x121] sm:$0xff]
    %v1892 = vld [vmem:[%s1802 + $0x129] sm:$0xff]
    %v1893 = vld [vmem:[%s1802 + $0x139] sm:$0xff]
    %v1894 = vld [vmem:[%s1802 + $0x141] sm:$0xff]
    %v1895 = vld [vmem:[%s1802 + $0x151] sm:$0xff]
    %v1896 = vld [vmem:[%s1802 + $0x159] sm:$0xff]
    %v1897 = vld [vmem:[%s1802 + $0x169] sm:$0xff]
    %v1898 = vld [vmem:[%s1802 + $0x171] sm:$0xff]
    %v1899 = vld [vmem:[%s1802 + $0x1b1] sm:$0xff]
    %v1900 = vld [vmem:[%s1802 + $0x1b9] sm:$0xff]
    %v1901 = vld [vmem:[%s1802 + $0x1c9] sm:$0xff]
    %v1902 = vld [vmem:[%s1802 + $0x1d1] sm:$0xff]
    %v1903 = vld [vmem:[%s1802 + $0x1e1] sm:$0xff]
    %v1904 = vld [vmem:[%s1802 + $0x1e9] sm:$0xff]
    %v1905 = vld [vmem:[%s1802 + $0x1f9] sm:$0xff]
    %v1906 = vld [vmem:[%s1802 + $0x201] sm:$0xff]
    %v1907 = vld [vmem:[%s1802 + $0x211] sm:$0xff]
    %v1908 = vld [vmem:[%s1802 + $0x219] sm:$0xff]
    %v1909 = vld [vmem:[%s1802 + $0x229] sm:$0xff]
    %v1910 = vld [vmem:[%s1802 + $0x231] sm:$0xff]
    %v1911 = vld [vmem:[%s1802 + $0x241] sm:$0xff]
    %v1912 = vld [vmem:[%s1802 + $0x249] sm:$0xff]
    %v1913 = vld [vmem:[%s1802 + $0x259] sm:$0xff]
    %v1914 = vld [vmem:[%s1802 + $0x261] sm:$0xff]
    %v1915 = vld [vmem:[%s1802 + $0x271] sm:$0xff]
    %v1916 = vld [vmem:[%s1802 + $0x279] sm:$0xff]
    %v1917 = vld [vmem:[%s1802 + $0x289] sm:$0xff]
    %v1918 = vld [vmem:[%s1802 + $0x291] sm:$0xff]
    %v1919 = vld [vmem:[%s1802 + $0x2a1] sm:$0xff]
    %v1920 = vld [vmem:[%s1802 + $0x2a9] sm:$0xff]
    %v1921 = vld [vmem:[%s1802 + $0x2b9] sm:$0xff]
    %v1922 = vld [vmem:[%s1802 + $0x2c1] sm:$0xff]
    %v1923 = vld [vmem:[%s1802 + $0x2d1] sm:$0xff]
    %v1924 = vld [vmem:[%s1802 + $0x2d9] sm:$0xff]
    %v1925 = vld [vmem:[%s1802 + $0x2e9] sm:$0xff]
    %v1926 = vld [vmem:[%s1802 + $0x2f1] sm:$0xff]
    %v1927 = vld [vmem:[%s1802 + $0x301] sm:$0xff]
    %v1928 = vld [vmem:[%s1802 + $0x309] sm:$0xff]
    %v1929 = vld [vmem:[%s1802 + $0x319] sm:$0xff]
    %v1930 = vld [vmem:[%s1802 + $0x321] sm:$0xff]
    %v1931 = vld [vmem:[%s1802 + $0x2] sm:$0xff]
    %v1932 = vld [vmem:[%s1802 + $0xa] sm:$0xff]
    %v1933 = vld [vmem:[%s1802 + $0x1a] sm:$0xff]
    %v1934 = vld [vmem:[%s1802 + $0x22] sm:$0xff]
    %v1935 = vld [vmem:[%s1802 + $0x32] sm:$0xff]
    %v1936 = vld [vmem:[%s1802 + $0x3a] sm:$0xff]
    %v1937 = vld [vmem:[%s1802 + $0x4a] sm:$0xff]
    %v1938 = vld [vmem:[%s1802 + $0x52] sm:$0xff]
    %v1939 = vld [vmem:[%s1802 + $0x62] sm:$0xff]
    %v1940 = vld [vmem:[%s1802 + $0x6a] sm:$0xff]
    %v1941 = vld [vmem:[%s1802 + $0x7a] sm:$0xff]
    %v1942 = vld [vmem:[%s1802 + $0x82] sm:$0xff]
    %v1943 = vld [vmem:[%s1802 + $0x92] sm:$0xff]
    %v1944 = vld [vmem:[%s1802 + $0x9a] sm:$0xff]
    %v1945 = vld [vmem:[%s1802 + $0xaa] sm:$0xff]
    %v1946 = vld [vmem:[%s1802 + $0xb2] sm:$0xff]
    %v1947 = vld [vmem:[%s1802 + $0xc2] sm:$0xff]
    %v1948 = vld [vmem:[%s1802 + $0xca] sm:$0xff]
    %v1949 = vld [vmem:[%s1802 + $0xda] sm:$0xff]
    %v1950 = vld [vmem:[%s1802 + $0xe2] sm:$0xff]
    %v1951 = vld [vmem:[%s1802 + $0xf2] sm:$0xff]
    %v1952 = vld [vmem:[%s1802 + $0xfa] sm:$0xff]
    %v1953 = vld [vmem:[%s1802 + $0x10a] sm:$0xff]
    %v1954 = vld [vmem:[%s1802 + $0x112] sm:$0xff]
    %v1955 = vld [vmem:[%s1802 + $0x122] sm:$0xff]
    %v1956 = vld [vmem:[%s1802 + $0x12a] sm:$0xff]
    %v1957 = vld [vmem:[%s1802 + $0x13a] sm:$0xff]
    %v1958 = vld [vmem:[%s1802 + $0x142] sm:$0xff]
    %v1959 = vld [vmem:[%s1802 + $0x152] sm:$0xff]
    %v1960 = vld [vmem:[%s1802 + $0x15a] sm:$0xff]
    %v1961 = vld [vmem:[%s1802 + $0x16a] sm:$0xff]
    %v1962 = vld [vmem:[%s1802 + $0x172] sm:$0xff]
    %v1963 = vld [vmem:[%s1802 + $0x1b2] sm:$0xff]
    %v1964 = vld [vmem:[%s1802 + $0x1ba] sm:$0xff]
    %v1965 = vld [vmem:[%s1802 + $0x1ca] sm:$0xff]
    %v1966 = vld [vmem:[%s1802 + $0x1d2] sm:$0xff]
    %v1967 = vld [vmem:[%s1802 + $0x1e2] sm:$0xff]
    %v1968 = vld [vmem:[%s1802 + $0x1ea] sm:$0xff]
    %v1969 = vld [vmem:[%s1802 + $0x1fa] sm:$0xff]
    %v1970 = vld [vmem:[%s1802 + $0x202] sm:$0xff]
    %v1971 = vld [vmem:[%s1802 + $0x212] sm:$0xff]
    %v1972 = vld [vmem:[%s1802 + $0x21a] sm:$0xff]
    %v1973 = vld [vmem:[%s1802 + $0x22a] sm:$0xff]
    %v1974 = vld [vmem:[%s1802 + $0x232] sm:$0xff]
    %v1975 = vld [vmem:[%s1802 + $0x242] sm:$0xff]
    %v1976 = vld [vmem:[%s1802 + $0x24a] sm:$0xff]
    %v1977 = vld [vmem:[%s1802 + $0x25a] sm:$0xff]
    %v1978 = vld [vmem:[%s1802 + $0x262] sm:$0xff]
    %v1979 = vld [vmem:[%s1802 + $0x272] sm:$0xff]
    %v1980 = vld [vmem:[%s1802 + $0x27a] sm:$0xff]
    %v1981 = vld [vmem:[%s1802 + $0x28a] sm:$0xff]
    %v1982 = vld [vmem:[%s1802 + $0x292] sm:$0xff]
    %v1983 = vld [vmem:[%s1802 + $0x2a2] sm:$0xff]
    %v1984 = vld [vmem:[%s1802 + $0x2aa] sm:$0xff]
    %v1985 = vld [vmem:[%s1802 + $0x2ba] sm:$0xff]
    %v1986 = vld [vmem:[%s1802 + $0x2c2] sm:$0xff]
    %v1987 = vld [vmem:[%s1802 + $0x2d2] sm:$0xff]
    %v1988 = vld [vmem:[%s1802 + $0x2da] sm:$0xff]
    %v1989 = vld [vmem:[%s1802 + $0x2ea] sm:$0xff]
    %v1990 = vld [vmem:[%s1802 + $0x2f2] sm:$0xff]
    %v1991 = vld [vmem:[%s1802 + $0x302] sm:$0xff]
    %v1992 = vld [vmem:[%s1802 + $0x30a] sm:$0xff]
    %v1993 = vld [vmem:[%s1802 + $0x31a] sm:$0xff]
    %v1994 = vld [vmem:[%s1802 + $0x322] sm:$0xff]
    %2059 = vrot.lane.b32.xlu0 %v1867, 64
    %v2060 = vpop.permute.xlu0 %2059
    %2061 = vrot.lane.b32.xlu0 %v1868, 64
    %v2062 = vpop.permute.xlu0 %2061
    %2063 = vrot.lane.b32.xlu0 %v1869, 64
    %v2064 = vpop.permute.xlu0 %2063
    %2065 = vrot.lane.b32.xlu0 %v1870, 64
    %v2066 = vpop.permute.xlu0 %2065
    %2067 = vrot.lane.b32.xlu0 %v1871, 64
    %v2068 = vpop.permute.xlu0 %2067
    %2069 = vrot.lane.b32.xlu0 %v1872, 64
    %v2070 = vpop.permute.xlu0 %2069
    %2071 = vrot.lane.b32.xlu0 %v1873, 64
    %v2072 = vpop.permute.xlu0 %2071
    %2073 = vrot.lane.b32.xlu0 %v1874, 64
    %v2074 = vpop.permute.xlu0 %2073
    %2075 = vrot.lane.b32.xlu0 %v1875, 64
    %v2076 = vpop.permute.xlu0 %2075
    %2077 = vrot.lane.b32.xlu0 %v1876, 64
    %v2078 = vpop.permute.xlu0 %2077
    %2079 = vrot.lane.b32.xlu0 %v1877, 64
    %v2080 = vpop.permute.xlu0 %2079
    %2081 = vrot.lane.b32.xlu0 %v1878, 64
    %v2082 = vpop.permute.xlu0 %2081
    %2083 = vrot.lane.b32.xlu0 %v1879, 64
    %v2084 = vpop.permute.xlu0 %2083
    %2085 = vrot.lane.b32.xlu0 %v1880, 64
    %v2086 = vpop.permute.xlu0 %2085
    %2087 = vrot.lane.b32.xlu0 %v1881, 64
    %v2088 = vpop.permute.xlu0 %2087
    %2089 = vrot.lane.b32.xlu0 %v1882, 64
    %v2090 = vpop.permute.xlu0 %2089
    %2091 = vrot.lane.b32.xlu0 %v1883, 64
    %v2092 = vpop.permute.xlu0 %2091
    %2093 = vrot.lane.b32.xlu0 %v1884, 64
    %v2094 = vpop.permute.xlu0 %2093
    %2095 = vrot.lane.b32.xlu0 %v1885, 64
    %v2096 = vpop.permute.xlu0 %2095
    %2097 = vrot.lane.b32.xlu0 %v1886, 64
    %v2098 = vpop.permute.xlu0 %2097
    %2099 = vrot.lane.b32.xlu0 %v1887, 64
    %v2100 = vpop.permute.xlu0 %2099
    %2101 = vrot.lane.b32.xlu0 %v1888, 64
    %v2102 = vpop.permute.xlu0 %2101
    %2103 = vrot.lane.b32.xlu0 %v1889, 64
    %v2104 = vpop.permute.xlu0 %2103
    %2105 = vrot.lane.b32.xlu0 %v1890, 64
    %v2106 = vpop.permute.xlu0 %2105
    %2107 = vrot.lane.b32.xlu0 %v1891, 64
    %v2108 = vpop.permute.xlu0 %2107
    %2109 = vrot.lane.b32.xlu0 %v1892, 64
    %v2110 = vpop.permute.xlu0 %2109
    %2111 = vrot.lane.b32.xlu0 %v1893, 64
    %v2112 = vpop.permute.xlu0 %2111
    %2113 = vrot.lane.b32.xlu0 %v1894, 64
    %v2114 = vpop.permute.xlu0 %2113
    %2115 = vrot.lane.b32.xlu0 %v1895, 64
    %v2116 = vpop.permute.xlu0 %2115
    %2117 = vrot.lane.b32.xlu0 %v1896, 64
    %v2118 = vpop.permute.xlu0 %2117
    %2119 = vrot.lane.b32.xlu0 %v1897, 64
    %v2120 = vpop.permute.xlu0 %2119
    %2121 = vrot.lane.b32.xlu0 %v1898, 64
    %v2122 = vpop.permute.xlu0 %2121
    %2123 = vrot.lane.b32.xlu0 %v1899, 64
    %v2124 = vpop.permute.xlu0 %2123
    %2125 = vrot.lane.b32.xlu0 %v1900, 64
    %v2126 = vpop.permute.xlu0 %2125
    %2127 = vrot.lane.b32.xlu0 %v1901, 64
    %v2128 = vpop.permute.xlu0 %2127
    %2129 = vrot.lane.b32.xlu0 %v1902, 64
    %v2130 = vpop.permute.xlu0 %2129
    %2131 = vrot.lane.b32.xlu0 %v1903, 64
    %v2132 = vpop.permute.xlu0 %2131
    %2133 = vrot.lane.b32.xlu0 %v1904, 64
    %v2134 = vpop.permute.xlu0 %2133
    %2135 = vrot.lane.b32.xlu0 %v1905, 64
    %v2136 = vpop.permute.xlu0 %2135
    %2137 = vrot.lane.b32.xlu0 %v1906, 64
    %v2138 = vpop.permute.xlu0 %2137
    %2139 = vrot.lane.b32.xlu0 %v1907, 64
    %v2140 = vpop.permute.xlu0 %2139
    %2141 = vrot.lane.b32.xlu0 %v1908, 64
    %v2142 = vpop.permute.xlu0 %2141
    %2143 = vrot.lane.b32.xlu0 %v1909, 64
    %v2144 = vpop.permute.xlu0 %2143
    %2145 = vrot.lane.b32.xlu0 %v1910, 64
    %v2146 = vpop.permute.xlu0 %2145
    %2147 = vrot.lane.b32.xlu0 %v1911, 64
    %v2148 = vpop.permute.xlu0 %2147
    %2149 = vrot.lane.b32.xlu0 %v1912, 64
    %v2150 = vpop.permute.xlu0 %2149
    %2151 = vrot.lane.b32.xlu0 %v1913, 64
    %v2152 = vpop.permute.xlu0 %2151
    %2153 = vrot.lane.b32.xlu0 %v1914, 64
    %v2154 = vpop.permute.xlu0 %2153
    %2155 = vrot.lane.b32.xlu0 %v1915, 64
    %v2156 = vpop.permute.xlu0 %2155
    %2157 = vrot.lane.b32.xlu0 %v1916, 64
    %v2158 = vpop.permute.xlu0 %2157
    %2159 = vrot.lane.b32.xlu0 %v1917, 64
    %v2160 = vpop.permute.xlu0 %2159
    %2161 = vrot.lane.b32.xlu0 %v1918, 64
    %v2162 = vpop.permute.xlu0 %2161
    %2163 = vrot.lane.b32.xlu0 %v1919, 64
    %v2164 = vpop.permute.xlu0 %2163
    %2165 = vrot.lane.b32.xlu0 %v1920, 64
    %v2166 = vpop.permute.xlu0 %2165
    %2167 = vrot.lane.b32.xlu0 %v1921, 64
    %v2168 = vpop.permute.xlu0 %2167
    %2169 = vrot.lane.b32.xlu0 %v1922, 64
    %v2170 = vpop.permute.xlu0 %2169
    %2171 = vrot.lane.b32.xlu0 %v1923, 64
    %v2172 = vpop.permute.xlu0 %2171
    %2173 = vrot.lane.b32.xlu0 %v1924, 64
    %v2174 = vpop.permute.xlu0 %2173
    %2175 = vrot.lane.b32.xlu0 %v1925, 64
    %v2176 = vpop.permute.xlu0 %2175
    %2177 = vrot.lane.b32.xlu0 %v1926, 64
    %v2178 = vpop.permute.xlu0 %2177
    %2179 = vrot.lane.b32.xlu0 %v1927, 64
    %v2180 = vpop.permute.xlu0 %2179
    %2181 = vrot.lane.b32.xlu0 %v1928, 64
    %v2182 = vpop.permute.xlu0 %2181
    %2183 = vrot.lane.b32.xlu0 %v1929, 64
    %v2184 = vpop.permute.xlu0 %2183
    %2185 = vrot.lane.b32.xlu0 %v1930, 64
    %v2186 = vpop.permute.xlu0 %2185
    %v2251 = vsel %vm1156, %v1803, %v2060
    %v2252 = vsel %vm1156, %v1804, %v2062
    %v2253 = vsel %vm1156, %v1805, %v2064
    %v2254 = vsel %vm1156, %v1806, %v2066
    %v2255 = vsel %vm1156, %v1807, %v2068
    %v2256 = vsel %vm1156, %v1808, %v2070
    %v2257 = vsel %vm1156, %v1809, %v2072
    %v2258 = vsel %vm1156, %v1810, %v2074
    %v2259 = vsel %vm1156, %v1811, %v2076
    %v2260 = vsel %vm1156, %v1812, %v2078
    %v2261 = vsel %vm1156, %v1813, %v2080
    %v2262 = vsel %vm1156, %v1814, %v2082
    %v2263 = vsel %vm1156, %v1815, %v2084
    %v2264 = vsel %vm1156, %v1816, %v2086
    %v2265 = vsel %vm1156, %v1817, %v2088
    %v2266 = vsel %vm1156, %v1818, %v2090
    %v2267 = vsel %vm1156, %v1819, %v2092
    %v2268 = vsel %vm1156, %v1820, %v2094
    %v2269 = vsel %vm1156, %v1821, %v2096
    %v2270 = vsel %vm1156, %v1822, %v2098
    %v2271 = vsel %vm1156, %v1823, %v2100
    %v2272 = vsel %vm1156, %v1824, %v2102
    %v2273 = vsel %vm1156, %v1825, %v2104
    %v2274 = vsel %vm1156, %v1826, %v2106
    %v2275 = vsel %vm1156, %v1827, %v2108
    %v2276 = vsel %vm1156, %v1828, %v2110
    %v2277 = vsel %vm1156, %v1829, %v2112
    %v2278 = vsel %vm1156, %v1830, %v2114
    %v2279 = vsel %vm1156, %v1831, %v2116
    %v2280 = vsel %vm1156, %v1832, %v2118
    %v2281 = vsel %vm1156, %v1833, %v2120
    %v2282 = vsel %vm1156, %v1834, %v2122
    %v2283 = vsel %vm1156, %v1835, %v2124
    %v2284 = vsel %vm1156, %v1836, %v2126
    %v2285 = vsel %vm1156, %v1837, %v2128
    %v2286 = vsel %vm1156, %v1838, %v2130
    %v2287 = vsel %vm1156, %v1839, %v2132
    %v2288 = vsel %vm1156, %v1840, %v2134
    %v2289 = vsel %vm1156, %v1841, %v2136
    %v2290 = vsel %vm1156, %v1842, %v2138
    %v2291 = vsel %vm1156, %v1843, %v2140
    %v2292 = vsel %vm1156, %v1844, %v2142
    %v2293 = vsel %vm1156, %v1845, %v2144
    %v2294 = vsel %vm1156, %v1846, %v2146
    %v2295 = vsel %vm1156, %v1847, %v2148
    %v2296 = vsel %vm1156, %v1848, %v2150
    %v2297 = vsel %vm1156, %v1849, %v2152
    %v2298 = vsel %vm1156, %v1850, %v2154
    %v2299 = vsel %vm1156, %v1851, %v2156
    %v2300 = vsel %vm1156, %v1852, %v2158
    %v2301 = vsel %vm1156, %v1853, %v2160
    %v2302 = vsel %vm1156, %v1854, %v2162
    %v2303 = vsel %vm1156, %v1855, %v2164
    %v2304 = vsel %vm1156, %v1856, %v2166
    %v2305 = vsel %vm1156, %v1857, %v2168
    %v2306 = vsel %vm1156, %v1858, %v2170
    %v2307 = vsel %vm1156, %v1859, %v2172
    %v2308 = vsel %vm1156, %v1860, %v2174
    %v2309 = vsel %vm1156, %v1861, %v2176
    %v2310 = vsel %vm1156, %v1862, %v2178
    %v2311 = vsel %vm1156, %v1863, %v2180
    %v2312 = vsel %vm1156, %v1864, %v2182
    %v2313 = vsel %vm1156, %v1865, %v2184
    %v2314 = vsel %vm1156, %v1866, %v2186
    %s2315 = scalar_lea.vmem [#allocation9], 192
    %v2316 = vld [vmem:[%s2315] sm:$0xff]
    %v2317 = vld [vmem:[%s2315 + $0x8] sm:$0xff]
    %v2318 = vld [vmem:[%s2315 + $0x10] sm:$0xff]
    %v2319 = vld [vmem:[%s2315 + $0x18] sm:$0xff]
    %v2320 = vld [vmem:[%s2315 + $0x20] sm:$0xff]
    %v2321 = vld [vmem:[%s2315 + $0x28] sm:$0xff]
    %v2322 = vld [vmem:[%s2315 + $0x30] sm:$0xff]
    %v2323 = vld [vmem:[%s2315 + $0x38] sm:$0xff]
    %v2324 = vld [vmem:[%s2315 + $0x40] sm:$0xff]
    %v2325 = vld [vmem:[%s2315 + $0x48] sm:$0xff]
    %v2326 = vld [vmem:[%s2315 + $0x50] sm:$0xff]
    %v2327 = vld [vmem:[%s2315 + $0x58] sm:$0xff]
    %v2328 = vld [vmem:[%s2315 + $0x60] sm:$0xff]
    %v2329 = vld [vmem:[%s2315 + $0x68] sm:$0xff]
    %v2330 = vld [vmem:[%s2315 + $0x70] sm:$0xff]
    %v2331 = vld [vmem:[%s2315 + $0x78] sm:$0xff]
    %v2332 = vld [vmem:[%s2315 + $0x80] sm:$0xff]
    %v2333 = vld [vmem:[%s2315 + $0x88] sm:$0xff]
    %v2334 = vld [vmem:[%s2315 + $0x90] sm:$0xff]
    %v2335 = vld [vmem:[%s2315 + $0x98] sm:$0xff]
    %v2336 = vld [vmem:[%s2315 + $0xa0] sm:$0xff]
    %v2337 = vld [vmem:[%s2315 + $0xa8] sm:$0xff]
    %v2338 = vld [vmem:[%s2315 + $0xb0] sm:$0xff]
    %v2339 = vld [vmem:[%s2315 + $0xb8] sm:$0xff]
    %v2341 = vsel %vm1156, %v1931, 0
    %v2344 = vsel %vm1156, %v1932, 0
    %v2347 = vsel %vm1156, %v1933, 0
    %v2350 = vsel %vm1156, %v1934, 0
    %v2353 = vsel %vm1156, %v1935, 0
    %v2356 = vsel %vm1156, %v1936, 0
    %v2359 = vsel %vm1156, %v1937, 0
    %v2362 = vsel %vm1156, %v1938, 0
    %v2365 = vsel %vm1156, %v1939, 0
    %v2368 = vsel %vm1156, %v1940, 0
    %v2371 = vsel %vm1156, %v1941, 0
    %v2374 = vsel %vm1156, %v1942, 0
    %v2377 = vsel %vm1156, %v1943, 0
    %v2380 = vsel %vm1156, %v1944, 0
    %v2383 = vsel %vm1156, %v1945, 0
    %v2386 = vsel %vm1156, %v1946, 0
    %v2389 = vsel %vm1156, %v1947, 0
    %v2392 = vsel %vm1156, %v1948, 0
    %v2395 = vsel %vm1156, %v1949, 0
    %v2398 = vsel %vm1156, %v1950, 0
    %v2401 = vsel %vm1156, %v1951, 0
    %v2404 = vsel %vm1156, %v1952, 0
    %v2407 = vsel %vm1156, %v1953, 0
    %v2410 = vsel %vm1156, %v1954, 0
    %v2413 = vsel %vm1156, %v1955, 0
    %v2416 = vsel %vm1156, %v1956, 0
    %v2419 = vsel %vm1156, %v1957, 0
    %v2422 = vsel %vm1156, %v1958, 0
    %v2425 = vsel %vm1156, %v1959, 0
    %v2428 = vsel %vm1156, %v1960, 0
    %v2431 = vsel %vm1156, %v1961, 0
    %v2434 = vsel %vm1156, %v1962, 0
    %v2437 = vsel %vm1156, %v1963, 0
    %v2440 = vsel %vm1156, %v1964, 0
    %v2443 = vsel %vm1156, %v1965, 0
    %v2446 = vsel %vm1156, %v1966, 0
    %v2449 = vsel %vm1156, %v1967, 0
    %v2452 = vsel %vm1156, %v1968, 0
    %v2455 = vsel %vm1156, %v1969, 0
    %v2458 = vsel %vm1156, %v1970, 0
    %v2461 = vsel %vm1156, %v1971, 0
    %v2464 = vsel %vm1156, %v1972, 0
    %v2467 = vsel %vm1156, %v1973, 0
    %v2470 = vsel %vm1156, %v1974, 0
    %v2473 = vsel %vm1156, %v1975, 0
    %v2476 = vsel %vm1156, %v1976, 0
    %v2479 = vsel %vm1156, %v1977, 0
    %v2482 = vsel %vm1156, %v1978, 0
    %v2485 = vsel %vm1156, %v1979, 0
    %v2488 = vsel %vm1156, %v1980, 0
    %v2491 = vsel %vm1156, %v1981, 0
    %v2494 = vsel %vm1156, %v1982, 0
    %v2497 = vsel %vm1156, %v1983, 0
    %v2500 = vsel %vm1156, %v1984, 0
    %v2503 = vsel %vm1156, %v1985, 0
    %v2506 = vsel %vm1156, %v1986, 0
    %v2509 = vsel %vm1156, %v1987, 0
    %v2512 = vsel %vm1156, %v1988, 0
    %v2515 = vsel %vm1156, %v1989, 0
    %v2518 = vsel %vm1156, %v1990, 0
    %v2521 = vsel %vm1156, %v1991, 0
    %v2524 = vsel %vm1156, %v1992, 0
    %v2527 = vsel %vm1156, %v1993, 0
    %v2530 = vsel %vm1156, %v1994, 0
    %2532 = vmatprep.subr.mxu0 0.0
    %2533 = vmatpush1.msra.mxu0 %v2316
    %2534 = vmatprep.subr.mxu0 0.0
    %2535 = vmatpush1.msra.mxu0 %v2317
    %2536 = vmatprep.subr.mxu0 0.0
    %2537 = vmatpush1.msra.mxu0 %v2318
    %2538 = vmatprep.subr.mxu0 0.0
    %2539 = vmatpush1.msra.mxu0 %v2319
    %2540 = vmatprep.subr.mxu0 0.0
    %2541 = vmatpush1.msra.mxu0 %v2320
    %2542 = vmatprep.subr.mxu0 0.0
    %2543 = vmatpush1.msra.mxu0 %v2321
    %2544 = vmatprep.subr.mxu0 0.0
    %2545 = vmatpush1.msra.mxu0 %v2322
    %2546 = vmatprep.subr.mxu0 0.0
    %2547 = vmatpush1.msra.mxu0 %v2323
    %2548 = vmatprep.subr.mxu0 0.0
    %2549 = vmatpush1.msra.mxu0 %v2324
    %2550 = vmatprep.subr.mxu0 0.0
    %2551 = vmatpush1.msra.mxu0 %v2325
    %2552 = vmatprep.subr.mxu0 0.0
    %2553 = vmatpush1.msra.mxu0 %v2326
    %2554 = vmatprep.subr.mxu0 0.0
    %2555 = vmatpush1.msra.mxu0 %v2327
    %2556 = vmatprep.subr.mxu0 0.0
    %2557 = vmatpush1.msra.mxu0 %v2328
    %2558 = vmatprep.subr.mxu0 0.0
    %2559 = vmatpush1.msra.mxu0 %v2329
    %2560 = vmatprep.subr.mxu0 0.0
    %2561 = vmatpush1.msra.mxu0 %v2330
    %2562 = vmatprep.subr.mxu0 0.0
    %2563 = vmatpush1.msra.mxu0 %v2331
    %2564 = vmatprep.subr.mxu0 0.0
    %2565 = vmatpush1.msra.mxu0 %v2332
    %2566 = vmatprep.subr.mxu0 0.0
    %2567 = vmatpush1.msra.mxu0 %v2333
    %2568 = vmatprep.subr.mxu0 0.0
    %2569 = vmatpush1.msra.mxu0 %v2334
    %2570 = vmatprep.subr.mxu0 0.0
    %2571 = vmatpush1.msra.mxu0 %v2335
    %2572 = vmatprep.subr.mxu0 0.0
    %2573 = vmatpush1.msra.mxu0 %v2336
    %2574 = vmatprep.subr.mxu0 0.0
    %2575 = vmatpush1.msra.mxu0 %v2337
    %2576 = vmatprep.subr.mxu0 0.0
    %2577 = vmatpush1.msra.mxu0 %v2338
    %2578 = vmatprep.subr.mxu0 0.0
    %2579 = vmatpush1.msra.mxu0 %v2339
    %2580 = vmatprep.subr.mxu0 0.0
    %2581 = vmatpush1.msra.mxu0 0.0
    %2582 = vmatprep.subr.mxu0 0.0
    %2583 = vmatpush1.msra.mxu0 0.0
    %2584 = vmatprep.subr.mxu0 0.0
    %2585 = vmatpush1.msra.mxu0 0.0
    %2586 = vmatprep.subr.mxu0 0.0
    %2587 = vmatpush1.msra.mxu0 0.0
    %2588 = vmatprep.subr.mxu0 0.0
    %2589 = vmatpush1.msra.mxu0 0.0
    %2590 = vmatprep.subr.mxu0 0.0
    %2591 = vmatpush1.msra.mxu0 0.0
    %2592 = vmatprep.subr.mxu0 0.0
    %2593 = vmatpush1.msra.mxu0 0.0
    %2594 = vmatprep.subr.mxu0 0.0
    %2595 = vmatpush1.msra.mxu0 0.0
    %2596 = vmatprep.mubr.f32.mxu0 %v2341
    %2597 = vmatmul.mubr.f32.gmra.mrb[0].mxu0 %v2251
    %v2598 = vpop.f32.mrb[0].mxu0
    %v2599 = vadd.f32 0.0, %v2598
    %v2600 = vpop.f32.mrb[0].mxu0
    %2601 = vmatprep.mubr.f32.mxu0 %v2344
    %2602 = vmatmul.mubr.f32.gmra.mrb[0].mxu0 %v2252
    %v2603 = vpop.f32.mrb[0].mxu0
    %v2604 = vadd.f32 0.0, %v2603
    %v2605 = vpop.f32.mrb[0].mxu0
    %2606 = vmatprep.mubr.f32.mxu0 %v2347
    %2607 = vmatmul.mubr.f32.gmra.mrb[0].mxu0 %v2253
    %v2608 = vpop.f32.mrb[0].mxu0
    %v2609 = vadd.f32 0.0, %v2608
    %v2610 = vpop.f32.mrb[0].mxu0
    %2611 = vmatprep.mubr.f32.mxu0 %v2350
    %2612 = vmatmul.mubr.f32.gmra.mrb[0].mxu0 %v2254
    %v2613 = vpop.f32.mrb[0].mxu0
    %v2614 = vadd.f32 0.0, %v2613
    %v2615 = vpop.f32.mrb[0].mxu0
    %2616 = vmatprep.mubr.f32.mxu0 %v2353
    %2617 = vmatmul.mubr.f32.gmra.mrb[0].mxu0 %v2255
    %v2618 = vpop.f32.mrb[0].mxu0
    %v2619 = vadd.f32 0.0, %v2618
    %v2620 = vpop.f32.mrb[0].mxu0
    %2621 = vmatprep.mubr.f32.mxu0 %v2356
    %2622 = vmatmul.mubr.f32.gmra.mrb[0].mxu0 %v2256
    %v2623 = vpop.f32.mrb[0].mxu0
    %v2624 = vadd.f32 0.0, %v2623
    %v2625 = vpop.f32.mrb[0].mxu0
    %2626 = vmatprep.mubr.f32.mxu0 %v2359
    %2627 = vmatmul.mubr.f32.gmra.mrb[0].mxu0 %v2257
    %v2628 = vpop.f32.mrb[0].mxu0
    %v2629 = vadd.f32 0.0, %v2628
    %v2630 = vpop.f32.mrb[0].mxu0
    %2631 = vmatprep.mubr.f32.mxu0 %v2362
    %2632 = vmatmul.mubr.f32.gmra.mrb[0].mxu0 %v2258
    %v2633 = vpop.f32.mrb[0].mxu0
    %v2634 = vadd.f32 0.0, %v2633
    %v2635 = vpop.f32.mrb[0].mxu0
    %2636 = vmatprep.mubr.f32.mxu0 %v2365
    %2637 = vmatmul.mubr.f32.gmra.mrb[0].mxu0 %v2259
    %v2638 = vpop.f32.mrb[0].mxu0
    %v2639 = vadd.f32 0.0, %v2638
    %v2640 = vpop.f32.mrb[0].mxu0
    %2641 = vmatprep.mubr.f32.mxu0 %v2368
    %2642 = vmatmul.mubr.f32.gmra.mrb[0].mxu0 %v2260
    %v2643 = vpop.f32.mrb[0].mxu0
    %v2644 = vadd.f32 0.0, %v2643
    %v2645 = vpop.f32.mrb[0].mxu0
    %2646 = vmatprep.mubr.f32.mxu0 %v2371
    %2647 = vmatmul.mubr.f32.gmra.mrb[0].mxu0 %v2261
    %v2648 = vpop.f32.mrb[0].mxu0
    %v2649 = vadd.f32 0.0, %v2648
    %v2650 = vpop.f32.mrb[0].mxu0
    %2651 = vmatprep.mubr.f32.mxu0 %v2374
    %2652 = vmatmul.mubr.f32.gmra.mrb[0].mxu0 %v2262
    %v2653 = vpop.f32.mrb[0].mxu0
    %v2654 = vadd.f32 0.0, %v2653
    %v2655 = vpop.f32.mrb[0].mxu0
    %2656 = vmatprep.mubr.f32.mxu0 %v2377
    %2657 = vmatmul.mubr.f32.gmra.mrb[0].mxu0 %v2263
    %v2658 = vpop.f32.mrb[0].mxu0
    %v2659 = vadd.f32 0.0, %v2658
    %v2660 = vpop.f32.mrb[0].mxu0
    %2661 = vmatprep.mubr.f32.mxu0 %v2380
    %2662 = vmatmul.mubr.f32.gmra.mrb[0].mxu0 %v2264
    %v2663 = vpop.f32.mrb[0].mxu0
    %v2664 = vadd.f32 0.0, %v2663
    %v2665 = vpop.f32.mrb[0].mxu0
    %2666 = vmatprep.mubr.f32.mxu0 %v2383
    %2667 = vmatmul.mubr.f32.gmra.mrb[0].mxu0 %v2265
    %v2668 = vpop.f32.mrb[0].mxu0
    %v2669 = vadd.f32 0.0, %v2668
    %v2670 = vpop.f32.mrb[0].mxu0
    %2671 = vmatprep.mubr.f32.mxu0 %v2386
    %2672 = vmatmul.mubr.f32.gmra.mrb[0].mxu0 %v2266
    %v2673 = vpop.f32.mrb[0].mxu0
    %v2674 = vadd.f32 0.0, %v2673
    %v2675 = vpop.f32.mrb[0].mxu0
    %2676 = vmatprep.mubr.f32.mxu0 %v2389
    %2677 = vmatmul.mubr.f32.gmra.mrb[0].mxu0 %v2267
    %v2678 = vpop.f32.mrb[0].mxu0
    %v2679 = vadd.f32 0.0, %v2678
    %v2680 = vpop.f32.mrb[0].mxu0
    %2681 = vmatprep.mubr.f32.mxu0 %v2392
    %2682 = vmatmul.mubr.f32.gmra.mrb[0].mxu0 %v2268
    %v2683 = vpop.f32.mrb[0].mxu0
    %v2684 = vadd.f32 0.0, %v2683
    %v2685 = vpop.f32.mrb[0].mxu0
    %2686 = vmatprep.mubr.f32.mxu0 %v2395
    %2687 = vmatmul.mubr.f32.gmra.mrb[0].mxu0 %v2269
    %v2688 = vpop.f32.mrb[0].mxu0
    %v2689 = vadd.f32 0.0, %v2688
    %v2690 = vpop.f32.mrb[0].mxu0
    %2691 = vmatprep.mubr.f32.mxu0 %v2398
    %2692 = vmatmul.mubr.f32.gmra.mrb[0].mxu0 %v2270
    %v2693 = vpop.f32.mrb[0].mxu0
    %v2694 = vadd.f32 0.0, %v2693
    %v2695 = vpop.f32.mrb[0].mxu0
    %2696 = vmatprep.mubr.f32.mxu0 %v2401
    %2697 = vmatmul.mubr.f32.gmra.mrb[0].mxu0 %v2271
    %v2698 = vpop.f32.mrb[0].mxu0
    %v2699 = vadd.f32 0.0, %v2698
    %v2700 = vpop.f32.mrb[0].mxu0
    %2701 = vmatprep.mubr.f32.mxu0 %v2404
    %2702 = vmatmul.mubr.f32.gmra.mrb[0].mxu0 %v2272
    %v2703 = vpop.f32.mrb[0].mxu0
    %v2704 = vadd.f32 0.0, %v2703
    %v2705 = vpop.f32.mrb[0].mxu0
    %2706 = vmatprep.mubr.f32.mxu0 %v2407
    %2707 = vmatmul.mubr.f32.gmra.mrb[0].mxu0 %v2273
    %v2708 = vpop.f32.mrb[0].mxu0
    %v2709 = vadd.f32 0.0, %v2708
    %v2710 = vpop.f32.mrb[0].mxu0
    %2711 = vmatprep.mubr.f32.mxu0 %v2410
    %2712 = vmatmul.mubr.f32.gmra.mrb[0].mxu0 %v2274
    %v2713 = vpop.f32.mrb[0].mxu0
    %v2714 = vadd.f32 0.0, %v2713
    %v2715 = vpop.f32.mrb[0].mxu0
    %2716 = vmatprep.mubr.f32.mxu0 %v2413
    %2717 = vmatmul.mubr.f32.gmra.mrb[0].mxu0 %v2275
    %v2718 = vpop.f32.mrb[0].mxu0
    %v2719 = vadd.f32 0.0, %v2718
    %v2720 = vpop.f32.mrb[0].mxu0
    %2721 = vmatprep.mubr.f32.mxu0 %v2416
    %2722 = vmatmul.mubr.f32.gmra.mrb[0].mxu0 %v2276
    %v2723 = vpop.f32.mrb[0].mxu0
    %v2724 = vadd.f32 0.0, %v2723
    %v2725 = vpop.f32.mrb[0].mxu0
    %2726 = vmatprep.mubr.f32.mxu0 %v2419
    %2727 = vmatmul.mubr.f32.gmra.mrb[0].mxu0 %v2277
    %v2728 = vpop.f32.mrb[0].mxu0
    %v2729 = vadd.f32 0.0, %v2728
    %v2730 = vpop.f32.mrb[0].mxu0
    %2731 = vmatprep.mubr.f32.mxu0 %v2422
    %2732 = vmatmul.mubr.f32.gmra.mrb[0].mxu0 %v2278
    %v2733 = vpop.f32.mrb[0].mxu0
    %v2734 = vadd.f32 0.0, %v2733
    %v2735 = vpop.f32.mrb[0].mxu0
    %2736 = vmatprep.mubr.f32.mxu0 %v2425
    %2737 = vmatmul.mubr.f32.gmra.mrb[0].mxu0 %v2279
    %v2738 = vpop.f32.mrb[0].mxu0
    %v2739 = vadd.f32 0.0, %v2738
    %v2740 = vpop.f32.mrb[0].mxu0
    %2741 = vmatprep.mubr.f32.mxu0 %v2428
    %2742 = vmatmul.mubr.f32.gmra.mrb[0].mxu0 %v2280
    %v2743 = vpop.f32.mrb[0].mxu0
    %v2744 = vadd.f32 0.0, %v2743
    %v2745 = vpop.f32.mrb[0].mxu0
    %2746 = vmatprep.mubr.f32.mxu0 %v2431
    %2747 = vmatmul.mubr.f32.gmra.mrb[0].mxu0 %v2281
    %v2748 = vpop.f32.mrb[0].mxu0
    %v2749 = vadd.f32 0.0, %v2748
    %v2750 = vpop.f32.mrb[0].mxu0
    %2751 = vmatprep.mubr.f32.mxu0 %v2434
    %2752 = vmatmul.mubr.f32.gmra.mrb[0].mxu0 %v2282
    %v2753 = vpop.f32.mrb[0].mxu0
    %v2754 = vadd.f32 0.0, %v2753
    %v2755 = vpop.f32.mrb[0].mxu0
    %2756 = vmatprep.mubr.f32.mxu0 %v2437
    %2757 = vmatmul.mubr.f32.gmra.mrb[0].mxu0 %v2283
    %v2758 = vpop.f32.mrb[0].mxu0
    %v2759 = vadd.f32 0.0, %v2758
    %v2760 = vpop.f32.mrb[0].mxu0
    %2761 = vmatprep.mubr.f32.mxu0 %v2440
    %2762 = vmatmul.mubr.f32.gmra.mrb[0].mxu0 %v2284
    %v2763 = vpop.f32.mrb[0].mxu0
    %v2764 = vadd.f32 0.0, %v2763
    %v2765 = vpop.f32.mrb[0].mxu0
    %2766 = vmatprep.mubr.f32.mxu0 %v2443
    %2767 = vmatmul.mubr.f32.gmra.mrb[0].mxu0 %v2285
    %v2768 = vpop.f32.mrb[0].mxu0
    %v2769 = vadd.f32 0.0, %v2768
    %v2770 = vpop.f32.mrb[0].mxu0
    %2771 = vmatprep.mubr.f32.mxu0 %v2446
    %2772 = vmatmul.mubr.f32.gmra.mrb[0].mxu0 %v2286
    %v2773 = vpop.f32.mrb[0].mxu0
    %v2774 = vadd.f32 0.0, %v2773
    %v2775 = vpop.f32.mrb[0].mxu0
    %2776 = vmatprep.mubr.f32.mxu0 %v2449
    %2777 = vmatmul.mubr.f32.gmra.mrb[0].mxu0 %v2287
    %v2778 = vpop.f32.mrb[0].mxu0
    %v2779 = vadd.f32 0.0, %v2778
    %v2780 = vpop.f32.mrb[0].mxu0
    %2781 = vmatprep.mubr.f32.mxu0 %v2452
    %2782 = vmatmul.mubr.f32.gmra.mrb[0].mxu0 %v2288
    %v2783 = vpop.f32.mrb[0].mxu0
    %v2784 = vadd.f32 0.0, %v2783
    %v2785 = vpop.f32.mrb[0].mxu0
    %2786 = vmatprep.mubr.f32.mxu0 %v2455
    %2787 = vmatmul.mubr.f32.gmra.mrb[0].mxu0 %v2289
    %v2788 = vpop.f32.mrb[0].mxu0
    %v2789 = vadd.f32 0.0, %v2788
    %v2790 = vpop.f32.mrb[0].mxu0
    %2791 = vmatprep.mubr.f32.mxu0 %v2458
    %2792 = vmatmul.mubr.f32.gmra.mrb[0].mxu0 %v2290
    %v2793 = vpop.f32.mrb[0].mxu0
    %v2794 = vadd.f32 0.0, %v2793
    %v2795 = vpop.f32.mrb[0].mxu0
    %2796 = vmatprep.mubr.f32.mxu0 %v2461
    %2797 = vmatmul.mubr.f32.gmra.mrb[0].mxu0 %v2291
    %v2798 = vpop.f32.mrb[0].mxu0
    %v2799 = vadd.f32 0.0, %v2798
    %v2800 = vpop.f32.mrb[0].mxu0
    %2801 = vmatprep.mubr.f32.mxu0 %v2464
    %2802 = vmatmul.mubr.f32.gmra.mrb[0].mxu0 %v2292
    %v2803 = vpop.f32.mrb[0].mxu0
    %v2804 = vadd.f32 0.0, %v2803
    %v2805 = vpop.f32.mrb[0].mxu0
    %2806 = vmatprep.mubr.f32.mxu0 %v2467
    %2807 = vmatmul.mubr.f32.gmra.mrb[0].mxu0 %v2293
    %v2808 = vpop.f32.mrb[0].mxu0
    %v2809 = vadd.f32 0.0, %v2808
    %v2810 = vpop.f32.mrb[0].mxu0
    %2811 = vmatprep.mubr.f32.mxu0 %v2470
    %2812 = vmatmul.mubr.f32.gmra.mrb[0].mxu0 %v2294
    %v2813 = vpop.f32.mrb[0].mxu0
    %v2814 = vadd.f32 0.0, %v2813
    %v2815 = vpop.f32.mrb[0].mxu0
    %2816 = vmatprep.mubr.f32.mxu0 %v2473
    %2817 = vmatmul.mubr.f32.gmra.mrb[0].mxu0 %v2295
    %v2818 = vpop.f32.mrb[0].mxu0
    %v2819 = vadd.f32 0.0, %v2818
    %v2820 = vpop.f32.mrb[0].mxu0
    %2821 = vmatprep.mubr.f32.mxu0 %v2476
    %2822 = vmatmul.mubr.f32.gmra.mrb[0].mxu0 %v2296
    %v2823 = vpop.f32.mrb[0].mxu0
    %v2824 = vadd.f32 0.0, %v2823
    %v2825 = vpop.f32.mrb[0].mxu0
    %2826 = vmatprep.mubr.f32.mxu0 %v2479
    %2827 = vmatmul.mubr.f32.gmra.mrb[0].mxu0 %v2297
    %v2828 = vpop.f32.mrb[0].mxu0
    %v2829 = vadd.f32 0.0, %v2828
    %v2830 = vpop.f32.mrb[0].mxu0
    %2831 = vmatprep.mubr.f32.mxu0 %v2482
    %2832 = vmatmul.mubr.f32.gmra.mrb[0].mxu0 %v2298
    %v2833 = vpop.f32.mrb[0].mxu0
    %v2834 = vadd.f32 0.0, %v2833
    %v2835 = vpop.f32.mrb[0].mxu0
    %2836 = vmatprep.mubr.f32.mxu0 %v2485
    %2837 = vmatmul.mubr.f32.gmra.mrb[0].mxu0 %v2299
    %v2838 = vpop.f32.mrb[0].mxu0
    %v2839 = vadd.f32 0.0, %v2838
    %v2840 = vpop.f32.mrb[0].mxu0
    %2841 = vmatprep.mubr.f32.mxu0 %v2488
    %2842 = vmatmul.mubr.f32.gmra.mrb[0].mxu0 %v2300
    %v2843 = vpop.f32.mrb[0].mxu0
    %v2844 = vadd.f32 0.0, %v2843
    %v2845 = vpop.f32.mrb[0].mxu0
    %2846 = vmatprep.mubr.f32.mxu0 %v2491
    %2847 = vmatmul.mubr.f32.gmra.mrb[0].mxu0 %v2301
    %v2848 = vpop.f32.mrb[0].mxu0
    %v2849 = vadd.f32 0.0, %v2848
    %v2850 = vpop.f32.mrb[0].mxu0
    %2851 = vmatprep.mubr.f32.mxu0 %v2494
    %2852 = vmatmul.mubr.f32.gmra.mrb[0].mxu0 %v2302
    %v2853 = vpop.f32.mrb[0].mxu0
    %v2854 = vadd.f32 0.0, %v2853
    %v2855 = vpop.f32.mrb[0].mxu0
    %2856 = vmatprep.mubr.f32.mxu0 %v2497
    %2857 = vmatmul.mubr.f32.gmra.mrb[0].mxu0 %v2303
    %v2858 = vpop.f32.mrb[0].mxu0
    %v2859 = vadd.f32 0.0, %v2858
    %v2860 = vpop.f32.mrb[0].mxu0
    %2861 = vmatprep.mubr.f32.mxu0 %v2500
    %2862 = vmatmul.mubr.f32.gmra.mrb[0].mxu0 %v2304
    %v2863 = vpop.f32.mrb[0].mxu0
    %v2864 = vadd.f32 0.0, %v2863
    %v2865 = vpop.f32.mrb[0].mxu0
    %2866 = vmatprep.mubr.f32.mxu0 %v2503
    %2867 = vmatmul.mubr.f32.gmra.mrb[0].mxu0 %v2305
    %v2868 = vpop.f32.mrb[0].mxu0
    %v2869 = vadd.f32 0.0, %v2868
    %v2870 = vpop.f32.mrb[0].mxu0
    %2871 = vmatprep.mubr.f32.mxu0 %v2506
    %2872 = vmatmul.mubr.f32.gmra.mrb[0].mxu0 %v2306
    %v2873 = vpop.f32.mrb[0].mxu0
    %v2874 = vadd.f32 0.0, %v2873
    %v2875 = vpop.f32.mrb[0].mxu0
    %2876 = vmatprep.mubr.f32.mxu0 %v2509
    %2877 = vmatmul.mubr.f32.gmra.mrb[0].mxu0 %v2307
    %v2878 = vpop.f32.mrb[0].mxu0
    %v2879 = vadd.f32 0.0, %v2878
    %v2880 = vpop.f32.mrb[0].mxu0
    %2881 = vmatprep.mubr.f32.mxu0 %v2512
    %2882 = vmatmul.mubr.f32.gmra.mrb[0].mxu0 %v2308
    %v2883 = vpop.f32.mrb[0].mxu0
    %v2884 = vadd.f32 0.0, %v2883
    %v2885 = vpop.f32.mrb[0].mxu0
    %2886 = vmatprep.mubr.f32.mxu0 %v2515
    %2887 = vmatmul.mubr.f32.gmra.mrb[0].mxu0 %v2309
    %v2888 = vpop.f32.mrb[0].mxu0
    %v2889 = vadd.f32 0.0, %v2888
    %v2890 = vpop.f32.mrb[0].mxu0
    %2891 = vmatprep.mubr.f32.mxu0 %v2518
    %2892 = vmatmul.mubr.f32.gmra.mrb[0].mxu0 %v2310
    %v2893 = vpop.f32.mrb[0].mxu0
    %v2894 = vadd.f32 0.0, %v2893
    %v2895 = vpop.f32.mrb[0].mxu0
    %2896 = vmatprep.mubr.f32.mxu0 %v2521
    %2897 = vmatmul.mubr.f32.gmra.mrb[0].mxu0 %v2311
    %v2898 = vpop.f32.mrb[0].mxu0
    %v2899 = vadd.f32 0.0, %v2898
    %v2900 = vpop.f32.mrb[0].mxu0
    %2901 = vmatprep.mubr.f32.mxu0 %v2524
    %2902 = vmatmul.mubr.f32.gmra.mrb[0].mxu0 %v2312
    %v2903 = vpop.f32.mrb[0].mxu0
    %v2904 = vadd.f32 0.0, %v2903
    %v2905 = vpop.f32.mrb[0].mxu0
    %2906 = vmatprep.mubr.f32.mxu0 %v2527
    %2907 = vmatmul.mubr.f32.gmra.mrb[0].mxu0 %v2313
    %v2908 = vpop.f32.mrb[0].mxu0
    %v2909 = vadd.f32 0.0, %v2908
    %v2910 = vpop.f32.mrb[0].mxu0
    %2911 = vmatprep.mubr.f32.mxu0 %v2530
    %2912 = vmatmul.mubr.f32.gmra.mrb[0].mxu0 %v2314
    %v2913 = vpop.f32.mrb[0].mxu0
    %v2914 = vadd.f32 0.0, %v2913
    %v2915 = vpop.f32.mrb[0].mxu0
    %2916 = vdwg.mxu0
    %v2918 = vsel %vm1156, %v1394, 0
    %v2921 = vsel %vm1156, %v1395, 0
    %v2924 = vsel %vm1156, %v1396, 0
    %v2927 = vsel %vm1156, %v1397, 0
    %v2930 = vsel %vm1156, %v1398, 0
    %v2933 = vsel %vm1156, %v1399, 0
    %v2936 = vsel %vm1156, %v1400, 0
    %v2939 = vsel %vm1156, %v1401, 0
    %v2942 = vsel %vm1156, %v1402, 0
    %v2945 = vsel %vm1156, %v1403, 0
    %v2948 = vsel %vm1156, %v1404, 0
    %v2951 = vsel %vm1156, %v1405, 0
    %v2954 = vsel %vm1156, %v1406, 0
    %v2957 = vsel %vm1156, %v1407, 0
    %v2960 = vsel %vm1156, %v1408, 0
    %v2963 = vsel %vm1156, %v1409, 0
    %v2966 = vsel %vm1156, %v1410, 0
    %v2969 = vsel %vm1156, %v1411, 0
    %v2972 = vsel %vm1156, %v1412, 0
    %v2975 = vsel %vm1156, %v1413, 0
    %v2978 = vsel %vm1156, %v1414, 0
    %v2981 = vsel %vm1156, %v1415, 0
    %v2984 = vsel %vm1156, %v1416, 0
    %v2987 = vsel %vm1156, %v1417, 0
    %v2990 = vsel %vm1156, %v1418, 0
    %v2993 = vsel %vm1156, %v1419, 0
    %v2996 = vsel %vm1156, %v1420, 0
    %v2999 = vsel %vm1156, %v1421, 0
    %v3002 = vsel %vm1156, %v1422, 0
    %v3005 = vsel %vm1156, %v1423, 0
    %v3008 = vsel %vm1156, %v1424, 0
    %v3011 = vsel %vm1156, %v1425, 0
    %v3014 = vsel %vm1156, %v1426, 0
    %v3017 = vsel %vm1156, %v1427, 0
    %v3020 = vsel %vm1156, %v1428, 0
    %v3023 = vsel %vm1156, %v1429, 0
    %v3026 = vsel %vm1156, %v1430, 0
    %v3029 = vsel %vm1156, %v1431, 0
    %v3032 = vsel %vm1156, %v1432, 0
    %v3035 = vsel %vm1156, %v1433, 0
    %v3038 = vsel %vm1156, %v1434, 0
    %v3041 = vsel %vm1156, %v1435, 0
    %v3044 = vsel %vm1156, %v1436, 0
    %v3047 = vsel %vm1156, %v1437, 0
    %v3050 = vsel %vm1156, %v1438, 0
    %v3053 = vsel %vm1156, %v1439, 0
    %v3056 = vsel %vm1156, %v1440, 0
    %v3059 = vsel %vm1156, %v1441, 0
    %v3062 = vsel %vm1156, %v1442, 0
    %v3065 = vsel %vm1156, %v1443, 0
    %v3068 = vsel %vm1156, %v1444, 0
    %v3071 = vsel %vm1156, %v1445, 0
    %v3074 = vsel %vm1156, %v1446, 0
    %v3077 = vsel %vm1156, %v1447, 0
    %v3080 = vsel %vm1156, %v1448, 0
    %v3083 = vsel %vm1156, %v1449, 0
    %v3086 = vsel %vm1156, %v1450, 0
    %v3089 = vsel %vm1156, %v1451, 0
    %v3092 = vsel %vm1156, %v1452, 0
    %v3095 = vsel %vm1156, %v1453, 0
    %v3098 = vsel %vm1156, %v1454, 0
    %v3101 = vsel %vm1156, %v1455, 0
    %v3104 = vsel %vm1156, %v1456, 0
    %v3107 = vsel %vm1156, %v1457, 0
    %3109 = vmatprep.subr.mxu0 0.0
    %3110 = vmatpush1.msra.mxu0 %v1778
    %3111 = vmatprep.subr.mxu0 0.0
    %3112 = vmatpush1.msra.mxu0 %v1779
    %3113 = vmatprep.subr.mxu0 0.0
    %3114 = vmatpush1.msra.mxu0 %v1780
    %3115 = vmatprep.subr.mxu0 0.0
    %3116 = vmatpush1.msra.mxu0 %v1781
    %3117 = vmatprep.subr.mxu0 0.0
    %3118 = vmatpush1.msra.mxu0 %v1782
    %3119 = vmatprep.subr.mxu0 0.0
    %3120 = vmatpush1.msra.mxu0 %v1783
    %3121 = vmatprep.subr.mxu0 0.0
    %3122 = vmatpush1.msra.mxu0 %v1784
    %3123 = vmatprep.subr.mxu0 0.0
    %3124 = vmatpush1.msra.mxu0 %v1785
    %3125 = vmatprep.subr.mxu0 0.0
    %3126 = vmatpush1.msra.mxu0 %v1786
    %3127 = vmatprep.subr.mxu0 0.0
    %3128 = vmatpush1.msra.mxu0 %v1787
    %3129 = vmatprep.subr.mxu0 0.0
    %3130 = vmatpush1.msra.mxu0 %v1788
    %3131 = vmatprep.subr.mxu0 0.0
    %3132 = vmatpush1.msra.mxu0 %v1789
    %3133 = vmatprep.subr.mxu0 0.0
    %3134 = vmatpush1.msra.mxu0 %v1790
    %3135 = vmatprep.subr.mxu0 0.0
    %3136 = vmatpush1.msra.mxu0 %v1791
    %3137 = vmatprep.subr.mxu0 0.0
    %3138 = vmatpush1.msra.mxu0 %v1792
    %3139 = vmatprep.subr.mxu0 0.0
    %3140 = vmatpush1.msra.mxu0 %v1793
    %3141 = vmatprep.subr.mxu0 0.0
    %3142 = vmatpush1.msra.mxu0 %v1794
    %3143 = vmatprep.subr.mxu0 0.0
    %3144 = vmatpush1.msra.mxu0 %v1795
    %3145 = vmatprep.subr.mxu0 0.0
    %3146 = vmatpush1.msra.mxu0 %v1796
    %3147 = vmatprep.subr.mxu0 0.0
    %3148 = vmatpush1.msra.mxu0 %v1797
    %3149 = vmatprep.subr.mxu0 0.0
    %3150 = vmatpush1.msra.mxu0 %v1798
    %3151 = vmatprep.subr.mxu0 0.0
    %3152 = vmatpush1.msra.mxu0 %v1799
    %3153 = vmatprep.subr.mxu0 0.0
    %3154 = vmatpush1.msra.mxu0 %v1800
    %3155 = vmatprep.subr.mxu0 0.0
    %3156 = vmatpush1.msra.mxu0 %v1801
    %3157 = vmatprep.subr.mxu0 0.0
    %3158 = vmatpush1.msra.mxu0 0.0
    %3159 = vmatprep.subr.mxu0 0.0
    %3160 = vmatpush1.msra.mxu0 0.0
    %3161 = vmatprep.subr.mxu0 0.0
    %3162 = vmatpush1.msra.mxu0 0.0
    %3163 = vmatprep.subr.mxu0 0.0
    %3164 = vmatpush1.msra.mxu0 0.0
    %3165 = vmatprep.subr.mxu0 0.0
    %3166 = vmatpush1.msra.mxu0 0.0
    %3167 = vmatprep.subr.mxu0 0.0
    %3168 = vmatpush1.msra.mxu0 0.0
    %3169 = vmatprep.subr.mxu0 0.0
    %3170 = vmatpush1.msra.mxu0 0.0
    %3171 = vmatprep.subr.mxu0 0.0
    %3172 = vmatpush1.msra.mxu0 0.0
    %3173 = vmatprep.mubr.f32.mxu0 %v2918
    %3174 = vmatmul.mubr.f32.gmra.mrb[0].mxu0 %v1714
    %v3175 = vpop.f32.mrb[0].mxu0
    %v3176 = vadd.f32 %v2599, %v3175
    %v3177 = vpop.f32.mrb[0].mxu0
    %3178 = vmatprep.mubr.f32.mxu0 %v2921
    %3179 = vmatmul.mubr.f32.gmra.mrb[0].mxu0 %v1715
    %v3180 = vpop.f32.mrb[0].mxu0
    %v3181 = vadd.f32 %v2604, %v3180
    %v3182 = vpop.f32.mrb[0].mxu0
    %3183 = vmatprep.mubr.f32.mxu0 %v2924
    %3184 = vmatmul.mubr.f32.gmra.mrb[0].mxu0 %v1716
    %v3185 = vpop.f32.mrb[0].mxu0
    %v3186 = vadd.f32 %v2609, %v3185
    %v3187 = vpop.f32.mrb[0].mxu0
    %3188 = vmatprep.mubr.f32.mxu0 %v2927
    %3189 = vmatmul.mubr.f32.gmra.mrb[0].mxu0 %v1717
    %v3190 = vpop.f32.mrb[0].mxu0
    %v3191 = vadd.f32 %v2614, %v3190
    %v3192 = vpop.f32.mrb[0].mxu0
    %3193 = vmatprep.mubr.f32.mxu0 %v2930
    %3194 = vmatmul.mubr.f32.gmra.mrb[0].mxu0 %v1718
    %v3195 = vpop.f32.mrb[0].mxu0
    %v3196 = vadd.f32 %v2619, %v3195
    %v3197 = vpop.f32.mrb[0].mxu0
    %3198 = vmatprep.mubr.f32.mxu0 %v2933
    %3199 = vmatmul.mubr.f32.gmra.mrb[0].mxu0 %v1719
    %v3200 = vpop.f32.mrb[0].mxu0
    %v3201 = vadd.f32 %v2624, %v3200
    %v3202 = vpop.f32.mrb[0].mxu0
    %3203 = vmatprep.mubr.f32.mxu0 %v2936
    %3204 = vmatmul.mubr.f32.gmra.mrb[0].mxu0 %v1720
    %v3205 = vpop.f32.mrb[0].mxu0
    %v3206 = vadd.f32 %v2629, %v3205
    %v3207 = vpop.f32.mrb[0].mxu0
    %3208 = vmatprep.mubr.f32.mxu0 %v2939
    %3209 = vmatmul.mubr.f32.gmra.mrb[0].mxu0 %v1721
    %v3210 = vpop.f32.mrb[0].mxu0
    %v3211 = vadd.f32 %v2634, %v3210
    %v3212 = vpop.f32.mrb[0].mxu0
    %3213 = vmatprep.mubr.f32.mxu0 %v2942
    %3214 = vmatmul.mubr.f32.gmra.mrb[0].mxu0 %v1722
    %v3215 = vpop.f32.mrb[0].mxu0
    %v3216 = vadd.f32 %v2639, %v3215
    %v3217 = vpop.f32.mrb[0].mxu0
    %3218 = vmatprep.mubr.f32.mxu0 %v2945
    %3219 = vmatmul.mubr.f32.gmra.mrb[0].mxu0 %v1723
    %v3220 = vpop.f32.mrb[0].mxu0
    %v3221 = vadd.f32 %v2644, %v3220
    %v3222 = vpop.f32.mrb[0].mxu0
    %3223 = vmatprep.mubr.f32.mxu0 %v2948
    %3224 = vmatmul.mubr.f32.gmra.mrb[0].mxu0 %v1724
    %v3225 = vpop.f32.mrb[0].mxu0
    %v3226 = vadd.f32 %v2649, %v3225
    %v3227 = vpop.f32.mrb[0].mxu0
    %3228 = vmatprep.mubr.f32.mxu0 %v2951
    %3229 = vmatmul.mubr.f32.gmra.mrb[0].mxu0 %v1725
    %v3230 = vpop.f32.mrb[0].mxu0
    %v3231 = vadd.f32 %v2654, %v3230
    %v3232 = vpop.f32.mrb[0].mxu0
    %3233 = vmatprep.mubr.f32.mxu0 %v2954
    %3234 = vmatmul.mubr.f32.gmra.mrb[0].mxu0 %v1726
    %v3235 = vpop.f32.mrb[0].mxu0
    %v3236 = vadd.f32 %v2659, %v3235
    %v3237 = vpop.f32.mrb[0].mxu0
    %3238 = vmatprep.mubr.f32.mxu0 %v2957
    %3239 = vmatmul.mubr.f32.gmra.mrb[0].mxu0 %v1727
    %v3240 = vpop.f32.mrb[0].mxu0
    %v3241 = vadd.f32 %v2664, %v3240
    %v3242 = vpop.f32.mrb[0].mxu0
    %3243 = vmatprep.mubr.f32.mxu0 %v2960
    %3244 = vmatmul.mubr.f32.gmra.mrb[0].mxu0 %v1728
    %v3245 = vpop.f32.mrb[0].mxu0
    %v3246 = vadd.f32 %v2669, %v3245
    %v3247 = vpop.f32.mrb[0].mxu0
    %3248 = vmatprep.mubr.f32.mxu0 %v2963
    %3249 = vmatmul.mubr.f32.gmra.mrb[0].mxu0 %v1729
    %v3250 = vpop.f32.mrb[0].mxu0
    %v3251 = vadd.f32 %v2674, %v3250
    %v3252 = vpop.f32.mrb[0].mxu0
    %3253 = vmatprep.mubr.f32.mxu0 %v2966
    %3254 = vmatmul.mubr.f32.gmra.mrb[0].mxu0 %v1730
    %v3255 = vpop.f32.mrb[0].mxu0
    %v3256 = vadd.f32 %v2679, %v3255
    %v3257 = vpop.f32.mrb[0].mxu0
    %3258 = vmatprep.mubr.f32.mxu0 %v2969
    %3259 = vmatmul.mubr.f32.gmra.mrb[0].mxu0 %v1731
    %v3260 = vpop.f32.mrb[0].mxu0
    %v3261 = vadd.f32 %v2684, %v3260
    %v3262 = vpop.f32.mrb[0].mxu0
    %3263 = vmatprep.mubr.f32.mxu0 %v2972
    %3264 = vmatmul.mubr.f32.gmra.mrb[0].mxu0 %v1732
    %v3265 = vpop.f32.mrb[0].mxu0
    %v3266 = vadd.f32 %v2689, %v3265
    %v3267 = vpop.f32.mrb[0].mxu0
    %3268 = vmatprep.mubr.f32.mxu0 %v2975
    %3269 = vmatmul.mubr.f32.gmra.mrb[0].mxu0 %v1733
    %v3270 = vpop.f32.mrb[0].mxu0
    %v3271 = vadd.f32 %v2694, %v3270
    %v3272 = vpop.f32.mrb[0].mxu0
    %3273 = vmatprep.mubr.f32.mxu0 %v2978
    %3274 = vmatmul.mubr.f32.gmra.mrb[0].mxu0 %v1734
    %v3275 = vpop.f32.mrb[0].mxu0
    %v3276 = vadd.f32 %v2699, %v3275
    %v3277 = vpop.f32.mrb[0].mxu0
    %3278 = vmatprep.mubr.f32.mxu0 %v2981
    %3279 = vmatmul.mubr.f32.gmra.mrb[0].mxu0 %v1735
    %v3280 = vpop.f32.mrb[0].mxu0
    %v3281 = vadd.f32 %v2704, %v3280
    %v3282 = vpop.f32.mrb[0].mxu0
    %3283 = vmatprep.mubr.f32.mxu0 %v2984
    %3284 = vmatmul.mubr.f32.gmra.mrb[0].mxu0 %v1736
    %v3285 = vpop.f32.mrb[0].mxu0
    %v3286 = vadd.f32 %v2709, %v3285
    %v3287 = vpop.f32.mrb[0].mxu0
    %3288 = vmatprep.mubr.f32.mxu0 %v2987
    %3289 = vmatmul.mubr.f32.gmra.mrb[0].mxu0 %v1737
    %v3290 = vpop.f32.mrb[0].mxu0
    %v3291 = vadd.f32 %v2714, %v3290
    %v3292 = vpop.f32.mrb[0].mxu0
    %3293 = vmatprep.mubr.f32.mxu0 %v2990
    %3294 = vmatmul.mubr.f32.gmra.mrb[0].mxu0 %v1738
    %v3295 = vpop.f32.mrb[0].mxu0
    %v3296 = vadd.f32 %v2719, %v3295
    %v3297 = vpop.f32.mrb[0].mxu0
    %3298 = vmatprep.mubr.f32.mxu0 %v2993
    %3299 = vmatmul.mubr.f32.gmra.mrb[0].mxu0 %v1739
    %v3300 = vpop.f32.mrb[0].mxu0
    %v3301 = vadd.f32 %v2724, %v3300
    %v3302 = vpop.f32.mrb[0].mxu0
    %3303 = vmatprep.mubr.f32.mxu0 %v2996
    %3304 = vmatmul.mubr.f32.gmra.mrb[0].mxu0 %v1740
    %v3305 = vpop.f32.mrb[0].mxu0
    %v3306 = vadd.f32 %v2729, %v3305
    %v3307 = vpop.f32.mrb[0].mxu0
    %3308 = vmatprep.mubr.f32.mxu0 %v2999
    %3309 = vmatmul.mubr.f32.gmra.mrb[0].mxu0 %v1741
    %v3310 = vpop.f32.mrb[0].mxu0
    %v3311 = vadd.f32 %v2734, %v3310
    %v3312 = vpop.f32.mrb[0].mxu0
    %3313 = vmatprep.mubr.f32.mxu0 %v3002
    %3314 = vmatmul.mubr.f32.gmra.mrb[0].mxu0 %v1742
    %v3315 = vpop.f32.mrb[0].mxu0
    %v3316 = vadd.f32 %v2739, %v3315
    %v3317 = vpop.f32.mrb[0].mxu0
    %3318 = vmatprep.mubr.f32.mxu0 %v3005
    %3319 = vmatmul.mubr.f32.gmra.mrb[0].mxu0 %v1743
    %v3320 = vpop.f32.mrb[0].mxu0
    %v3321 = vadd.f32 %v2744, %v3320
    %v3322 = vpop.f32.mrb[0].mxu0
    %3323 = vmatprep.mubr.f32.mxu0 %v3008
    %3324 = vmatmul.mubr.f32.gmra.mrb[0].mxu0 %v1744
    %v3325 = vpop.f32.mrb[0].mxu0
    %v3326 = vadd.f32 %v2749, %v3325
    %v3327 = vpop.f32.mrb[0].mxu0
    %3328 = vmatprep.mubr.f32.mxu0 %v3011
    %3329 = vmatmul.mubr.f32.gmra.mrb[0].mxu0 %v1745
    %v3330 = vpop.f32.mrb[0].mxu0
    %v3331 = vadd.f32 %v2754, %v3330
    %v3332 = vpop.f32.mrb[0].mxu0
    %3333 = vmatprep.mubr.f32.mxu0 %v3014
    %3334 = vmatmul.mubr.f32.gmra.mrb[0].mxu0 %v1746
    %v3335 = vpop.f32.mrb[0].mxu0
    %v3336 = vadd.f32 %v2759, %v3335
    %v3337 = vpop.f32.mrb[0].mxu0
    %3338 = vmatprep.mubr.f32.mxu0 %v3017
    %3339 = vmatmul.mubr.f32.gmra.mrb[0].mxu0 %v1747
    %v3340 = vpop.f32.mrb[0].mxu0
    %v3341 = vadd.f32 %v2764, %v3340
    %v3342 = vpop.f32.mrb[0].mxu0
    %3343 = vmatprep.mubr.f32.mxu0 %v3020
    %3344 = vmatmul.mubr.f32.gmra.mrb[0].mxu0 %v1748
    %v3345 = vpop.f32.mrb[0].mxu0
    %v3346 = vadd.f32 %v2769, %v3345
    %v3347 = vpop.f32.mrb[0].mxu0
    %3348 = vmatprep.mubr.f32.mxu0 %v3023
    %3349 = vmatmul.mubr.f32.gmra.mrb[0].mxu0 %v1749
    %v3350 = vpop.f32.mrb[0].mxu0
    %v3351 = vadd.f32 %v2774, %v3350
    %v3352 = vpop.f32.mrb[0].mxu0
    %3353 = vmatprep.mubr.f32.mxu0 %v3026
    %3354 = vmatmul.mubr.f32.gmra.mrb[0].mxu0 %v1750
    %v3355 = vpop.f32.mrb[0].mxu0
    %v3356 = vadd.f32 %v2779, %v3355
    %v3357 = vpop.f32.mrb[0].mxu0
    %3358 = vmatprep.mubr.f32.mxu0 %v3029
    %3359 = vmatmul.mubr.f32.gmra.mrb[0].mxu0 %v1751
    %v3360 = vpop.f32.mrb[0].mxu0
    %v3361 = vadd.f32 %v2784, %v3360
    %v3362 = vpop.f32.mrb[0].mxu0
    %3363 = vmatprep.mubr.f32.mxu0 %v3032
    %3364 = vmatmul.mubr.f32.gmra.mrb[0].mxu0 %v1752
    %v3365 = vpop.f32.mrb[0].mxu0
    %v3366 = vadd.f32 %v2789, %v3365
    %v3367 = vpop.f32.mrb[0].mxu0
    %3368 = vmatprep.mubr.f32.mxu0 %v3035
    %3369 = vmatmul.mubr.f32.gmra.mrb[0].mxu0 %v1753
    %v3370 = vpop.f32.mrb[0].mxu0
    %v3371 = vadd.f32 %v2794, %v3370
    %v3372 = vpop.f32.mrb[0].mxu0
    %3373 = vmatprep.mubr.f32.mxu0 %v3038
    %3374 = vmatmul.mubr.f32.gmra.mrb[0].mxu0 %v1754
    %v3375 = vpop.f32.mrb[0].mxu0
    %v3376 = vadd.f32 %v2799, %v3375
    %v3377 = vpop.f32.mrb[0].mxu0
    %3378 = vmatprep.mubr.f32.mxu0 %v3041
    %3379 = vmatmul.mubr.f32.gmra.mrb[0].mxu0 %v1755
    %v3380 = vpop.f32.mrb[0].mxu0
    %v3381 = vadd.f32 %v2804, %v3380
    %v3382 = vpop.f32.mrb[0].mxu0
    %3383 = vmatprep.mubr.f32.mxu0 %v3044
    %3384 = vmatmul.mubr.f32.gmra.mrb[0].mxu0 %v1756
    %v3385 = vpop.f32.mrb[0].mxu0
    %v3386 = vadd.f32 %v2809, %v3385
    %v3387 = vpop.f32.mrb[0].mxu0
    %3388 = vmatprep.mubr.f32.mxu0 %v3047
    %3389 = vmatmul.mubr.f32.gmra.mrb[0].mxu0 %v1757
    %v3390 = vpop.f32.mrb[0].mxu0
    %v3391 = vadd.f32 %v2814, %v3390
    %v3392 = vpop.f32.mrb[0].mxu0
    %3393 = vmatprep.mubr.f32.mxu0 %v3050
    %3394 = vmatmul.mubr.f32.gmra.mrb[0].mxu0 %v1758
    %v3395 = vpop.f32.mrb[0].mxu0
    %v3396 = vadd.f32 %v2819, %v3395
    %v3397 = vpop.f32.mrb[0].mxu0
    %3398 = vmatprep.mubr.f32.mxu0 %v3053
    %3399 = vmatmul.mubr.f32.gmra.mrb[0].mxu0 %v1759
    %v3400 = vpop.f32.mrb[0].mxu0
    %v3401 = vadd.f32 %v2824, %v3400
    %v3402 = vpop.f32.mrb[0].mxu0
    %3403 = vmatprep.mubr.f32.mxu0 %v3056
    %3404 = vmatmul.mubr.f32.gmra.mrb[0].mxu0 %v1760
    %v3405 = vpop.f32.mrb[0].mxu0
    %v3406 = vadd.f32 %v2829, %v3405
    %v3407 = vpop.f32.mrb[0].mxu0
    %3408 = vmatprep.mubr.f32.mxu0 %v3059
    %3409 = vmatmul.mubr.f32.gmra.mrb[0].mxu0 %v1761
    %v3410 = vpop.f32.mrb[0].mxu0
    %v3411 = vadd.f32 %v2834, %v3410
    %v3412 = vpop.f32.mrb[0].mxu0
    %3413 = vmatprep.mubr.f32.mxu0 %v3062
    %3414 = vmatmul.mubr.f32.gmra.mrb[0].mxu0 %v1762
    %v3415 = vpop.f32.mrb[0].mxu0
    %v3416 = vadd.f32 %v2839, %v3415
    %v3417 = vpop.f32.mrb[0].mxu0
    %3418 = vmatprep.mubr.f32.mxu0 %v3065
    %3419 = vmatmul.mubr.f32.gmra.mrb[0].mxu0 %v1763
    %v3420 = vpop.f32.mrb[0].mxu0
    %v3421 = vadd.f32 %v2844, %v3420
    %v3422 = vpop.f32.mrb[0].mxu0
    %3423 = vmatprep.mubr.f32.mxu0 %v3068
    %3424 = vmatmul.mubr.f32.gmra.mrb[0].mxu0 %v1764
    %v3425 = vpop.f32.mrb[0].mxu0
    %v3426 = vadd.f32 %v2849, %v3425
    %v3427 = vpop.f32.mrb[0].mxu0
    %3428 = vmatprep.mubr.f32.mxu0 %v3071
    %3429 = vmatmul.mubr.f32.gmra.mrb[0].mxu0 %v1765
    %v3430 = vpop.f32.mrb[0].mxu0
    %v3431 = vadd.f32 %v2854, %v3430
    %v3432 = vpop.f32.mrb[0].mxu0
    %3433 = vmatprep.mubr.f32.mxu0 %v3074
    %3434 = vmatmul.mubr.f32.gmra.mrb[0].mxu0 %v1766
    %v3435 = vpop.f32.mrb[0].mxu0
    %v3436 = vadd.f32 %v2859, %v3435
    %v3437 = vpop.f32.mrb[0].mxu0
    %3438 = vmatprep.mubr.f32.mxu0 %v3077
    %3439 = vmatmul.mubr.f32.gmra.mrb[0].mxu0 %v1767
    %v3440 = vpop.f32.mrb[0].mxu0
    %v3441 = vadd.f32 %v2864, %v3440
    %v3442 = vpop.f32.mrb[0].mxu0
    %3443 = vmatprep.mubr.f32.mxu0 %v3080
    %3444 = vmatmul.mubr.f32.gmra.mrb[0].mxu0 %v1768
    %v3445 = vpop.f32.mrb[0].mxu0
    %v3446 = vadd.f32 %v2869, %v3445
    %v3447 = vpop.f32.mrb[0].mxu0
    %3448 = vmatprep.mubr.f32.mxu0 %v3083
    %3449 = vmatmul.mubr.f32.gmra.mrb[0].mxu0 %v1769
    %v3450 = vpop.f32.mrb[0].mxu0
    %v3451 = vadd.f32 %v2874, %v3450
    %v3452 = vpop.f32.mrb[0].mxu0
    %3453 = vmatprep.mubr.f32.mxu0 %v3086
    %3454 = vmatmul.mubr.f32.gmra.mrb[0].mxu0 %v1770
    %v3455 = vpop.f32.mrb[0].mxu0
    %v3456 = vadd.f32 %v2879, %v3455
    %v3457 = vpop.f32.mrb[0].mxu0
    %3458 = vmatprep.mubr.f32.mxu0 %v3089
    %3459 = vmatmul.mubr.f32.gmra.mrb[0].mxu0 %v1771
    %v3460 = vpop.f32.mrb[0].mxu0
    %v3461 = vadd.f32 %v2884, %v3460
    %v3462 = vpop.f32.mrb[0].mxu0
    %3463 = vmatprep.mubr.f32.mxu0 %v3092
    %3464 = vmatmul.mubr.f32.gmra.mrb[0].mxu0 %v1772
    %v3465 = vpop.f32.mrb[0].mxu0
    %v3466 = vadd.f32 %v2889, %v3465
    %v3467 = vpop.f32.mrb[0].mxu0
    %3468 = vmatprep.mubr.f32.mxu0 %v3095
    %3469 = vmatmul.mubr.f32.gmra.mrb[0].mxu0 %v1773
    %v3470 = vpop.f32.mrb[0].mxu0
    %v3471 = vadd.f32 %v2894, %v3470
    %v3472 = vpop.f32.mrb[0].mxu0
    %3473 = vmatprep.mubr.f32.mxu0 %v3098
    %3474 = vmatmul.mubr.f32.gmra.mrb[0].mxu0 %v1774
    %v3475 = vpop.f32.mrb[0].mxu0
    %v3476 = vadd.f32 %v2899, %v3475
    %v3477 = vpop.f32.mrb[0].mxu0
    %3478 = vmatprep.mubr.f32.mxu0 %v3101
    %3479 = vmatmul.mubr.f32.gmra.mrb[0].mxu0 %v1775
    %v3480 = vpop.f32.mrb[0].mxu0
    %v3481 = vadd.f32 %v2904, %v3480
    %v3482 = vpop.f32.mrb[0].mxu0
    %3483 = vmatprep.mubr.f32.mxu0 %v3104
    %3484 = vmatmul.mubr.f32.gmra.mrb[0].mxu0 %v1776
    %v3485 = vpop.f32.mrb[0].mxu0
    %v3486 = vadd.f32 %v2909, %v3485
    %v3487 = vpop.f32.mrb[0].mxu0
    %3488 = vmatprep.mubr.f32.mxu0 %v3107
    %3489 = vmatmul.mubr.f32.gmra.mrb[0].mxu0 %v1777
    %v3490 = vpop.f32.mrb[0].mxu0
    %v3491 = vadd.f32 %v2914, %v3490
    %v3492 = vpop.f32.mrb[0].mxu0
    %3493 = vdwg.mxu0
    %s3494 = scalar_lea.vmem [#allocation2], 48
    %v3495 = vld [vmem:[%s3494] sm:$0xff]
    %v3496 = vld [vmem:[%s3494 + $0x8] sm:$0xff]
    %v3497 = vld [vmem:[%s3494 + $0x18] sm:$0xff]
    %v3498 = vld [vmem:[%s3494 + $0x20] sm:$0xff]
    %v3499 = vld [vmem:[%s3494 + $0x30] sm:$0xff]
    %v3500 = vld [vmem:[%s3494 + $0x38] sm:$0xff]
    %v3501 = vld [vmem:[%s3494 + $0x48] sm:$0xff]
    %v3502 = vld [vmem:[%s3494 + $0x50] sm:$0xff]
    %v3503 = vld [vmem:[%s3494 + $0x60] sm:$0xff]
    %v3504 = vld [vmem:[%s3494 + $0x68] sm:$0xff]
    %v3505 = vld [vmem:[%s3494 + $0x78] sm:$0xff]
    %v3506 = vld [vmem:[%s3494 + $0x80] sm:$0xff]
    %v3507 = vld [vmem:[%s3494 + $0x90] sm:$0xff]
    %v3508 = vld [vmem:[%s3494 + $0x98] sm:$0xff]
    %v3509 = vld [vmem:[%s3494 + $0xa8] sm:$0xff]
    %v3510 = vld [vmem:[%s3494 + $0xb0] sm:$0xff]
    %v3511 = vld [vmem:[%s3494 + $0xc0] sm:$0xff]
    %v3512 = vld [vmem:[%s3494 + $0xc8] sm:$0xff]
    %v3513 = vld [vmem:[%s3494 + $0xd8] sm:$0xff]
    %v3514 = vld [vmem:[%s3494 + $0xe0] sm:$0xff]
    %v3515 = vld [vmem:[%s3494 + $0xf0] sm:$0xff]
    %v3516 = vld [vmem:[%s3494 + $0xf8] sm:$0xff]
    %v3517 = vld [vmem:[%s3494 + $0x108] sm:$0xff]
    %v3518 = vld [vmem:[%s3494 + $0x110] sm:$0xff]
    %v3519 = vld [vmem:[%s3494 + $0x120] sm:$0xff]
    %v3520 = vld [vmem:[%s3494 + $0x128] sm:$0xff]
    %v3521 = vld [vmem:[%s3494 + $0x138] sm:$0xff]
    %v3522 = vld [vmem:[%s3494 + $0x140] sm:$0xff]
    %v3523 = vld [vmem:[%s3494 + $0x150] sm:$0xff]
    %v3524 = vld [vmem:[%s3494 + $0x158] sm:$0xff]
    %v3525 = vld [vmem:[%s3494 + $0x168] sm:$0xff]
    %v3526 = vld [vmem:[%s3494 + $0x170] sm:$0xff]
    %v3527 = vld [vmem:[%s3494 + $0x1b0] sm:$0xff]
    %v3528 = vld [vmem:[%s3494 + $0x1b8] sm:$0xff]
    %v3529 = vld [vmem:[%s3494 + $0x1c8] sm:$0xff]
    %v3530 = vld [vmem:[%s3494 + $0x1d0] sm:$0xff]
    %v3531 = vld [vmem:[%s3494 + $0x1e0] sm:$0xff]
    %v3532 = vld [vmem:[%s3494 + $0x1e8] sm:$0xff]
    %v3533 = vld [vmem:[%s3494 + $0x1f8] sm:$0xff]
    %v3534 = vld [vmem:[%s3494 + $0x200] sm:$0xff]
    %v3535 = vld [vmem:[%s3494 + $0x210] sm:$0xff]
    %v3536 = vld [vmem:[%s3494 + $0x218] sm:$0xff]
    %v3537 = vld [vmem:[%s3494 + $0x228] sm:$0xff]
    %v3538 = vld [vmem:[%s3494 + $0x230] sm:$0xff]
    %v3539 = vld [vmem:[%s3494 + $0x240] sm:$0xff]
    %v3540 = vld [vmem:[%s3494 + $0x248] sm:$0xff]
    %v3541 = vld [vmem:[%s3494 + $0x258] sm:$0xff]
    %v3542 = vld [vmem:[%s3494 + $0x260] sm:$0xff]
    %v3543 = vld [vmem:[%s3494 + $0x270] sm:$0xff]
    %v3544 = vld [vmem:[%s3494 + $0x278] sm:$0xff]
    %v3545 = vld [vmem:[%s3494 + $0x288] sm:$0xff]
    %v3546 = vld [vmem:[%s3494 + $0x290] sm:$0xff]
    %v3547 = vld [vmem:[%s3494 + $0x2a0] sm:$0xff]
    %v3548 = vld [vmem:[%s3494 + $0x2a8] sm:$0xff]
    %v3549 = vld [vmem:[%s3494 + $0x2b8] sm:$0xff]
    %v3550 = vld [vmem:[%s3494 + $0x2c0] sm:$0xff]
    %v3551 = vld [vmem:[%s3494 + $0x2d0] sm:$0xff]
    %v3552 = vld [vmem:[%s3494 + $0x2d8] sm:$0xff]
    %v3553 = vld [vmem:[%s3494 + $0x2e8] sm:$0xff]
    %v3554 = vld [vmem:[%s3494 + $0x2f0] sm:$0xff]
    %v3555 = vld [vmem:[%s3494 + $0x300] sm:$0xff]
    %v3556 = vld [vmem:[%s3494 + $0x308] sm:$0xff]
    %v3557 = vld [vmem:[%s3494 + $0x318] sm:$0xff]
    %v3558 = vld [vmem:[%s3494 + $0x320] sm:$0xff]
    %v3559 = vld [vmem:[%s3494 + $0x1] sm:$0xff]
    %v3560 = vld [vmem:[%s3494 + $0x9] sm:$0xff]
    %v3561 = vld [vmem:[%s3494 + $0x19] sm:$0xff]
    %v3562 = vld [vmem:[%s3494 + $0x21] sm:$0xff]
    %v3563 = vld [vmem:[%s3494 + $0x31] sm:$0xff]
    %v3564 = vld [vmem:[%s3494 + $0x39] sm:$0xff]
    %v3565 = vld [vmem:[%s3494 + $0x49] sm:$0xff]
    %v3566 = vld [vmem:[%s3494 + $0x51] sm:$0xff]
    %v3567 = vld [vmem:[%s3494 + $0x61] sm:$0xff]
    %v3568 = vld [vmem:[%s3494 + $0x69] sm:$0xff]
    %v3569 = vld [vmem:[%s3494 + $0x79] sm:$0xff]
    %v3570 = vld [vmem:[%s3494 + $0x81] sm:$0xff]
    %v3571 = vld [vmem:[%s3494 + $0x91] sm:$0xff]
    %v3572 = vld [vmem:[%s3494 + $0x99] sm:$0xff]
    %v3573 = vld [vmem:[%s3494 + $0xa9] sm:$0xff]
    %v3574 = vld [vmem:[%s3494 + $0xb1] sm:$0xff]
    %v3575 = vld [vmem:[%s3494 + $0xc1] sm:$0xff]
    %v3576 = vld [vmem:[%s3494 + $0xc9] sm:$0xff]
    %v3577 = vld [vmem:[%s3494 + $0xd9] sm:$0xff]
    %v3578 = vld [vmem:[%s3494 + $0xe1] sm:$0xff]
    %v3579 = vld [vmem:[%s3494 + $0xf1] sm:$0xff]
    %v3580 = vld [vmem:[%s3494 + $0xf9] sm:$0xff]
    %v3581 = vld [vmem:[%s3494 + $0x109] sm:$0xff]
    %v3582 = vld [vmem:[%s3494 + $0x111] sm:$0xff]
    %v3583 = vld [vmem:[%s3494 + $0x121] sm:$0xff]
    %v3584 = vld [vmem:[%s3494 + $0x129] sm:$0xff]
    %v3585 = vld [vmem:[%s3494 + $0x139] sm:$0xff]
    %v3586 = vld [vmem:[%s3494 + $0x141] sm:$0xff]
    %v3587 = vld [vmem:[%s3494 + $0x151] sm:$0xff]
    %v3588 = vld [vmem:[%s3494 + $0x159] sm:$0xff]
    %v3589 = vld [vmem:[%s3494 + $0x169] sm:$0xff]
    %v3590 = vld [vmem:[%s3494 + $0x171] sm:$0xff]
    %v3591 = vld [vmem:[%s3494 + $0x1b1] sm:$0xff]
    %v3592 = vld [vmem:[%s3494 + $0x1b9] sm:$0xff]
    %v3593 = vld [vmem:[%s3494 + $0x1c9] sm:$0xff]
    %v3594 = vld [vmem:[%s3494 + $0x1d1] sm:$0xff]
    %v3595 = vld [vmem:[%s3494 + $0x1e1] sm:$0xff]
    %v3596 = vld [vmem:[%s3494 + $0x1e9] sm:$0xff]
    %v3597 = vld [vmem:[%s3494 + $0x1f9] sm:$0xff]
    %v3598 = vld [vmem:[%s3494 + $0x201] sm:$0xff]
    %v3599 = vld [vmem:[%s3494 + $0x211] sm:$0xff]
    %v3600 = vld [vmem:[%s3494 + $0x219] sm:$0xff]
    %v3601 = vld [vmem:[%s3494 + $0x229] sm:$0xff]
    %v3602 = vld [vmem:[%s3494 + $0x231] sm:$0xff]
    %v3603 = vld [vmem:[%s3494 + $0x241] sm:$0xff]
    %v3604 = vld [vmem:[%s3494 + $0x249] sm:$0xff]
    %v3605 = vld [vmem:[%s3494 + $0x259] sm:$0xff]
    %v3606 = vld [vmem:[%s3494 + $0x261] sm:$0xff]
    %v3607 = vld [vmem:[%s3494 + $0x271] sm:$0xff]
    %v3608 = vld [vmem:[%s3494 + $0x279] sm:$0xff]
    %v3609 = vld [vmem:[%s3494 + $0x289] sm:$0xff]
    %v3610 = vld [vmem:[%s3494 + $0x291] sm:$0xff]
    %v3611 = vld [vmem:[%s3494 + $0x2a1] sm:$0xff]
    %v3612 = vld [vmem:[%s3494 + $0x2a9] sm:$0xff]
    %v3613 = vld [vmem:[%s3494 + $0x2b9] sm:$0xff]
    %v3614 = vld [vmem:[%s3494 + $0x2c1] sm:$0xff]
    %v3615 = vld [vmem:[%s3494 + $0x2d1] sm:$0xff]
    %v3616 = vld [vmem:[%s3494 + $0x2d9] sm:$0xff]
    %v3617 = vld [vmem:[%s3494 + $0x2e9] sm:$0xff]
    %v3618 = vld [vmem:[%s3494 + $0x2f1] sm:$0xff]
    %v3619 = vld [vmem:[%s3494 + $0x301] sm:$0xff]
    %v3620 = vld [vmem:[%s3494 + $0x309] sm:$0xff]
    %v3621 = vld [vmem:[%s3494 + $0x319] sm:$0xff]
    %v3622 = vld [vmem:[%s3494 + $0x321] sm:$0xff]
    %v3623 = vld [vmem:[%s3494 + $0x2] sm:$0xff]
    %v3624 = vld [vmem:[%s3494 + $0xa] sm:$0xff]
    %v3625 = vld [vmem:[%s3494 + $0x1a] sm:$0xff]
    %v3626 = vld [vmem:[%s3494 + $0x22] sm:$0xff]
    %v3627 = vld [vmem:[%s3494 + $0x32] sm:$0xff]
    %v3628 = vld [vmem:[%s3494 + $0x3a] sm:$0xff]
    %v3629 = vld [vmem:[%s3494 + $0x4a] sm:$0xff]
    %v3630 = vld [vmem:[%s3494 + $0x52] sm:$0xff]
    %v3631 = vld [vmem:[%s3494 + $0x62] sm:$0xff]
    %v3632 = vld [vmem:[%s3494 + $0x6a] sm:$0xff]
    %v3633 = vld [vmem:[%s3494 + $0x7a] sm:$0xff]
    %v3634 = vld [vmem:[%s3494 + $0x82] sm:$0xff]
    %v3635 = vld [vmem:[%s3494 + $0x92] sm:$0xff]
    %v3636 = vld [vmem:[%s3494 + $0x9a] sm:$0xff]
    %v3637 = vld [vmem:[%s3494 + $0xaa] sm:$0xff]
    %v3638 = vld [vmem:[%s3494 + $0xb2] sm:$0xff]
    %v3639 = vld [vmem:[%s3494 + $0xc2] sm:$0xff]
    %v3640 = vld [vmem:[%s3494 + $0xca] sm:$0xff]
    %v3641 = vld [vmem:[%s3494 + $0xda] sm:$0xff]
    %v3642 = vld [vmem:[%s3494 + $0xe2] sm:$0xff]
    %v3643 = vld [vmem:[%s3494 + $0xf2] sm:$0xff]
    %v3644 = vld [vmem:[%s3494 + $0xfa] sm:$0xff]
    %v3645 = vld [vmem:[%s3494 + $0x10a] sm:$0xff]
    %v3646 = vld [vmem:[%s3494 + $0x112] sm:$0xff]
    %v3647 = vld [vmem:[%s3494 + $0x122] sm:$0xff]
    %v3648 = vld [vmem:[%s3494 + $0x12a] sm:$0xff]
    %v3649 = vld [vmem:[%s3494 + $0x13a] sm:$0xff]
    %v3650 = vld [vmem:[%s3494 + $0x142] sm:$0xff]
    %v3651 = vld [vmem:[%s3494 + $0x152] sm:$0xff]
    %v3652 = vld [vmem:[%s3494 + $0x15a] sm:$0xff]
    %v3653 = vld [vmem:[%s3494 + $0x16a] sm:$0xff]
    %v3654 = vld [vmem:[%s3494 + $0x172] sm:$0xff]
    %v3655 = vld [vmem:[%s3494 + $0x1b2] sm:$0xff]
    %v3656 = vld [vmem:[%s3494 + $0x1ba] sm:$0xff]
    %v3657 = vld [vmem:[%s3494 + $0x1ca] sm:$0xff]
    %v3658 = vld [vmem:[%s3494 + $0x1d2] sm:$0xff]
    %v3659 = vld [vmem:[%s3494 + $0x1e2] sm:$0xff]
    %v3660 = vld [vmem:[%s3494 + $0x1ea] sm:$0xff]
    %v3661 = vld [vmem:[%s3494 + $0x1fa] sm:$0xff]
    %v3662 = vld [vmem:[%s3494 + $0x202] sm:$0xff]
    %v3663 = vld [vmem:[%s3494 + $0x212] sm:$0xff]
    %v3664 = vld [vmem:[%s3494 + $0x21a] sm:$0xff]
    %v3665 = vld [vmem:[%s3494 + $0x22a] sm:$0xff]
    %v3666 = vld [vmem:[%s3494 + $0x232] sm:$0xff]
    %v3667 = vld [vmem:[%s3494 + $0x242] sm:$0xff]
    %v3668 = vld [vmem:[%s3494 + $0x24a] sm:$0xff]
    %v3669 = vld [vmem:[%s3494 + $0x25a] sm:$0xff]
    %v3670 = vld [vmem:[%s3494 + $0x262] sm:$0xff]
    %v3671 = vld [vmem:[%s3494 + $0x272] sm:$0xff]
    %v3672 = vld [vmem:[%s3494 + $0x27a] sm:$0xff]
    %v3673 = vld [vmem:[%s3494 + $0x28a] sm:$0xff]
    %v3674 = vld [vmem:[%s3494 + $0x292] sm:$0xff]
    %v3675 = vld [vmem:[%s3494 + $0x2a2] sm:$0xff]
    %v3676 = vld [vmem:[%s3494 + $0x2aa] sm:$0xff]
    %v3677 = vld [vmem:[%s3494 + $0x2ba] sm:$0xff]
    %v3678 = vld [vmem:[%s3494 + $0x2c2] sm:$0xff]
    %v3679 = vld [vmem:[%s3494 + $0x2d2] sm:$0xff]
    %v3680 = vld [vmem:[%s3494 + $0x2da] sm:$0xff]
    %v3681 = vld [vmem:[%s3494 + $0x2ea] sm:$0xff]
    %v3682 = vld [vmem:[%s3494 + $0x2f2] sm:$0xff]
    %v3683 = vld [vmem:[%s3494 + $0x302] sm:$0xff]
    %v3684 = vld [vmem:[%s3494 + $0x30a] sm:$0xff]
    %v3685 = vld [vmem:[%s3494 + $0x31a] sm:$0xff]
    %v3686 = vld [vmem:[%s3494 + $0x322] sm:$0xff]
    %3751 = vrot.lane.b32.xlu0 %v3559, 64
    %v3752 = vpop.permute.xlu0 %3751
    %3753 = vrot.lane.b32.xlu0 %v3560, 64
    %v3754 = vpop.permute.xlu0 %3753
    %3755 = vrot.lane.b32.xlu0 %v3561, 64
    %v3756 = vpop.permute.xlu0 %3755
    %3757 = vrot.lane.b32.xlu0 %v3562, 64
    %v3758 = vpop.permute.xlu0 %3757
    %3759 = vrot.lane.b32.xlu0 %v3563, 64
    %v3760 = vpop.permute.xlu0 %3759
    %3761 = vrot.lane.b32.xlu0 %v3564, 64
    %v3762 = vpop.permute.xlu0 %3761
    %3763 = vrot.lane.b32.xlu0 %v3565, 64
    %v3764 = vpop.permute.xlu0 %3763
    %3765 = vrot.lane.b32.xlu0 %v3566, 64
    %v3766 = vpop.permute.xlu0 %3765
    %3767 = vrot.lane.b32.xlu0 %v3567, 64
    %v3768 = vpop.permute.xlu0 %3767
    %3769 = vrot.lane.b32.xlu0 %v3568, 64
    %v3770 = vpop.permute.xlu0 %3769
    %3771 = vrot.lane.b32.xlu0 %v3569, 64
    %v3772 = vpop.permute.xlu0 %3771
    %3773 = vrot.lane.b32.xlu0 %v3570, 64
    %v3774 = vpop.permute.xlu0 %3773
    %3775 = vrot.lane.b32.xlu0 %v3571, 64
    %v3776 = vpop.permute.xlu0 %3775
    %3777 = vrot.lane.b32.xlu0 %v3572, 64
    %v3778 = vpop.permute.xlu0 %3777
    %3779 = vrot.lane.b32.xlu0 %v3573, 64
    %v3780 = vpop.permute.xlu0 %3779
    %3781 = vrot.lane.b32.xlu0 %v3574, 64
    %v3782 = vpop.permute.xlu0 %3781
    %3783 = vrot.lane.b32.xlu0 %v3575, 64
    %v3784 = vpop.permute.xlu0 %3783
    %3785 = vrot.lane.b32.xlu0 %v3576, 64
    %v3786 = vpop.permute.xlu0 %3785
    %3787 = vrot.lane.b32.xlu0 %v3577, 64
    %v3788 = vpop.permute.xlu0 %3787
    %3789 = vrot.lane.b32.xlu0 %v3578, 64
    %v3790 = vpop.permute.xlu0 %3789
    %3791 = vrot.lane.b32.xlu0 %v3579, 64
    %v3792 = vpop.permute.xlu0 %3791
    %3793 = vrot.lane.b32.xlu0 %v3580, 64
    %v3794 = vpop.permute.xlu0 %3793
    %3795 = vrot.lane.b32.xlu0 %v3581, 64
    %v3796 = vpop.permute.xlu0 %3795
    %3797 = vrot.lane.b32.xlu0 %v3582, 64
    %v3798 = vpop.permute.xlu0 %3797
    %3799 = vrot.lane.b32.xlu0 %v3583, 64
    %v3800 = vpop.permute.xlu0 %3799
    %3801 = vrot.lane.b32.xlu0 %v3584, 64
    %v3802 = vpop.permute.xlu0 %3801
    %3803 = vrot.lane.b32.xlu0 %v3585, 64
    %v3804 = vpop.permute.xlu0 %3803
    %3805 = vrot.lane.b32.xlu0 %v3586, 64
    %v3806 = vpop.permute.xlu0 %3805
    %3807 = vrot.lane.b32.xlu0 %v3587, 64
    %v3808 = vpop.permute.xlu0 %3807
    %3809 = vrot.lane.b32.xlu0 %v3588, 64
    %v3810 = vpop.permute.xlu0 %3809
    %3811 = vrot.lane.b32.xlu0 %v3589, 64
    %v3812 = vpop.permute.xlu0 %3811
    %3813 = vrot.lane.b32.xlu0 %v3590, 64
    %v3814 = vpop.permute.xlu0 %3813
    %3815 = vrot.lane.b32.xlu0 %v3591, 64
    %v3816 = vpop.permute.xlu0 %3815
    %3817 = vrot.lane.b32.xlu0 %v3592, 64
    %v3818 = vpop.permute.xlu0 %3817
    %3819 = vrot.lane.b32.xlu0 %v3593, 64
    %v3820 = vpop.permute.xlu0 %3819
    %3821 = vrot.lane.b32.xlu0 %v3594, 64
    %v3822 = vpop.permute.xlu0 %3821
    %3823 = vrot.lane.b32.xlu0 %v3595, 64
    %v3824 = vpop.permute.xlu0 %3823
    %3825 = vrot.lane.b32.xlu0 %v3596, 64
    %v3826 = vpop.permute.xlu0 %3825
    %3827 = vrot.lane.b32.xlu0 %v3597, 64
    %v3828 = vpop.permute.xlu0 %3827
    %3829 = vrot.lane.b32.xlu0 %v3598, 64
    %v3830 = vpop.permute.xlu0 %3829
    %3831 = vrot.lane.b32.xlu0 %v3599, 64
    %v3832 = vpop.permute.xlu0 %3831
    %3833 = vrot.lane.b32.xlu0 %v3600, 64
    %v3834 = vpop.permute.xlu0 %3833
    %3835 = vrot.lane.b32.xlu0 %v3601, 64
    %v3836 = vpop.permute.xlu0 %3835
    %3837 = vrot.lane.b32.xlu0 %v3602, 64
    %v3838 = vpop.permute.xlu0 %3837
    %3839 = vrot.lane.b32.xlu0 %v3603, 64
    %v3840 = vpop.permute.xlu0 %3839
    %3841 = vrot.lane.b32.xlu0 %v3604, 64
    %v3842 = vpop.permute.xlu0 %3841
    %3843 = vrot.lane.b32.xlu0 %v3605, 64
    %v3844 = vpop.permute.xlu0 %3843
    %3845 = vrot.lane.b32.xlu0 %v3606, 64
    %v3846 = vpop.permute.xlu0 %3845
    %3847 = vrot.lane.b32.xlu0 %v3607, 64
    %v3848 = vpop.permute.xlu0 %3847
    %3849 = vrot.lane.b32.xlu0 %v3608, 64
    %v3850 = vpop.permute.xlu0 %3849
    %3851 = vrot.lane.b32.xlu0 %v3609, 64
    %v3852 = vpop.permute.xlu0 %3851
    %3853 = vrot.lane.b32.xlu0 %v3610, 64
    %v3854 = vpop.permute.xlu0 %3853
    %3855 = vrot.lane.b32.xlu0 %v3611, 64
    %v3856 = vpop.permute.xlu0 %3855
    %3857 = vrot.lane.b32.xlu0 %v3612, 64
    %v3858 = vpop.permute.xlu0 %3857
    %3859 = vrot.lane.b32.xlu0 %v3613, 64
    %v3860 = vpop.permute.xlu0 %3859
    %3861 = vrot.lane.b32.xlu0 %v3614, 64
    %v3862 = vpop.permute.xlu0 %3861
    %3863 = vrot.lane.b32.xlu0 %v3615, 64
    %v3864 = vpop.permute.xlu0 %3863
    %3865 = vrot.lane.b32.xlu0 %v3616, 64
    %v3866 = vpop.permute.xlu0 %3865
    %3867 = vrot.lane.b32.xlu0 %v3617, 64
    %v3868 = vpop.permute.xlu0 %3867
    %3869 = vrot.lane.b32.xlu0 %v3618, 64
    %v3870 = vpop.permute.xlu0 %3869
    %3871 = vrot.lane.b32.xlu0 %v3619, 64
    %v3872 = vpop.permute.xlu0 %3871
    %3873 = vrot.lane.b32.xlu0 %v3620, 64
    %v3874 = vpop.permute.xlu0 %3873
    %3875 = vrot.lane.b32.xlu0 %v3621, 64
    %v3876 = vpop.permute.xlu0 %3875
    %3877 = vrot.lane.b32.xlu0 %v3622, 64
    %v3878 = vpop.permute.xlu0 %3877
    %v3943 = vsel %vm1156, %v3495, %v3752
    %v3944 = vsel %vm1156, %v3496, %v3754
    %v3945 = vsel %vm1156, %v3497, %v3756
    %v3946 = vsel %vm1156, %v3498, %v3758
    %v3947 = vsel %vm1156, %v3499, %v3760
    %v3948 = vsel %vm1156, %v3500, %v3762
    %v3949 = vsel %vm1156, %v3501, %v3764
    %v3950 = vsel %vm1156, %v3502, %v3766
    %v3951 = vsel %vm1156, %v3503, %v3768
    %v3952 = vsel %vm1156, %v3504, %v3770
    %v3953 = vsel %vm1156, %v3505, %v3772
    %v3954 = vsel %vm1156, %v3506, %v3774
    %v3955 = vsel %vm1156, %v3507, %v3776
    %v3956 = vsel %vm1156, %v3508, %v3778
    %v3957 = vsel %vm1156, %v3509, %v3780
    %v3958 = vsel %vm1156, %v3510, %v3782
    %v3959 = vsel %vm1156, %v3511, %v3784
    %v3960 = vsel %vm1156, %v3512, %v3786
    %v3961 = vsel %vm1156, %v3513, %v3788
    %v3962 = vsel %vm1156, %v3514, %v3790
    %v3963 = vsel %vm1156, %v3515, %v3792
    %v3964 = vsel %vm1156, %v3516, %v3794
    %v3965 = vsel %vm1156, %v3517, %v3796
    %v3966 = vsel %vm1156, %v3518, %v3798
    %v3967 = vsel %vm1156, %v3519, %v3800
    %v3968 = vsel %vm1156, %v3520, %v3802
    %v3969 = vsel %vm1156, %v3521, %v3804
    %v3970 = vsel %vm1156, %v3522, %v3806
    %v3971 = vsel %vm1156, %v3523, %v3808
    %v3972 = vsel %vm1156, %v3524, %v3810
    %v3973 = vsel %vm1156, %v3525, %v3812
    %v3974 = vsel %vm1156, %v3526, %v3814
    %v3975 = vsel %vm1156, %v3527, %v3816
    %v3976 = vsel %vm1156, %v3528, %v3818
    %v3977 = vsel %vm1156, %v3529, %v3820
    %v3978 = vsel %vm1156, %v3530, %v3822
    %v3979 = vsel %vm1156, %v3531, %v3824
    %v3980 = vsel %vm1156, %v3532, %v3826
    %v3981 = vsel %vm1156, %v3533, %v3828
    %v3982 = vsel %vm1156, %v3534, %v3830
    %v3983 = vsel %vm1156, %v3535, %v3832
    %v3984 = vsel %vm1156, %v3536, %v3834
    %v3985 = vsel %vm1156, %v3537, %v3836
    %v3986 = vsel %vm1156, %v3538, %v3838
    %v3987 = vsel %vm1156, %v3539, %v3840
    %v3988 = vsel %vm1156, %v3540, %v3842
    %v3989 = vsel %vm1156, %v3541, %v3844
    %v3990 = vsel %vm1156, %v3542, %v3846
    %v3991 = vsel %vm1156, %v3543, %v3848
    %v3992 = vsel %vm1156, %v3544, %v3850
    %v3993 = vsel %vm1156, %v3545, %v3852
    %v3994 = vsel %vm1156, %v3546, %v3854
    %v3995 = vsel %vm1156, %v3547, %v3856
    %v3996 = vsel %vm1156, %v3548, %v3858
    %v3997 = vsel %vm1156, %v3549, %v3860
    %v3998 = vsel %vm1156, %v3550, %v3862
    %v3999 = vsel %vm1156, %v3551, %v3864
    %v4000 = vsel %vm1156, %v3552, %v3866
    %v4001 = vsel %vm1156, %v3553, %v3868
    %v4002 = vsel %vm1156, %v3554, %v3870
    %v4003 = vsel %vm1156, %v3555, %v3872
    %v4004 = vsel %vm1156, %v3556, %v3874
    %v4005 = vsel %vm1156, %v3557, %v3876
    %v4006 = vsel %vm1156, %v3558, %v3878
    %s4007 = scalar_lea.vmem [#allocation9], 384
    %v4008 = vld [vmem:[%s4007] sm:$0xff]
    %v4009 = vld [vmem:[%s4007 + $0x8] sm:$0xff]
    %v4010 = vld [vmem:[%s4007 + $0x10] sm:$0xff]
    %v4011 = vld [vmem:[%s4007 + $0x18] sm:$0xff]
    %v4012 = vld [vmem:[%s4007 + $0x20] sm:$0xff]
    %v4013 = vld [vmem:[%s4007 + $0x28] sm:$0xff]
    %v4014 = vld [vmem:[%s4007 + $0x30] sm:$0xff]
    %v4015 = vld [vmem:[%s4007 + $0x38] sm:$0xff]
    %v4016 = vld [vmem:[%s4007 + $0x40] sm:$0xff]
    %v4017 = vld [vmem:[%s4007 + $0x48] sm:$0xff]
    %v4018 = vld [vmem:[%s4007 + $0x50] sm:$0xff]
    %v4019 = vld [vmem:[%s4007 + $0x58] sm:$0xff]
    %v4020 = vld [vmem:[%s4007 + $0x60] sm:$0xff]
    %v4021 = vld [vmem:[%s4007 + $0x68] sm:$0xff]
    %v4022 = vld [vmem:[%s4007 + $0x70] sm:$0xff]
    %v4023 = vld [vmem:[%s4007 + $0x78] sm:$0xff]
    %v4024 = vld [vmem:[%s4007 + $0x80] sm:$0xff]
    %v4025 = vld [vmem:[%s4007 + $0x88] sm:$0xff]
    %v4026 = vld [vmem:[%s4007 + $0x90] sm:$0xff]
    %v4027 = vld [vmem:[%s4007 + $0x98] sm:$0xff]
    %v4028 = vld [vmem:[%s4007 + $0xa0] sm:$0xff]
    %v4029 = vld [vmem:[%s4007 + $0xa8] sm:$0xff]
    %v4030 = vld [vmem:[%s4007 + $0xb0] sm:$0xff]
    %v4031 = vld [vmem:[%s4007 + $0xb8] sm:$0xff]
    %v4033 = vsel %vm1156, %v3623, 0
    %v4036 = vsel %vm1156, %v3624, 0
    %v4039 = vsel %vm1156, %v3625, 0
    %v4042 = vsel %vm1156, %v3626, 0
    %v4045 = vsel %vm1156, %v3627, 0
    %v4048 = vsel %vm1156, %v3628, 0
    %v4051 = vsel %vm1156, %v3629, 0
    %v4054 = vsel %vm1156, %v3630, 0
    %v4057 = vsel %vm1156, %v3631, 0
    %v4060 = vsel %vm1156, %v3632, 0
    %v4063 = vsel %vm1156, %v3633, 0
    %v4066 = vsel %vm1156, %v3634, 0
    %v4069 = vsel %vm1156, %v3635, 0
    %v4072 = vsel %vm1156, %v3636, 0
    %v4075 = vsel %vm1156, %v3637, 0
    %v4078 = vsel %vm1156, %v3638, 0
    %v4081 = vsel %vm1156, %v3639, 0
    %v4084 = vsel %vm1156, %v3640, 0
    %v4087 = vsel %vm1156, %v3641, 0
    %v4090 = vsel %vm1156, %v3642, 0
    %v4093 = vsel %vm1156, %v3643, 0
    %v4096 = vsel %vm1156, %v3644, 0
    %v4099 = vsel %vm1156, %v3645, 0
    %v4102 = vsel %vm1156, %v3646, 0
    %v4105 = vsel %vm1156, %v3647, 0
    %v4108 = vsel %vm1156, %v3648, 0
    %v4111 = vsel %vm1156, %v3649, 0
    %v4114 = vsel %vm1156, %v3650, 0
    %v4117 = vsel %vm1156, %v3651, 0
    %v4120 = vsel %vm1156, %v3652, 0
    %v4123 = vsel %vm1156, %v3653, 0
    %v4126 = vsel %vm1156, %v3654, 0
    %v4129 = vsel %vm1156, %v3655, 0
    %v4132 = vsel %vm1156, %v3656, 0
    %v4135 = vsel %vm1156, %v3657, 0
    %v4138 = vsel %vm1156, %v3658, 0
    %v4141 = vsel %vm1156, %v3659, 0
    %v4144 = vsel %vm1156, %v3660, 0
    %v4147 = vsel %vm1156, %v3661, 0
    %v4150 = vsel %vm1156, %v3662, 0
    %v4153 = vsel %vm1156, %v3663, 0
    %v4156 = vsel %vm1156, %v3664, 0
    %v4159 = vsel %vm1156, %v3665, 0
    %v4162 = vsel %vm1156, %v3666, 0
    %v4165 = vsel %vm1156, %v3667, 0
    %v4168 = vsel %vm1156, %v3668, 0
    %v4171 = vsel %vm1156, %v3669, 0
    %v4174 = vsel %vm1156, %v3670, 0
    %v4177 = vsel %vm1156, %v3671, 0
    %v4180 = vsel %vm1156, %v3672, 0
    %v4183 = vsel %vm1156, %v3673, 0
    %v4186 = vsel %vm1156, %v3674, 0
    %v4189 = vsel %vm1156, %v3675, 0
    %v4192 = vsel %vm1156, %v3676, 0
    %v4195 = vsel %vm1156, %v3677, 0
    %v4198 = vsel %vm1156, %v3678, 0
    %v4201 = vsel %vm1156, %v3679, 0
    %v4204 = vsel %vm1156, %v3680, 0
    %v4207 = vsel %vm1156, %v3681, 0
    %v4210 = vsel %vm1156, %v3682, 0
    %v4213 = vsel %vm1156, %v3683, 0
    %v4216 = vsel %vm1156, %v3684, 0
    %v4219 = vsel %vm1156, %v3685, 0
    %v4222 = vsel %vm1156, %v3686, 0
    %4224 = vmatprep.subr.mxu0 0.0
    %4225 = vmatpush1.msra.mxu0 %v4008
    %4226 = vmatprep.subr.mxu0 0.0
    %4227 = vmatpush1.msra.mxu0 %v4009
    %4228 = vmatprep.subr.mxu0 0.0
    %4229 = vmatpush1.msra.mxu0 %v4010
    %4230 = vmatprep.subr.mxu0 0.0
    %4231 = vmatpush1.msra.mxu0 %v4011
    %4232 = vmatprep.subr.mxu0 0.0
    %4233 = vmatpush1.msra.mxu0 %v4012
    %4234 = vmatprep.subr.mxu0 0.0
    %4235 = vmatpush1.msra.mxu0 %v4013
    %4236 = vmatprep.subr.mxu0 0.0
    %4237 = vmatpush1.msra.mxu0 %v4014
    %4238 = vmatprep.subr.mxu0 0.0
    %4239 = vmatpush1.msra.mxu0 %v4015
    %4240 = vmatprep.subr.mxu0 0.0
    %4241 = vmatpush1.msra.mxu0 %v4016
    %4242 = vmatprep.subr.mxu0 0.0
    %4243 = vmatpush1.msra.mxu0 %v4017
    %4244 = vmatprep.subr.mxu0 0.0
    %4245 = vmatpush1.msra.mxu0 %v4018
    %4246 = vmatprep.subr.mxu0 0.0
    %4247 = vmatpush1.msra.mxu0 %v4019
    %4248 = vmatprep.subr.mxu0 0.0
    %4249 = vmatpush1.msra.mxu0 %v4020
    %4250 = vmatprep.subr.mxu0 0.0
    %4251 = vmatpush1.msra.mxu0 %v4021
    %4252 = vmatprep.subr.mxu0 0.0
    %4253 = vmatpush1.msra.mxu0 %v4022
    %4254 = vmatprep.subr.mxu0 0.0
    %4255 = vmatpush1.msra.mxu0 %v4023
    %4256 = vmatprep.subr.mxu0 0.0
    %4257 = vmatpush1.msra.mxu0 %v4024
    %4258 = vmatprep.subr.mxu0 0.0
    %4259 = vmatpush1.msra.mxu0 %v4025
    %4260 = vmatprep.subr.mxu0 0.0
    %4261 = vmatpush1.msra.mxu0 %v4026
    %4262 = vmatprep.subr.mxu0 0.0
    %4263 = vmatpush1.msra.mxu0 %v4027
    %4264 = vmatprep.subr.mxu0 0.0
    %4265 = vmatpush1.msra.mxu0 %v4028
    %4266 = vmatprep.subr.mxu0 0.0
    %4267 = vmatpush1.msra.mxu0 %v4029
    %4268 = vmatprep.subr.mxu0 0.0
    %4269 = vmatpush1.msra.mxu0 %v4030
    %4270 = vmatprep.subr.mxu0 0.0
    %4271 = vmatpush1.msra.mxu0 %v4031
    %4272 = vmatprep.subr.mxu0 0.0
    %4273 = vmatpush1.msra.mxu0 0.0
    %4274 = vmatprep.subr.mxu0 0.0
    %4275 = vmatpush1.msra.mxu0 0.0
    %4276 = vmatprep.subr.mxu0 0.0
    %4277 = vmatpush1.msra.mxu0 0.0
    %4278 = vmatprep.subr.mxu0 0.0
    %4279 = vmatpush1.msra.mxu0 0.0
    %4280 = vmatprep.subr.mxu0 0.0
    %4281 = vmatpush1.msra.mxu0 0.0
    %4282 = vmatprep.subr.mxu0 0.0
    %4283 = vmatpush1.msra.mxu0 0.0
    %4284 = vmatprep.subr.mxu0 0.0
    %4285 = vmatpush1.msra.mxu0 0.0
    %4286 = vmatprep.subr.mxu0 0.0
    %4287 = vmatpush1.msra.mxu0 0.0
    %4288 = vmatprep.mubr.f32.mxu0 %v4033
    %4289 = vmatmul.mubr.f32.gmra.mrb[0].mxu0 %v3943
    %v4290 = vpop.f32.mrb[0].mxu0
    %v4291 = vadd.f32 0.0, %v4290
    %v4292 = vpop.f32.mrb[0].mxu0
    %4293 = vmatprep.mubr.f32.mxu0 %v4036
    %4294 = vmatmul.mubr.f32.gmra.mrb[0].mxu0 %v3944
    %v4295 = vpop.f32.mrb[0].mxu0
    %v4296 = vadd.f32 0.0, %v4295
    %v4297 = vpop.f32.mrb[0].mxu0
    %4298 = vmatprep.mubr.f32.mxu0 %v4039
    %4299 = vmatmul.mubr.f32.gmra.mrb[0].mxu0 %v3945
    %v4300 = vpop.f32.mrb[0].mxu0
    %v4301 = vadd.f32 0.0, %v4300
    %v4302 = vpop.f32.mrb[0].mxu0
    %4303 = vmatprep.mubr.f32.mxu0 %v4042
    %4304 = vmatmul.mubr.f32.gmra.mrb[0].mxu0 %v3946
    %v4305 = vpop.f32.mrb[0].mxu0
    %v4306 = vadd.f32 0.0, %v4305
    %v4307 = vpop.f32.mrb[0].mxu0
    %4308 = vmatprep.mubr.f32.mxu0 %v4045
    %4309 = vmatmul.mubr.f32.gmra.mrb[0].mxu0 %v3947
    %v4310 = vpop.f32.mrb[0].mxu0
    %v4311 = vadd.f32 0.0, %v4310
    %v4312 = vpop.f32.mrb[0].mxu0
    %4313 = vmatprep.mubr.f32.mxu0 %v4048
    %4314 = vmatmul.mubr.f32.gmra.mrb[0].mxu0 %v3948
    %v4315 = vpop.f32.mrb[0].mxu0
    %v4316 = vadd.f32 0.0, %v4315
    %v4317 = vpop.f32.mrb[0].mxu0
    %4318 = vmatprep.mubr.f32.mxu0 %v4051
    %4319 = vmatmul.mubr.f32.gmra.mrb[0].mxu0 %v3949
    %v4320 = vpop.f32.mrb[0].mxu0
    %v4321 = vadd.f32 0.0, %v4320
    %v4322 = vpop.f32.mrb[0].mxu0
    %4323 = vmatprep.mubr.f32.mxu0 %v4054
    %4324 = vmatmul.mubr.f32.gmra.mrb[0].mxu0 %v3950
    %v4325 = vpop.f32.mrb[0].mxu0
    %v4326 = vadd.f32 0.0, %v4325
    %v4327 = vpop.f32.mrb[0].mxu0
    %4328 = vmatprep.mubr.f32.mxu0 %v4057
    %4329 = vmatmul.mubr.f32.gmra.mrb[0].mxu0 %v3951
    %v4330 = vpop.f32.mrb[0].mxu0
    %v4331 = vadd.f32 0.0, %v4330
    %v4332 = vpop.f32.mrb[0].mxu0
    %4333 = vmatprep.mubr.f32.mxu0 %v4060
    %4334 = vmatmul.mubr.f32.gmra.mrb[0].mxu0 %v3952
    %v4335 = vpop.f32.mrb[0].mxu0
    %v4336 = vadd.f32 0.0, %v4335
    %v4337 = vpop.f32.mrb[0].mxu0
    %4338 = vmatprep.mubr.f32.mxu0 %v4063
    %4339 = vmatmul.mubr.f32.gmra.mrb[0].mxu0 %v3953
    %v4340 = vpop.f32.mrb[0].mxu0
    %v4341 = vadd.f32 0.0, %v4340
    %v4342 = vpop.f32.mrb[0].mxu0
    %4343 = vmatprep.mubr.f32.mxu0 %v4066
    %4344 = vmatmul.mubr.f32.gmra.mrb[0].mxu0 %v3954
    %v4345 = vpop.f32.mrb[0].mxu0
    %v4346 = vadd.f32 0.0, %v4345
    %v4347 = vpop.f32.mrb[0].mxu0
    %4348 = vmatprep.mubr.f32.mxu0 %v4069
    %4349 = vmatmul.mubr.f32.gmra.mrb[0].mxu0 %v3955
    %v4350 = vpop.f32.mrb[0].mxu0
    %v4351 = vadd.f32 0.0, %v4350
    %v4352 = vpop.f32.mrb[0].mxu0
    %4353 = vmatprep.mubr.f32.mxu0 %v4072
    %4354 = vmatmul.mubr.f32.gmra.mrb[0].mxu0 %v3956
    %v4355 = vpop.f32.mrb[0].mxu0
    %v4356 = vadd.f32 0.0, %v4355
    %v4357 = vpop.f32.mrb[0].mxu0
    %4358 = vmatprep.mubr.f32.mxu0 %v4075
    %4359 = vmatmul.mubr.f32.gmra.mrb[0].mxu0 %v3957
    %v4360 = vpop.f32.mrb[0].mxu0
    %v4361 = vadd.f32 0.0, %v4360
    %v4362 = vpop.f32.mrb[0].mxu0
    %4363 = vmatprep.mubr.f32.mxu0 %v4078
    %4364 = vmatmul.mubr.f32.gmra.mrb[0].mxu0 %v3958
    %v4365 = vpop.f32.mrb[0].mxu0
    %v4366 = vadd.f32 0.0, %v4365
    %v4367 = vpop.f32.mrb[0].mxu0
    %4368 = vmatprep.mubr.f32.mxu0 %v4081
    %4369 = vmatmul.mubr.f32.gmra.mrb[0].mxu0 %v3959
    %v4370 = vpop.f32.mrb[0].mxu0
    %v4371 = vadd.f32 0.0, %v4370
    %v4372 = vpop.f32.mrb[0].mxu0
    %4373 = vmatprep.mubr.f32.mxu0 %v4084
    %4374 = vmatmul.mubr.f32.gmra.mrb[0].mxu0 %v3960
    %v4375 = vpop.f32.mrb[0].mxu0
    %v4376 = vadd.f32 0.0, %v4375
    %v4377 = vpop.f32.mrb[0].mxu0
    %4378 = vmatprep.mubr.f32.mxu0 %v4087
    %4379 = vmatmul.mubr.f32.gmra.mrb[0].mxu0 %v3961
    %v4380 = vpop.f32.mrb[0].mxu0
    %v4381 = vadd.f32 0.0, %v4380
    %v4382 = vpop.f32.mrb[0].mxu0
    %4383 = vmatprep.mubr.f32.mxu0 %v4090
    %4384 = vmatmul.mubr.f32.gmra.mrb[0].mxu0 %v3962
    %v4385 = vpop.f32.mrb[0].mxu0
    %v4386 = vadd.f32 0.0, %v4385
    %v4387 = vpop.f32.mrb[0].mxu0
    %4388 = vmatprep.mubr.f32.mxu0 %v4093
    %4389 = vmatmul.mubr.f32.gmra.mrb[0].mxu0 %v3963
    %v4390 = vpop.f32.mrb[0].mxu0
    %v4391 = vadd.f32 0.0, %v4390
    %v4392 = vpop.f32.mrb[0].mxu0
    %4393 = vmatprep.mubr.f32.mxu0 %v4096
    %4394 = vmatmul.mubr.f32.gmra.mrb[0].mxu0 %v3964
    %v4395 = vpop.f32.mrb[0].mxu0
    %v4396 = vadd.f32 0.0, %v4395
    %v4397 = vpop.f32.mrb[0].mxu0
    %4398 = vmatprep.mubr.f32.mxu0 %v4099
    %4399 = vmatmul.mubr.f32.gmra.mrb[0].mxu0 %v3965
    %v4400 = vpop.f32.mrb[0].mxu0
    %v4401 = vadd.f32 0.0, %v4400
    %v4402 = vpop.f32.mrb[0].mxu0
    %4403 = vmatprep.mubr.f32.mxu0 %v4102
    %4404 = vmatmul.mubr.f32.gmra.mrb[0].mxu0 %v3966
    %v4405 = vpop.f32.mrb[0].mxu0
    %v4406 = vadd.f32 0.0, %v4405
    %v4407 = vpop.f32.mrb[0].mxu0
    %4408 = vmatprep.mubr.f32.mxu0 %v4105
    %4409 = vmatmul.mubr.f32.gmra.mrb[0].mxu0 %v3967
    %v4410 = vpop.f32.mrb[0].mxu0
    %v4411 = vadd.f32 0.0, %v4410
    %v4412 = vpop.f32.mrb[0].mxu0
    %4413 = vmatprep.mubr.f32.mxu0 %v4108
    %4414 = vmatmul.mubr.f32.gmra.mrb[0].mxu0 %v3968
    %v4415 = vpop.f32.mrb[0].mxu0
    %v4416 = vadd.f32 0.0, %v4415
    %v4417 = vpop.f32.mrb[0].mxu0
    %4418 = vmatprep.mubr.f32.mxu0 %v4111
    %4419 = vmatmul.mubr.f32.gmra.mrb[0].mxu0 %v3969
    %v4420 = vpop.f32.mrb[0].mxu0
    %v4421 = vadd.f32 0.0, %v4420
    %v4422 = vpop.f32.mrb[0].mxu0
    %4423 = vmatprep.mubr.f32.mxu0 %v4114
    %4424 = vmatmul.mubr.f32.gmra.mrb[0].mxu0 %v3970
    %v4425 = vpop.f32.mrb[0].mxu0
    %v4426 = vadd.f32 0.0, %v4425
    %v4427 = vpop.f32.mrb[0].mxu0
    %4428 = vmatprep.mubr.f32.mxu0 %v4117
    %4429 = vmatmul.mubr.f32.gmra.mrb[0].mxu0 %v3971
    %v4430 = vpop.f32.mrb[0].mxu0
    %v4431 = vadd.f32 0.0, %v4430
    %v4432 = vpop.f32.mrb[0].mxu0
    %4433 = vmatprep.mubr.f32.mxu0 %v4120
    %4434 = vmatmul.mubr.f32.gmra.mrb[0].mxu0 %v3972
    %v4435 = vpop.f32.mrb[0].mxu0
    %v4436 = vadd.f32 0.0, %v4435
    %v4437 = vpop.f32.mrb[0].mxu0
    %4438 = vmatprep.mubr.f32.mxu0 %v4123
    %4439 = vmatmul.mubr.f32.gmra.mrb[0].mxu0 %v3973
    %v4440 = vpop.f32.mrb[0].mxu0
    %v4441 = vadd.f32 0.0, %v4440
    %v4442 = vpop.f32.mrb[0].mxu0
    %4443 = vmatprep.mubr.f32.mxu0 %v4126
    %4444 = vmatmul.mubr.f32.gmra.mrb[0].mxu0 %v3974
    %v4445 = vpop.f32.mrb[0].mxu0
    %v4446 = vadd.f32 0.0, %v4445
    %v4447 = vpop.f32.mrb[0].mxu0
    %4448 = vmatprep.mubr.f32.mxu0 %v4129
    %4449 = vmatmul.mubr.f32.gmra.mrb[0].mxu0 %v3975
    %v4450 = vpop.f32.mrb[0].mxu0
    %v4451 = vadd.f32 0.0, %v4450
    %v4452 = vpop.f32.mrb[0].mxu0
    %4453 = vmatprep.mubr.f32.mxu0 %v4132
    %4454 = vmatmul.mubr.f32.gmra.mrb[0].mxu0 %v3976
    %v4455 = vpop.f32.mrb[0].mxu0
    %v4456 = vadd.f32 0.0, %v4455
    %v4457 = vpop.f32.mrb[0].mxu0
    %4458 = vmatprep.mubr.f32.mxu0 %v4135
    %4459 = vmatmul.mubr.f32.gmra.mrb[0].mxu0 %v3977
    %v4460 = vpop.f32.mrb[0].mxu0
    %v4461 = vadd.f32 0.0, %v4460
    %v4462 = vpop.f32.mrb[0].mxu0
    %4463 = vmatprep.mubr.f32.mxu0 %v4138
    %4464 = vmatmul.mubr.f32.gmra.mrb[0].mxu0 %v3978
    %v4465 = vpop.f32.mrb[0].mxu0
    %v4466 = vadd.f32 0.0, %v4465
    %v4467 = vpop.f32.mrb[0].mxu0
    %4468 = vmatprep.mubr.f32.mxu0 %v4141
    %4469 = vmatmul.mubr.f32.gmra.mrb[0].mxu0 %v3979
    %v4470 = vpop.f32.mrb[0].mxu0
    %v4471 = vadd.f32 0.0, %v4470
    %v4472 = vpop.f32.mrb[0].mxu0
    %4473 = vmatprep.mubr.f32.mxu0 %v4144
    %4474 = vmatmul.mubr.f32.gmra.mrb[0].mxu0 %v3980
    %v4475 = vpop.f32.mrb[0].mxu0
    %v4476 = vadd.f32 0.0, %v4475
    %v4477 = vpop.f32.mrb[0].mxu0
    %4478 = vmatprep.mubr.f32.mxu0 %v4147
    %4479 = vmatmul.mubr.f32.gmra.mrb[0].mxu0 %v3981
    %v4480 = vpop.f32.mrb[0].mxu0
    %v4481 = vadd.f32 0.0, %v4480
    %v4482 = vpop.f32.mrb[0].mxu0
    %4483 = vmatprep.mubr.f32.mxu0 %v4150
    %4484 = vmatmul.mubr.f32.gmra.mrb[0].mxu0 %v3982
    %v4485 = vpop.f32.mrb[0].mxu0
    %v4486 = vadd.f32 0.0, %v4485
    %v4487 = vpop.f32.mrb[0].mxu0
    %4488 = vmatprep.mubr.f32.mxu0 %v4153
    %4489 = vmatmul.mubr.f32.gmra.mrb[0].mxu0 %v3983
    %v4490 = vpop.f32.mrb[0].mxu0
    %v4491 = vadd.f32 0.0, %v4490
    %v4492 = vpop.f32.mrb[0].mxu0
    %4493 = vmatprep.mubr.f32.mxu0 %v4156
    %4494 = vmatmul.mubr.f32.gmra.mrb[0].mxu0 %v3984
    %v4495 = vpop.f32.mrb[0].mxu0
    %v4496 = vadd.f32 0.0, %v4495
    %v4497 = vpop.f32.mrb[0].mxu0
    %4498 = vmatprep.mubr.f32.mxu0 %v4159
    %4499 = vmatmul.mubr.f32.gmra.mrb[0].mxu0 %v3985
    %v4500 = vpop.f32.mrb[0].mxu0
    %v4501 = vadd.f32 0.0, %v4500
    %v4502 = vpop.f32.mrb[0].mxu0
    %4503 = vmatprep.mubr.f32.mxu0 %v4162
    %4504 = vmatmul.mubr.f32.gmra.mrb[0].mxu0 %v3986
    %v4505 = vpop.f32.mrb[0].mxu0
    %v4506 = vadd.f32 0.0, %v4505
    %v4507 = vpop.f32.mrb[0].mxu0
    %4508 = vmatprep.mubr.f32.mxu0 %v4165
    %4509 = vmatmul.mubr.f32.gmra.mrb[0].mxu0 %v3987
    %v4510 = vpop.f32.mrb[0].mxu0
    %v4511 = vadd.f32 0.0, %v4510
    %v4512 = vpop.f32.mrb[0].mxu0
    %4513 = vmatprep.mubr.f32.mxu0 %v4168
    %4514 = vmatmul.mubr.f32.gmra.mrb[0].mxu0 %v3988
    %v4515 = vpop.f32.mrb[0].mxu0
    %v4516 = vadd.f32 0.0, %v4515
    %v4517 = vpop.f32.mrb[0].mxu0
    %4518 = vmatprep.mubr.f32.mxu0 %v4171
    %4519 = vmatmul.mubr.f32.gmra.mrb[0].mxu0 %v3989
    %v4520 = vpop.f32.mrb[0].mxu0
    %v4521 = vadd.f32 0.0, %v4520
    %v4522 = vpop.f32.mrb[0].mxu0
    %4523 = vmatprep.mubr.f32.mxu0 %v4174
    %4524 = vmatmul.mubr.f32.gmra.mrb[0].mxu0 %v3990
    %v4525 = vpop.f32.mrb[0].mxu0
    %v4526 = vadd.f32 0.0, %v4525
    %v4527 = vpop.f32.mrb[0].mxu0
    %4528 = vmatprep.mubr.f32.mxu0 %v4177
    %4529 = vmatmul.mubr.f32.gmra.mrb[0].mxu0 %v3991
    %v4530 = vpop.f32.mrb[0].mxu0
    %v4531 = vadd.f32 0.0, %v4530
    %v4532 = vpop.f32.mrb[0].mxu0
    %4533 = vmatprep.mubr.f32.mxu0 %v4180
    %4534 = vmatmul.mubr.f32.gmra.mrb[0].mxu0 %v3992
    %v4535 = vpop.f32.mrb[0].mxu0
    %v4536 = vadd.f32 0.0, %v4535
    %v4537 = vpop.f32.mrb[0].mxu0
    %4538 = vmatprep.mubr.f32.mxu0 %v4183
    %4539 = vmatmul.mubr.f32.gmra.mrb[0].mxu0 %v3993
    %v4540 = vpop.f32.mrb[0].mxu0
    %v4541 = vadd.f32 0.0, %v4540
    %v4542 = vpop.f32.mrb[0].mxu0
    %4543 = vmatprep.mubr.f32.mxu0 %v4186
    %4544 = vmatmul.mubr.f32.gmra.mrb[0].mxu0 %v3994
    %v4545 = vpop.f32.mrb[0].mxu0
    %v4546 = vadd.f32 0.0, %v4545
    %v4547 = vpop.f32.mrb[0].mxu0
    %4548 = vmatprep.mubr.f32.mxu0 %v4189
    %4549 = vmatmul.mubr.f32.gmra.mrb[0].mxu0 %v3995
    %v4550 = vpop.f32.mrb[0].mxu0
    %v4551 = vadd.f32 0.0, %v4550
    %v4552 = vpop.f32.mrb[0].mxu0
    %4553 = vmatprep.mubr.f32.mxu0 %v4192
    %4554 = vmatmul.mubr.f32.gmra.mrb[0].mxu0 %v3996
    %v4555 = vpop.f32.mrb[0].mxu0
    %v4556 = vadd.f32 0.0, %v4555
    %v4557 = vpop.f32.mrb[0].mxu0
    %4558 = vmatprep.mubr.f32.mxu0 %v4195
    %4559 = vmatmul.mubr.f32.gmra.mrb[0].mxu0 %v3997
    %v4560 = vpop.f32.mrb[0].mxu0
    %v4561 = vadd.f32 0.0, %v4560
    %v4562 = vpop.f32.mrb[0].mxu0
    %4563 = vmatprep.mubr.f32.mxu0 %v4198
    %4564 = vmatmul.mubr.f32.gmra.mrb[0].mxu0 %v3998
    %v4565 = vpop.f32.mrb[0].mxu0
    %v4566 = vadd.f32 0.0, %v4565
    %v4567 = vpop.f32.mrb[0].mxu0
    %4568 = vmatprep.mubr.f32.mxu0 %v4201
    %4569 = vmatmul.mubr.f32.gmra.mrb[0].mxu0 %v3999
    %v4570 = vpop.f32.mrb[0].mxu0
    %v4571 = vadd.f32 0.0, %v4570
    %v4572 = vpop.f32.mrb[0].mxu0
    %4573 = vmatprep.mubr.f32.mxu0 %v4204
    %4574 = vmatmul.mubr.f32.gmra.mrb[0].mxu0 %v4000
    %v4575 = vpop.f32.mrb[0].mxu0
    %v4576 = vadd.f32 0.0, %v4575
    %v4577 = vpop.f32.mrb[0].mxu0
    %4578 = vmatprep.mubr.f32.mxu0 %v4207
    %4579 = vmatmul.mubr.f32.gmra.mrb[0].mxu0 %v4001
    %v4580 = vpop.f32.mrb[0].mxu0
    %v4581 = vadd.f32 0.0, %v4580
    %v4582 = vpop.f32.mrb[0].mxu0
    %4583 = vmatprep.mubr.f32.mxu0 %v4210
    %4584 = vmatmul.mubr.f32.gmra.mrb[0].mxu0 %v4002
    %v4585 = vpop.f32.mrb[0].mxu0
    %v4586 = vadd.f32 0.0, %v4585
    %v4587 = vpop.f32.mrb[0].mxu0
    %4588 = vmatprep.mubr.f32.mxu0 %v4213
    %4589 = vmatmul.mubr.f32.gmra.mrb[0].mxu0 %v4003
    %v4590 = vpop.f32.mrb[0].mxu0
    %v4591 = vadd.f32 0.0, %v4590
    %v4592 = vpop.f32.mrb[0].mxu0
    %4593 = vmatprep.mubr.f32.mxu0 %v4216
    %4594 = vmatmul.mubr.f32.gmra.mrb[0].mxu0 %v4004
    %v4595 = vpop.f32.mrb[0].mxu0
    %v4596 = vadd.f32 0.0, %v4595
    %v4597 = vpop.f32.mrb[0].mxu0
    %4598 = vmatprep.mubr.f32.mxu0 %v4219
    %4599 = vmatmul.mubr.f32.gmra.mrb[0].mxu0 %v4005
    %v4600 = vpop.f32.mrb[0].mxu0
    %v4601 = vadd.f32 0.0, %v4600
    %v4602 = vpop.f32.mrb[0].mxu0
    %4603 = vmatprep.mubr.f32.mxu0 %v4222
    %4604 = vmatmul.mubr.f32.gmra.mrb[0].mxu0 %v4006
    %v4605 = vpop.f32.mrb[0].mxu0
    %v4606 = vadd.f32 0.0, %v4605
    %v4607 = vpop.f32.mrb[0].mxu0
    %4608 = vdwg.mxu0
    %v4609 = vadd.f32 %v3176, %v4291
    %v4610 = vadd.f32 %v3181, %v4296
    %v4611 = vadd.f32 %v3186, %v4301
    %v4612 = vadd.f32 %v3191, %v4306
    %v4613 = vadd.f32 %v3196, %v4311
    %v4614 = vadd.f32 %v3201, %v4316
    %v4615 = vadd.f32 %v3206, %v4321
    %v4616 = vadd.f32 %v3211, %v4326
    %v4617 = vadd.f32 %v3216, %v4331
    %v4618 = vadd.f32 %v3221, %v4336
    %v4619 = vadd.f32 %v3226, %v4341
    %v4620 = vadd.f32 %v3231, %v4346
    %v4621 = vadd.f32 %v3236, %v4351
    %v4622 = vadd.f32 %v3241, %v4356
    %v4623 = vadd.f32 %v3246, %v4361
    %v4624 = vadd.f32 %v3251, %v4366
    %v4625 = vadd.f32 %v3256, %v4371
    %v4626 = vadd.f32 %v3261, %v4376
    %v4627 = vadd.f32 %v3266, %v4381
    %v4628 = vadd.f32 %v3271, %v4386
    %v4629 = vadd.f32 %v3276, %v4391
    %v4630 = vadd.f32 %v3281, %v4396
    %v4631 = vadd.f32 %v3286, %v4401
    %v4632 = vadd.f32 %v3291, %v4406
    %v4633 = vadd.f32 %v3296, %v4411
    %v4634 = vadd.f32 %v3301, %v4416
    %v4635 = vadd.f32 %v3306, %v4421
    %v4636 = vadd.f32 %v3311, %v4426
    %v4637 = vadd.f32 %v3316, %v4431
    %v4638 = vadd.f32 %v3321, %v4436
    %v4639 = vadd.f32 %v3326, %v4441
    %v4640 = vadd.f32 %v3331, %v4446
    %v4641 = vadd.f32 %v3336, %v4451
    %v4642 = vadd.f32 %v3341, %v4456
    %v4643 = vadd.f32 %v3346, %v4461
    %v4644 = vadd.f32 %v3351, %v4466
    %v4645 = vadd.f32 %v3356, %v4471
    %v4646 = vadd.f32 %v3361, %v4476
    %v4647 = vadd.f32 %v3366, %v4481
    %v4648 = vadd.f32 %v3371, %v4486
    %v4649 = vadd.f32 %v3376, %v4491
    %v4650 = vadd.f32 %v3381, %v4496
    %v4651 = vadd.f32 %v3386, %v4501
    %v4652 = vadd.f32 %v3391, %v4506
    %v4653 = vadd.f32 %v3396, %v4511
    %v4654 = vadd.f32 %v3401, %v4516
    %v4655 = vadd.f32 %v3406, %v4521
    %v4656 = vadd.f32 %v3411, %v4526
    %v4657 = vadd.f32 %v3416, %v4531
    %v4658 = vadd.f32 %v3421, %v4536
    %v4659 = vadd.f32 %v3426, %v4541
    %v4660 = vadd.f32 %v3431, %v4546
    %v4661 = vadd.f32 %v3436, %v4551
    %v4662 = vadd.f32 %v3441, %v4556
    %v4663 = vadd.f32 %v3446, %v4561
    %v4664 = vadd.f32 %v3451, %v4566
    %v4665 = vadd.f32 %v3456, %v4571
    %v4666 = vadd.f32 %v3461, %v4576
    %v4667 = vadd.f32 %v3466, %v4581
    %v4668 = vadd.f32 %v3471, %v4586
    %v4669 = vadd.f32 %v3476, %v4591
    %v4670 = vadd.f32 %v3481, %v4596
    %v4671 = vadd.f32 %v3486, %v4601
    %v4672 = vadd.f32 %v3491, %v4606
    %v4673 = vld [vmem:[#allocation11] sm:$0x1]
    %v4675 = vlaneseq
    %v4676 = vshrl.u32 %v4675, 7
    %v4677 = vsub.s32 0, %v4676
    %v4678 = vrot.slane %v4673, %v4677
    %v4680 = vadd.f32 %v4609, %v4678
    %v4681 = vadd.f32 %v4610, %v4678
    %v4682 = vadd.f32 %v4611, %v4678
    %v4683 = vadd.f32 %v4612, %v4678
    %v4684 = vadd.f32 %v4613, %v4678
    %v4685 = vadd.f32 %v4614, %v4678
    %v4686 = vadd.f32 %v4615, %v4678
    %v4687 = vadd.f32 %v4616, %v4678
    %v4688 = vadd.f32 %v4617, %v4678
    %v4689 = vadd.f32 %v4618, %v4678
    %v4690 = vadd.f32 %v4619, %v4678
    %v4691 = vadd.f32 %v4620, %v4678
    %v4692 = vadd.f32 %v4621, %v4678
    %v4693 = vadd.f32 %v4622, %v4678
    %v4694 = vadd.f32 %v4623, %v4678
    %v4695 = vadd.f32 %v4624, %v4678
    %v4696 = vadd.f32 %v4625, %v4678
    %v4697 = vadd.f32 %v4626, %v4678
    %v4698 = vadd.f32 %v4627, %v4678
    %v4699 = vadd.f32 %v4628, %v4678
    %v4700 = vadd.f32 %v4629, %v4678
    %v4701 = vadd.f32 %v4630, %v4678
    %v4702 = vadd.f32 %v4631, %v4678
    %v4703 = vadd.f32 %v4632, %v4678
    %v4704 = vadd.f32 %v4633, %v4678
    %v4705 = vadd.f32 %v4634, %v4678
    %v4706 = vadd.f32 %v4635, %v4678
    %v4707 = vadd.f32 %v4636, %v4678
    %v4708 = vadd.f32 %v4637, %v4678
    %v4709 = vadd.f32 %v4638, %v4678
    %v4710 = vadd.f32 %v4639, %v4678
    %v4711 = vadd.f32 %v4640, %v4678
    %v4712 = vadd.f32 %v4641, %v4678
    %v4713 = vadd.f32 %v4642, %v4678
    %v4714 = vadd.f32 %v4643, %v4678
    %v4715 = vadd.f32 %v4644, %v4678
    %v4716 = vadd.f32 %v4645, %v4678
    %v4717 = vadd.f32 %v4646, %v4678
    %v4718 = vadd.f32 %v4647, %v4678
    %v4719 = vadd.f32 %v4648, %v4678
    %v4720 = vadd.f32 %v4649, %v4678
    %v4721 = vadd.f32 %v4650, %v4678
    %v4722 = vadd.f32 %v4651, %v4678
    %v4723 = vadd.f32 %v4652, %v4678
    %v4724 = vadd.f32 %v4653, %v4678
    %v4725 = vadd.f32 %v4654, %v4678
    %v4726 = vadd.f32 %v4655, %v4678
    %v4727 = vadd.f32 %v4656, %v4678
    %v4728 = vadd.f32 %v4657, %v4678
    %v4729 = vadd.f32 %v4658, %v4678
    %v4730 = vadd.f32 %v4659, %v4678
    %v4731 = vadd.f32 %v4660, %v4678
    %v4732 = vadd.f32 %v4661, %v4678
    %v4733 = vadd.f32 %v4662, %v4678
    %v4734 = vadd.f32 %v4663, %v4678
    %v4735 = vadd.f32 %v4664, %v4678
    %v4736 = vadd.f32 %v4665, %v4678
    %v4737 = vadd.f32 %v4666, %v4678
    %v4738 = vadd.f32 %v4667, %v4678
    %v4739 = vadd.f32 %v4668, %v4678
    %v4740 = vadd.f32 %v4669, %v4678
    %v4741 = vadd.f32 %v4670, %v4678
    %v4742 = vadd.f32 %v4671, %v4678
    %v4743 = vadd.f32 %v4672, %v4678
    %v4744 = vmax.f32 %v4680, 0.0
    %v4745 = vmax.f32 %v4681, 0.0
    %v4746 = vmax.f32 %v4682, 0.0
    %v4747 = vmax.f32 %v4683, 0.0
    %v4748 = vmax.f32 %v4684, 0.0
    %v4749 = vmax.f32 %v4685, 0.0
    %v4750 = vmax.f32 %v4686, 0.0
    %v4751 = vmax.f32 %v4687, 0.0
    %v4752 = vmax.f32 %v4688, 0.0
    %v4753 = vmax.f32 %v4689, 0.0
    %v4754 = vmax.f32 %v4690, 0.0
    %v4755 = vmax.f32 %v4691, 0.0
    %v4756 = vmax.f32 %v4692, 0.0
    %v4757 = vmax.f32 %v4693, 0.0
    %v4758 = vmax.f32 %v4694, 0.0
    %v4759 = vmax.f32 %v4695, 0.0
    %v4760 = vmax.f32 %v4696, 0.0
    %v4761 = vmax.f32 %v4697, 0.0
    %v4762 = vmax.f32 %v4698, 0.0
    %v4763 = vmax.f32 %v4699, 0.0
    %v4764 = vmax.f32 %v4700, 0.0
    %v4765 = vmax.f32 %v4701, 0.0
    %v4766 = vmax.f32 %v4702, 0.0
    %v4767 = vmax.f32 %v4703, 0.0
    %v4768 = vmax.f32 %v4704, 0.0
    %v4769 = vmax.f32 %v4705, 0.0
    %v4770 = vmax.f32 %v4706, 0.0
    %v4771 = vmax.f32 %v4707, 0.0
    %v4772 = vmax.f32 %v4708, 0.0
    %v4773 = vmax.f32 %v4709, 0.0
    %v4774 = vmax.f32 %v4710, 0.0
    %v4775 = vmax.f32 %v4711, 0.0
    %v4776 = vmax.f32 %v4712, 0.0
    %v4777 = vmax.f32 %v4713, 0.0
    %v4778 = vmax.f32 %v4714, 0.0
    %v4779 = vmax.f32 %v4715, 0.0
    %v4780 = vmax.f32 %v4716, 0.0
    %v4781 = vmax.f32 %v4717, 0.0
    %v4782 = vmax.f32 %v4718, 0.0
    %v4783 = vmax.f32 %v4719, 0.0
    %v4784 = vmax.f32 %v4720, 0.0
    %v4785 = vmax.f32 %v4721, 0.0
    %v4786 = vmax.f32 %v4722, 0.0
    %v4787 = vmax.f32 %v4723, 0.0
    %v4788 = vmax.f32 %v4724, 0.0
    %v4789 = vmax.f32 %v4725, 0.0
    %v4790 = vmax.f32 %v4726, 0.0
    %v4791 = vmax.f32 %v4727, 0.0
    %v4792 = vmax.f32 %v4728, 0.0
    %v4793 = vmax.f32 %v4729, 0.0
    %v4794 = vmax.f32 %v4730, 0.0
    %v4795 = vmax.f32 %v4731, 0.0
    %v4796 = vmax.f32 %v4732, 0.0
    %v4797 = vmax.f32 %v4733, 0.0
    %v4798 = vmax.f32 %v4734, 0.0
    %v4799 = vmax.f32 %v4735, 0.0
    %v4800 = vmax.f32 %v4736, 0.0
    %v4801 = vmax.f32 %v4737, 0.0
    %v4802 = vmax.f32 %v4738, 0.0
    %v4803 = vmax.f32 %v4739, 0.0
    %v4804 = vmax.f32 %v4740, 0.0
    %v4805 = vmax.f32 %v4741, 0.0
    %v4806 = vmax.f32 %v4742, 0.0
    %v4807 = vmax.f32 %v4743, 0.0
    %v4808 = vld [vmem:[#allocation12] sm:$0x7]
    %v4809 = vld [vmem:[#allocation14] sm:$0x7]
    %4811 = vset.pattern.permute.xlu0 0
    %4812 = vperm.xlu0 %4811, %v4809
    %v4813 = vpop.permute.xlu0 %4812
    %v4816 = vsel %vm1156, %v4808, 0
    %v4819 = vsel %vm1156, %v4744, 0
    %v4822 = vsel %vm1156, %v4745, 0
    %v4825 = vsel %vm1156, %v4746, 0
    %v4828 = vsel %vm1156, %v4747, 0
    %v4831 = vsel %vm1156, %v4748, 0
    %v4834 = vsel %vm1156, %v4749, 0
    %v4837 = vsel %vm1156, %v4750, 0
    %v4840 = vsel %vm1156, %v4751, 0
    %v4843 = vsel %vm1156, %v4752, 0
    %v4846 = vsel %vm1156, %v4753, 0
    %v4849 = vsel %vm1156, %v4754, 0
    %v4852 = vsel %vm1156, %v4755, 0
    %v4855 = vsel %vm1156, %v4756, 0
    %v4858 = vsel %vm1156, %v4757, 0
    %v4861 = vsel %vm1156, %v4758, 0
    %v4864 = vsel %vm1156, %v4759, 0
    %v4867 = vsel %vm1156, %v4760, 0
    %v4870 = vsel %vm1156, %v4761, 0
    %v4873 = vsel %vm1156, %v4762, 0
    %v4876 = vsel %vm1156, %v4763, 0
    %v4879 = vsel %vm1156, %v4764, 0
    %v4882 = vsel %vm1156, %v4765, 0
    %v4885 = vsel %vm1156, %v4766, 0
    %v4888 = vsel %vm1156, %v4767, 0
    %v4891 = vsel %vm1156, %v4768, 0
    %v4894 = vsel %vm1156, %v4769, 0
    %v4897 = vsel %vm1156, %v4770, 0
    %v4900 = vsel %vm1156, %v4771, 0
    %v4903 = vsel %vm1156, %v4772, 0
    %v4906 = vsel %vm1156, %v4773, 0
    %v4909 = vsel %vm1156, %v4774, 0
    %v4912 = vsel %vm1156, %v4775, 0
    %v4915 = vsel %vm1156, %v4776, 0
    %v4918 = vsel %vm1156, %v4777, 0
    %v4921 = vsel %vm1156, %v4778, 0
    %v4924 = vsel %vm1156, %v4779, 0
    %v4927 = vsel %vm1156, %v4780, 0
    %v4930 = vsel %vm1156, %v4781, 0
    %v4933 = vsel %vm1156, %v4782, 0
    %v4936 = vsel %vm1156, %v4783, 0
    %v4939 = vsel %vm1156, %v4784, 0
    %v4942 = vsel %vm1156, %v4785, 0
    %v4945 = vsel %vm1156, %v4786, 0
    %v4948 = vsel %vm1156, %v4787, 0
    %v4951 = vsel %vm1156, %v4788, 0
    %v4954 = vsel %vm1156, %v4789, 0
    %v4957 = vsel %vm1156, %v4790, 0
    %v4960 = vsel %vm1156, %v4791, 0
    %v4963 = vsel %vm1156, %v4792, 0
    %v4966 = vsel %vm1156, %v4793, 0
    %v4969 = vsel %vm1156, %v4794, 0
    %v4972 = vsel %vm1156, %v4795, 0
    %v4975 = vsel %vm1156, %v4796, 0
    %v4978 = vsel %vm1156, %v4797, 0
    %v4981 = vsel %vm1156, %v4798, 0
    %v4984 = vsel %vm1156, %v4799, 0
    %v4987 = vsel %vm1156, %v4800, 0
    %v4990 = vsel %vm1156, %v4801, 0
    %v4993 = vsel %vm1156, %v4802, 0
    %v4996 = vsel %vm1156, %v4803, 0
    %v4999 = vsel %vm1156, %v4804, 0
    %v5002 = vsel %vm1156, %v4805, 0
    %v5005 = vsel %vm1156, %v4806, 0
    %v5008 = vsel %vm1156, %v4807, 0
    %5010 = vmatprep.subr.mxu0 0.0
    %5011 = vmatpush1.xpose.msra.mxu0 %v4819
    %5012 = vmatprep.subr.mxu0 0.0
    %5013 = vmatpush1.xpose.msra.mxu0 %v4822
    %5014 = vmatprep.subr.mxu0 0.0
    %5015 = vmatpush1.xpose.msra.mxu0 %v4825
    %5016 = vmatprep.subr.mxu0 0.0
    %5017 = vmatpush1.xpose.msra.mxu0 %v4828
    %5018 = vmatprep.subr.mxu0 0.0
    %5019 = vmatpush1.xpose.msra.mxu0 %v4831
    %5020 = vmatprep.subr.mxu0 0.0
    %5021 = vmatpush1.xpose.msra.mxu0 %v4834
    %5022 = vmatprep.subr.mxu0 0.0
    %5023 = vmatpush1.xpose.msra.mxu0 %v4837
    %5024 = vmatprep.subr.mxu0 0.0
    %5025 = vmatpush1.xpose.msra.mxu0 %v4840
    %5026 = vmatprep.subr.mxu0 0.0
    %5027 = vmatpush1.xpose.msra.mxu0 %v4843
    %5028 = vmatprep.subr.mxu0 0.0
    %5029 = vmatpush1.xpose.msra.mxu0 %v4846
    %5030 = vmatprep.subr.mxu0 0.0
    %5031 = vmatpush1.xpose.msra.mxu0 %v4849
    %5032 = vmatprep.subr.mxu0 0.0
    %5033 = vmatpush1.xpose.msra.mxu0 %v4852
    %5034 = vmatprep.subr.mxu0 0.0
    %5035 = vmatpush1.xpose.msra.mxu0 %v4855
    %5036 = vmatprep.subr.mxu0 0.0
    %5037 = vmatpush1.xpose.msra.mxu0 %v4858
    %5038 = vmatprep.subr.mxu0 0.0
    %5039 = vmatpush1.xpose.msra.mxu0 %v4861
    %5040 = vmatprep.subr.mxu0 0.0
    %5041 = vmatpush1.xpose.msra.mxu0 %v4864
    %5042 = vmatprep.subr.mxu0 0.0
    %5043 = vmatpush1.xpose.msra.mxu0 %v4867
    %5044 = vmatprep.subr.mxu0 0.0
    %5045 = vmatpush1.xpose.msra.mxu0 %v4870
    %5046 = vmatprep.subr.mxu0 0.0
    %5047 = vmatpush1.xpose.msra.mxu0 %v4873
    %5048 = vmatprep.subr.mxu0 0.0
    %5049 = vmatpush1.xpose.msra.mxu0 %v4876
    %5050 = vmatprep.subr.mxu0 0.0
    %5051 = vmatpush1.xpose.msra.mxu0 %v4879
    %5052 = vmatprep.subr.mxu0 0.0
    %5053 = vmatpush1.xpose.msra.mxu0 %v4882
    %5054 = vmatprep.subr.mxu0 0.0
    %5055 = vmatpush1.xpose.msra.mxu0 %v4885
    %5056 = vmatprep.subr.mxu0 0.0
    %5057 = vmatpush1.xpose.msra.mxu0 %v4888
    %5058 = vmatprep.subr.mxu0 0.0
    %5059 = vmatpush1.xpose.msra.mxu0 %v4891
    %5060 = vmatprep.subr.mxu0 0.0
    %5061 = vmatpush1.xpose.msra.mxu0 %v4894
    %5062 = vmatprep.subr.mxu0 0.0
    %5063 = vmatpush1.xpose.msra.mxu0 %v4897
    %5064 = vmatprep.subr.mxu0 0.0
    %5065 = vmatpush1.xpose.msra.mxu0 %v4900
    %5066 = vmatprep.subr.mxu0 0.0
    %5067 = vmatpush1.xpose.msra.mxu0 %v4903
    %5068 = vmatprep.subr.mxu0 0.0
    %5069 = vmatpush1.xpose.msra.mxu0 %v4906
    %5070 = vmatprep.subr.mxu0 0.0
    %5071 = vmatpush1.xpose.msra.mxu0 %v4909
    %5072 = vmatprep.subr.mxu0 0.0
    %5073 = vmatpush1.xpose.msra.mxu0 %v4912
    %5074 = vmatprep.mubr.f32.mxu0 0.0
    %5075 = vmatmul.mubr.f32.gmra.mrb[0].mxu0 %v4816
    %v5076 = vpop.f32.mrb[0].mxu0
    %v5077 = vadd.f32 %v4813, %v5076
    %v5078 = vpop.f32.mrb[0].mxu0
    %v5079 = vadd.f32 %v4813, %v5078
    %5080 = vdwg.mxu0
    %5081 = vmatprep.subr.mxu0 0.0
    %5082 = vmatpush1.xpose.msra.mxu0 %v4915
    %5083 = vmatprep.subr.mxu0 0.0
    %5084 = vmatpush1.xpose.msra.mxu0 %v4918
    %5085 = vmatprep.subr.mxu0 0.0
    %5086 = vmatpush1.xpose.msra.mxu0 %v4921
    %5087 = vmatprep.subr.mxu0 0.0
    %5088 = vmatpush1.xpose.msra.mxu0 %v4924
    %5089 = vmatprep.subr.mxu0 0.0
    %5090 = vmatpush1.xpose.msra.mxu0 %v4927
    %5091 = vmatprep.subr.mxu0 0.0
    %5092 = vmatpush1.xpose.msra.mxu0 %v4930
    %5093 = vmatprep.subr.mxu0 0.0
    %5094 = vmatpush1.xpose.msra.mxu0 %v4933
    %5095 = vmatprep.subr.mxu0 0.0
    %5096 = vmatpush1.xpose.msra.mxu0 %v4936
    %5097 = vmatprep.subr.mxu0 0.0
    %5098 = vmatpush1.xpose.msra.mxu0 %v4939
    %5099 = vmatprep.subr.mxu0 0.0
    %5100 = vmatpush1.xpose.msra.mxu0 %v4942
    %5101 = vmatprep.subr.mxu0 0.0
    %5102 = vmatpush1.xpose.msra.mxu0 %v4945
    %5103 = vmatprep.subr.mxu0 0.0
    %5104 = vmatpush1.xpose.msra.mxu0 %v4948
    %5105 = vmatprep.subr.mxu0 0.0
    %5106 = vmatpush1.xpose.msra.mxu0 %v4951
    %5107 = vmatprep.subr.mxu0 0.0
    %5108 = vmatpush1.xpose.msra.mxu0 %v4954
    %5109 = vmatprep.subr.mxu0 0.0
    %5110 = vmatpush1.xpose.msra.mxu0 %v4957
    %5111 = vmatprep.subr.mxu0 0.0
    %5112 = vmatpush1.xpose.msra.mxu0 %v4960
    %5113 = vmatprep.subr.mxu0 0.0
    %5114 = vmatpush1.xpose.msra.mxu0 %v4963
    %5115 = vmatprep.subr.mxu0 0.0
    %5116 = vmatpush1.xpose.msra.mxu0 %v4966
    %5117 = vmatprep.subr.mxu0 0.0
    %5118 = vmatpush1.xpose.msra.mxu0 %v4969
    %5119 = vmatprep.subr.mxu0 0.0
    %5120 = vmatpush1.xpose.msra.mxu0 %v4972
    %5121 = vmatprep.subr.mxu0 0.0
    %5122 = vmatpush1.xpose.msra.mxu0 %v4975
    %5123 = vmatprep.subr.mxu0 0.0
    %5124 = vmatpush1.xpose.msra.mxu0 %v4978
    %5125 = vmatprep.subr.mxu0 0.0
    %5126 = vmatpush1.xpose.msra.mxu0 %v4981
    %5127 = vmatprep.subr.mxu0 0.0
    %5128 = vmatpush1.xpose.msra.mxu0 %v4984
    %5129 = vmatprep.subr.mxu0 0.0
    %5130 = vmatpush1.xpose.msra.mxu0 %v4987
    %5131 = vmatprep.subr.mxu0 0.0
    %5132 = vmatpush1.xpose.msra.mxu0 %v4990
    %5133 = vmatprep.subr.mxu0 0.0
    %5134 = vmatpush1.xpose.msra.mxu0 %v4993
    %5135 = vmatprep.subr.mxu0 0.0
    %5136 = vmatpush1.xpose.msra.mxu0 %v4996
    %5137 = vmatprep.subr.mxu0 0.0
    %5138 = vmatpush1.xpose.msra.mxu0 %v4999
    %5139 = vmatprep.subr.mxu0 0.0
    %5140 = vmatpush1.xpose.msra.mxu0 %v5002
    %5141 = vmatprep.subr.mxu0 0.0
    %5142 = vmatpush1.xpose.msra.mxu0 %v5005
    %5143 = vmatprep.subr.mxu0 0.0
    %5144 = vmatpush1.xpose.msra.mxu0 %v5008
    %5145 = vmatprep.mubr.f32.mxu0 0.0
    %5146 = vmatmul.mubr.f32.gmra.mrb[0].mxu0 %v4816
    %v5147 = vpop.f32.mrb[0].mxu0
    %v5148 = vadd.f32 %v4813, %v5147
    %v5149 = vpop.f32.mrb[0].mxu0
    %v5150 = vadd.f32 %v4813, %v5149
    %5151 = vdwg.mxu0
    %v5152 = vmax.f32 %v5077, 0.0
    %v5153 = vmax.f32 %v5079, 0.0
    %v5154 = vmax.f32 %v5148, 0.0
    %v5155 = vmax.f32 %v5150, 0.0
    %v5156 = vmin.f32 %v5152, 1.0
    %v5157 = vmin.f32 %v5153, 1.0
    %v5158 = vmin.f32 %v5154, 1.0
    %v5159 = vmin.f32 %v5155, 1.0
    %v5162 = vcombine.low %v5156, %v5157
    %5164 = vst [vmem:[#allocation15] sm:$0x77] %v5162
    %v5167 = vcombine.low %v5158, %v5159
    %s5169 = scalar_lea.vmem [#allocation15], 8
    %5170 = vst [vmem:[%s5169] sm:$0x77] %v5167
    // Predicated region
    $region58: #{super_resnet_forward.1} parent=1 // pred_check
      _
    $region59: #{super_resnet_forward.1} parent=1 // pred_check_branch
      %5172 = sbr.rel (0) target = $region61
    $region60: #{super_resnet_forward.1} parent=1 // pred_region
      %s5174 = ssub.s32 256, 256
      %5175 = vsyncadd [#allocation5], %s5174
      %s5176 = sshll.u32 [#allocation15], 4
      %s5177 = int_to_ptr.vmem [resolvable:$true] %s5176
      %5182 = dma.vmem_to_hbm [thread:$0]  %s5177, 256, %s7, [#allocation5], 128, 128, 8
    $region61: #{super_resnet_forward.1} parent=1 // pred_fallthru
      _
    // Predicated region
    $region62: #{super_resnet_forward.1} parent=1 // pred_check
      _
    $region63: #{super_resnet_forward.1} parent=1 // pred_check_branch
      %5184 = sbr.rel (0) target = $region65
    $region64: #{super_resnet_forward.1} parent=1 // pred_region
      %5185 = dma.done [#allocation5], 256
    $region65: #{super_resnet_forward.1} parent=1 // pred_fallthru
      _
    %5186 = vsyncpa [#allocation4], 1
    %5187 = vsyncpa [#allocation7], 1
    %5188 = vsyncpa [#allocation10], 1
    %5189 = vsyncpa [#allocation13], 1
    %5190 = vsyncpa [#allocation5], 1

</llo_original>
